<compile_context>
chip_gen: v5e
topology: v5e:2x2
jax: 0.10.0
libtpu: 0.0.40
codegen_flags: <defaults>
</compile_context>

<pallas_src>
import math

import jax
import jax.numpy as jnp
from jax import lax
from jax.experimental import pallas as pl
from jax.experimental.pallas import tpu as pltpu

INPUT_DIM = 118
HIDDEN_DIM = 64
OUTPUT_DIM = 1
EPS = 1e-5

IN_PAD = 128   # INPUT_DIM padded to a full 128-lane multiple
LANE = 128


def _round_up(n, m):
    return ((n + m - 1) // m) * m


def _resident(shape):
    """Full-array block with a constant index map (stays resident in VMEM)."""
    zeros = (0,) * len(shape)
    return pl.BlockSpec(shape, lambda i: zeros)


def structured_resnet(x, params, *, tile_b=2048):
    """Forward pass of StructuredResNet (training-mode / batch-stat BatchNorm)."""
    B = x.shape[0]
    assert x.shape[1] == INPUT_DIM

    # ---------------- sizing -------------------------------------------------
    b_pad = _round_up(B, LANE)                    # rows seen by the BN/residual stack
    tile_b = _round_up(min(tile_b, b_pad), LANE)  # streaming tile (multiple of 128)
    n_tiles = pl.cdiv(b_pad, tile_b)
    b_stream = n_tiles * tile_b                   # rows streamed through layer 0
    slabs = b_pad // LANE                         # lane-dense output slabs

    # Final-phase chunk: largest 128*k (k <= 8) dividing b_pad exactly, so the
    # chunk loop has no ragged tail and all padding rows live in the last chunk.
    k = 1
    for cand in range(min(8, slabs), 0, -1):
        if slabs % cand == 0:
            k = cand
            break
    chunk = k * LANE
    n_chunks = b_pad // chunk

    n_pad_stream = b_stream - B                   # zero-padded streamed rows

    # -------- layout-only padding (exact math: padded rows/cols are zero) ----
    x_p = jnp.pad(x.astype(jnp.float32),
                  ((0, b_stream - B), (0, IN_PAD - INPUT_DIM)))
    w_in_p = jnp.pad(params["w_in"], ((0, IN_PAD - INPUT_DIM), (0, 0)))

    # ---------------- kernel --------------------------------------------------
    def kernel(x_ref, w_in_ref, b_in_ref, g_in_ref, bt_in_ref,
               w_blk_ref, b_blk_ref, g_blk_ref, bt_blk_ref,
               w_out_ref, b_out_ref, o_ref,
               zs_ref, h_ref, t_ref, s_ref, ss_ref):
        i = pl.program_id(0)

        # ===== streamed phase (every grid step) ==============================
        @pl.when(i == 0)
        def _():
            s_ref[...] = jnp.zeros_like(s_ref)
            ss_ref[...] = jnp.zeros_like(ss_ref)

        z0 = jnp.dot(x_ref[...], w_in_ref[...],
                     preferred_element_type=jnp.float32) + b_in_ref[...]
        row0 = pl.multiple_of(i * tile_b, tile_b)
        zs_ref[pl.ds(row0, tile_b), :] = z0
        # Layer-0 BN stats accumulated behind the x DMA.  Unmasked: zero-padded
        # x rows contribute exactly b_in each (analytically corrected below).
        s_ref[...] = s_ref[...] + jnp.sum(z0, axis=0, keepdims=True)
        ss_ref[...] = ss_ref[...] + jnp.sum(z0 * z0, axis=0, keepdims=True)

        # ===== final phase (last grid step): BN/residual stack + head ========
        @pl.when(i == n_tiles - 1)
        def _():
            inv_b = jnp.float32(1.0 / B)

            def fold_bn(s, ss, gamma, beta):
                # Fold BN into per-feature scale/shift: y = z*scale + shift.
                mean = s * inv_b
                var = ss * inv_b - mean * mean          # biased batch variance
                scale = gamma * lax.rsqrt(var + EPS)
                shift = beta - mean * scale
                return scale, shift

            def linear_pass1(src_ref, dst_ref, w, b):
                """dst = src @ w + b, chunk by chunk; returns batch (sum, sumsq)."""
                def body(j, carry):
                    s, ss = carry
                    r = pl.multiple_of(j * chunk, chunk)
                    t = jnp.dot(src_ref[pl.ds(r, chunk), :], w,
                                preferred_element_type=jnp.float32) + b
                    dst_ref[pl.ds(r, chunk), :] = t
                    return (s + jnp.sum(t, axis=0, keepdims=True),
                            ss + jnp.sum(t * t, axis=0, keepdims=True))

                zero = jnp.zeros((1, HIDDEN_DIM), jnp.float32)
                s, ss = lax.fori_loop(0, n_chunks - 1, body, (zero, zero))

                # Peeled last chunk: the only chunk that can hold padding rows.
                r = (n_chunks - 1) * chunk
                t = jnp.dot(src_ref[pl.ds(r, chunk), :], w,
                            preferred_element_type=jnp.float32) + b
                dst_ref[pl.ds(r, chunk), :] = t
                if B == b_pad:
                    s = s + jnp.sum(t, axis=0, keepdims=True)
                    ss = ss + jnp.sum(t * t, axis=0, keepdims=True)
                else:
                    m = (lax.broadcasted_iota(jnp.int32, (chunk, 1), 0)
                         < (B - r)).astype(jnp.float32)
                    tm = t * m
                    s = s + jnp.sum(tm, axis=0, keepdims=True)
                    ss = ss + jnp.sum(tm * t, axis=0, keepdims=True)
                return s, ss

            def bn_pass2(src_ref, dst_ref, scale, shift, *, relu, res_ref=None):
                """dst = [relu](src*scale + shift [+ res]), chunk by chunk."""
                def body(j, _):
                    r = pl.multiple_of(j * chunk, chunk)
                    v = src_ref[pl.ds(r, chunk), :] * scale + shift
                    if res_ref is not None:
                        v = v + res_ref[pl.ds(r, chunk), :]
                    if relu:
                        v = jnp.maximum(v, 0.0)
                    dst_ref[pl.ds(r, chunk), :] = v
                    return 0
                lax.fori_loop(0, n_chunks, body, 0)

            # ---- input layer: streamed stats with analytic padding correction
            b_in = b_in_ref[...]
            npad = jnp.float32(n_pad_stream)
            s0 = s_ref[...] - npad * b_in
            ss0 = ss_ref[...] - npad * (b_in * b_in)
            scale, shift = fold_bn(s0, ss0, g_in_ref[...], bt_in_ref[...])
            bn_pass2(zs_ref, h_ref, scale, shift, relu=True)

            # ---- 3 residual blocks (identity shortcut: in_dim == out_dim) ----
            for blk in range(3):
                i1, i2 = 2 * blk, 2 * blk + 1
                # relu(bn1(linear1(h)))  -- h_ref stays intact as the residual
                s, ss = linear_pass1(h_ref, t_ref, w_blk_ref[i1], b_blk_ref[i1])
                scale, shift = fold_bn(s, ss, g_blk_ref[i1], bt_blk_ref[i1])
                bn_pass2(t_ref, t_ref, scale, shift, relu=True)
                # relu(bn2(linear2(t)) + residual)
                s, ss = linear_pass1(t_ref, t_ref, w_blk_ref[i2], b_blk_ref[i2])
                scale, shift = fold_bn(s, ss, g_blk_ref[i2], bt_blk_ref[i2])
                bn_pass2(t_ref, h_ref, scale, shift, relu=True, res_ref=h_ref)

            # ---- output head (64 -> 1) on the VPU/XLU, lane-dense slab -------
            h3 = h_ref[...].reshape(slabs, LANE, HIDDEN_DIM)
            o_ref[...] = (jnp.sum(h3 * w_out_ref[...][None], axis=-1)
                          + b_out_ref[...])

    # ---------------- pallas_call wiring --------------------------------------
    args = (x_p, w_in_p,
            params["b_in"], params["g_in"], params["bt_in"],
            params["w_blk"], params["b_blk"], params["g_blk"], params["bt_blk"],
            params["w_out"], params["b_out"])

    in_specs = [pl.BlockSpec((tile_b, IN_PAD), lambda i: (i, 0))]
    in_specs += [_resident(a.shape) for a in args[1:]]

    # Explicit VMEM budget (scratch lanes pad 64 -> 128) + headroom, so large
    # batches fail loudly at compile instead of tripping the 16/32 MiB default.
    vmem_needed = 4 * (b_stream * LANE           # zs scratch
                       + 2 * b_pad * LANE        # h, t scratch
                       + 2 * tile_b * IN_PAD     # double-buffered x tiles
                       + 2 * slabs * LANE        # output slab
                       ) + (1 << 20)             # params / stats / temporaries
    vmem_limit = min(max(int(1.25 * vmem_needed) + (4 << 20), 32 << 20), 96 << 20)

    param_bytes = 4 * (IN_PAD * HIDDEN_DIM + 6 * HIDDEN_DIM * HIDDEN_DIM
                       + 10 * HIDDEN_DIM + 2)
    cost = pl.CostEstimate(
        flops=2 * B * (IN_PAD * HIDDEN_DIM + 6 * HIDDEN_DIM * HIDDEN_DIM
                       + HIDDEN_DIM),
        transcendentals=7 * HIDDEN_DIM,
        bytes_accessed=4 * (b_stream * IN_PAD + slabs * LANE) + param_bytes)

    out = pl.pallas_call(
        kernel,
        out_shape=jax.ShapeDtypeStruct((slabs, LANE), jnp.float32),
        grid_spec=pltpu.PrefetchScalarGridSpec(
            num_scalar_prefetch=0,
            grid=(n_tiles,),
            in_specs=in_specs,
            out_specs=_resident((slabs, LANE)),
            scratch_shapes=[
                pltpu.VMEM((b_stream, HIDDEN_DIM), jnp.float32),  # streamed z
                pltpu.VMEM((b_pad, HIDDEN_DIM), jnp.float32),     # h (residual)
                pltpu.VMEM((b_pad, HIDDEN_DIM), jnp.float32),     # t (intermediate)
                pltpu.VMEM((1, HIDDEN_DIM), jnp.float32),         # layer-0 sum
                pltpu.VMEM((1, HIDDEN_DIM), jnp.float32),         # layer-0 sumsq
            ],
        ),
        compiler_params=pltpu.CompilerParams(
            # Full-batch BN statistics couple all batch tiles -> reduction axis.
            dimension_semantics=("arbitrary",),
            vmem_limit_bytes=vmem_limit,
        ),
        cost_estimate=cost,
    )(*args)

    # Lane-dense slab -> (B, 1), dropping batch padding.
    return out.reshape(-1, OUTPUT_DIM)[:B]


def init_params(key):
    """Deterministic init mimicking nn.Linear defaults (uniform +/- 1/sqrt(fan_in))."""
    def linear(k, fan_in, fan_out):
        bound = 1.0 / math.sqrt(fan_in)
        kw, kb = jax.random.split(k)
        w = jax.random.uniform(kw, (fan_in, fan_out), jnp.float32, -bound, bound)
        b = jax.random.uniform(kb, (fan_out,), jnp.float32, -bound, bound)
        return w, b

    keys = jax.random.split(key, 8)
    w_in, b_in = linear(keys[0], INPUT_DIM, HIDDEN_DIM)

    blk_ws, blk_bs = [], []
    for i in range(6):   # 3 blocks x 2 linear layers (no shortcut linear: in == out)
        w, b = linear(keys[1 + i], HIDDEN_DIM, HIDDEN_DIM)
        blk_ws.append(w)
        blk_bs.append(b.reshape(1, HIDDEN_DIM))

    w_out, b_out = linear(keys[7], HIDDEN_DIM, OUTPUT_DIM)

    return dict(
        w_in=w_in,                                       # (118, 64)  (= torch weight.T)
        b_in=b_in.reshape(1, HIDDEN_DIM),
        g_in=jnp.ones((1, HIDDEN_DIM), jnp.float32),
        bt_in=jnp.zeros((1, HIDDEN_DIM), jnp.float32),
        w_blk=jnp.stack(blk_ws, axis=0),                 # (6, 64, 64) (in, out)
        b_blk=jnp.stack(blk_bs, axis=0),                 # (6, 1, 64)
        g_blk=jnp.ones((6, 1, HIDDEN_DIM), jnp.float32),
        bt_blk=jnp.zeros((6, 1, HIDDEN_DIM), jnp.float32),
        w_out=w_out.T,                                   # (1, 64)  (= torch layout)
        b_out=b_out.reshape(1, OUTPUT_DIM),              # (1, 1)
    )


def _reference_forward(x, p):
    """Pure-JAX reference (full-batch training-mode BatchNorm)."""
    def bn(h, g, b):
        m = jnp.mean(h, axis=0, keepdims=True)
        v = jnp.mean((h - m) ** 2, axis=0, keepdims=True)
        return (h - m) / jnp.sqrt(v + EPS) * g + b

    h = jnp.maximum(bn(x @ p["w_in"] + p["b_in"], p["g_in"], p["bt_in"]), 0.0)
    for blk in range(3):
        i1, i2 = 2 * blk, 2 * blk + 1
        r = h
        t = jnp.maximum(bn(h @ p["w_blk"][i1] + p["b_blk"][i1],
                           p["g_blk"][i1], p["bt_blk"][i1]), 0.0)
        t = bn(t @ p["w_blk"][i2] + p["b_blk"][i2], p["g_blk"][i2], p["bt_blk"][i2])
        h = jnp.maximum(t + r, 0.0)
    return h @ p["w_out"].T + p["b_out"]


if __name__ == "__main__":
    key = jax.random.PRNGKey(0)
    k_x1, k_x2, k_p = jax.random.split(key, 3)
    params = init_params(k_p)

    # Small single-tile batch (B < 128 -> exercises the masked boundary chunk).
    B1 = 8
    x1 = jax.random.normal(k_x1, (B1, INPUT_DIM), jnp.float32)
    out1 = jax.block_until_ready(structured_resnet(x1, params))
    assert out1.shape == (B1, OUTPUT_DIM) and out1.dtype == jnp.float32
    ref1 = _reference_forward(x1, params)
    assert jnp.allclose(out1, ref1, atol=2e-3, rtol=2e-3), (
        float(jnp.max(jnp.abs(out1 - ref1))))

    # Multi-tile streaming with B not a multiple of 128: exercises the cross-tile
    # stat accumulation, the streamed-padding correction and the chunked final phase.
    B2 = 1030
    x2 = jax.random.normal(k_x2, (B2, INPUT_DIM), jnp.float32)
    out2 = jax.block_until_ready(structured_resnet(x2, params, tile_b=256))
    assert out2.shape == (B2, OUTPUT_DIM)
    ref2 = _reference_forward(x2, params)
    assert jnp.allclose(out2, ref2, atol=2e-3, rtol=2e-3), (
        float(jnp.max(jnp.abs(out2 - ref2))))

    print("KERNEL_OK")
</pallas_src>

<mosaic_0001>
module attributes {stable_mosaic.version = 11 : i64} {
  func.func @kernel(%arg0: i32, %arg1: memref<128x128xf32, #tpu.memory_space<vmem>>, %arg2: memref<128x64xf32, #tpu.memory_space<vmem>>, %arg3: memref<1x64xf32, #tpu.memory_space<vmem>>, %arg4: memref<1x64xf32, #tpu.memory_space<vmem>>, %arg5: memref<1x64xf32, #tpu.memory_space<vmem>>, %arg6: memref<6x64x64xf32, #tpu.memory_space<vmem>>, %arg7: memref<6x1x64xf32, #tpu.memory_space<vmem>>, %arg8: memref<6x1x64xf32, #tpu.memory_space<vmem>>, %arg9: memref<6x1x64xf32, #tpu.memory_space<vmem>>, %arg10: memref<1x64xf32, #tpu.memory_space<vmem>>, %arg11: memref<1x1xf32, #tpu.memory_space<vmem>>, %arg12: memref<1x128xf32, #tpu.memory_space<vmem>>, %arg13: memref<128x64xf32, #tpu.memory_space<vmem>>, %arg14: memref<128x64xf32, #tpu.memory_space<vmem>>, %arg15: memref<128x64xf32, #tpu.memory_space<vmem>>, %arg16: memref<1x64xf32, #tpu.memory_space<vmem>>, %arg17: memref<1x64xf32, #tpu.memory_space<vmem>>) attributes {dimension_semantics = [#tpu.dimension_semantics<arbitrary>], iteration_bounds = array<i64: 1>, scalar_prefetch = 0 : i64, scratch_operands = 5 : i64, tpu.core_type = #tpu.core_type<tc>, window_params = [{transform_indices = @transform_0, window_bounds = array<i64: 128, 128>}, {pipeline_mode = #tpu.pipeline_mode<synchronous>, transform_indices = @transform_1, window_bounds = array<i64: 128, 64>}, {pipeline_mode = #tpu.pipeline_mode<synchronous>, transform_indices = @transform_2, window_bounds = array<i64: 1, 64>}, {pipeline_mode = #tpu.pipeline_mode<synchronous>, transform_indices = @transform_3, window_bounds = array<i64: 1, 64>}, {pipeline_mode = #tpu.pipeline_mode<synchronous>, transform_indices = @transform_4, window_bounds = array<i64: 1, 64>}, {pipeline_mode = #tpu.pipeline_mode<synchronous>, transform_indices = @transform_5, window_bounds = array<i64: 6, 64, 64>}, {pipeline_mode = #tpu.pipeline_mode<synchronous>, transform_indices = @transform_6, window_bounds = array<i64: 6, 1, 64>}, {pipeline_mode = #tpu.pipeline_mode<synchronous>, transform_indices = @transform_7, window_bounds = array<i64: 6, 1, 64>}, {pipeline_mode = #tpu.pipeline_mode<synchronous>, transform_indices = @transform_8, window_bounds = array<i64: 6, 1, 64>}, {pipeline_mode = #tpu.pipeline_mode<synchronous>, transform_indices = @transform_9, window_bounds = array<i64: 1, 64>}, {pipeline_mode = #tpu.pipeline_mode<synchronous>, transform_indices = @transform_10, window_bounds = array<i64: 1, 1>}, {pipeline_mode = #tpu.pipeline_mode<synchronous>, transform_indices = @transform_11, window_bounds = array<i64: 1, 128>}]} {
    %c0_i32 = arith.constant 0 : i32
    %0 = arith.cmpi eq, %arg0, %c0_i32 : i32
    %1 = arith.extui %0 : i1 to i32
    %c0_i32_0 = arith.constant 0 : i32
    %2 = arith.cmpi ne, %1, %c0_i32_0 : i32
    scf.if %2 {
      %cst_19 = arith.constant 0.000000e+00 : f32
      %27 = vector.broadcast %cst_19 : f32 to vector<1x64xf32>
      %c0_20 = arith.constant 0 : index
      %c0_21 = arith.constant 0 : index
      %28 = vector.load %arg16[%c0_20, %c0_21] : memref<1x64xf32, #tpu.memory_space<vmem>>, vector<1x64xf32>
      tpu.vector_store %arg16[%c0_20, %c0_21], %27 {strides = array<i32>} : memref<1x64xf32, #tpu.memory_space<vmem>>, vector<1x64xf32>,
      %cst_22 = arith.constant 0.000000e+00 : f32
      %29 = vector.broadcast %cst_22 : f32 to vector<1x64xf32>
      %c0_23 = arith.constant 0 : index
      %c0_24 = arith.constant 0 : index
      %30 = vector.load %arg17[%c0_23, %c0_24] : memref<1x64xf32, #tpu.memory_space<vmem>>, vector<1x64xf32>
      tpu.vector_store %arg17[%c0_23, %c0_24], %29 {strides = array<i32>} : memref<1x64xf32, #tpu.memory_space<vmem>>, vector<1x64xf32>,
    } else {
    }
    %c0 = arith.constant 0 : index
    %c0_1 = arith.constant 0 : index
    %3 = vector.load %arg1[%c0, %c0_1] : memref<128x128xf32, #tpu.memory_space<vmem>>, vector<128x128xf32>
    %c0_2 = arith.constant 0 : index
    %c0_3 = arith.constant 0 : index
    %4 = vector.load %arg2[%c0_2, %c0_3] : memref<128x64xf32, #tpu.memory_space<vmem>>, vector<128x64xf32>
    %cst = arith.constant dense<0.000000e+00> : vector<128x64xf32>
    %5 = tpu.matmul %3, %4, %cst {dimension_numbers = #tpu.dot_dimension_numbers<[1], [0], [0], [1], [0, 0, 1, 1], [], []>} : vector<128x128xf32>, vector<128x64xf32>, vector<128x64xf32> -> vector<128x64xf32>
    %c0_4 = arith.constant 0 : index
    %c0_5 = arith.constant 0 : index
    %6 = vector.load %arg3[%c0_4, %c0_5] : memref<1x64xf32, #tpu.memory_space<vmem>>, vector<1x64xf32>
    %7 = vector.broadcast %6 : vector<1x64xf32> to vector<128x64xf32>
    %8 = arith.addf %5, %7 : vector<128x64xf32>
    %c128_i32 = arith.constant 128 : i32
    %9 = arith.muli %arg0, %c128_i32 : i32
    %10 = tpu.assume_multiple %9, 128 : i32
    %11 = arith.index_cast %10 : i32 to index
    %c0_6 = arith.constant 0 : index
    %12 = vector.load %arg13[%11, %c0_6] : memref<128x64xf32, #tpu.memory_space<vmem>>, vector<128x64xf32>
    tpu.vector_store %arg13[%11, %c0_6], %8 {strides = array<i32>} : memref<128x64xf32, #tpu.memory_space<vmem>>, vector<128x64xf32>,
    %c0_7 = arith.constant 0 : index
    %c0_8 = arith.constant 0 : index
    %13 = vector.load %arg16[%c0_7, %c0_8] : memref<1x64xf32, #tpu.memory_space<vmem>>, vector<1x64xf32>
    %cst_9 = arith.constant dense<0.000000e+00> : vector<64xf32>
    %14 = vector.multi_reduction <add>, %8, %cst_9 [0] : vector<128x64xf32> to vector<64xf32>
    %15 = vector.shape_cast %14 : vector<64xf32> to vector<1x64xf32>
    %16 = arith.addf %13, %15 : vector<1x64xf32>
    %c0_10 = arith.constant 0 : index
    %c0_11 = arith.constant 0 : index
    %17 = vector.load %arg16[%c0_10, %c0_11] : memref<1x64xf32, #tpu.memory_space<vmem>>, vector<1x64xf32>
    tpu.vector_store %arg16[%c0_10, %c0_11], %16 {strides = array<i32>} : memref<1x64xf32, #tpu.memory_space<vmem>>, vector<1x64xf32>,
    %c0_12 = arith.constant 0 : index
    %c0_13 = arith.constant 0 : index
    %18 = vector.load %arg17[%c0_12, %c0_13] : memref<1x64xf32, #tpu.memory_space<vmem>>, vector<1x64xf32>
    %19 = arith.mulf %8, %8 : vector<128x64xf32>
    %cst_14 = arith.constant dense<0.000000e+00> : vector<64xf32>
    %20 = vector.multi_reduction <add>, %19, %cst_14 [0] : vector<128x64xf32> to vector<64xf32>
    %21 = vector.shape_cast %20 : vector<64xf32> to vector<1x64xf32>
    %22 = arith.addf %18, %21 : vector<1x64xf32>
    %c0_15 = arith.constant 0 : index
    %c0_16 = arith.constant 0 : index
    %23 = vector.load %arg17[%c0_15, %c0_16] : memref<1x64xf32, #tpu.memory_space<vmem>>, vector<1x64xf32>
    tpu.vector_store %arg17[%c0_15, %c0_16], %22 {strides = array<i32>} : memref<1x64xf32, #tpu.memory_space<vmem>>, vector<1x64xf32>,
    %c0_i32_17 = arith.constant 0 : i32
    %24 = arith.cmpi eq, %arg0, %c0_i32_17 : i32
    %25 = arith.extui %24 : i1 to i32
    %c0_i32_18 = arith.constant 0 : i32
    %26 = arith.cmpi ne, %25, %c0_i32_18 : i32
    scf.if %26 {
      %c0_19 = arith.constant 0 : index
      %c0_20 = arith.constant 0 : index
      %27 = vector.load %arg3[%c0_19, %c0_20] : memref<1x64xf32, #tpu.memory_space<vmem>>, vector<1x64xf32>
      %c0_21 = arith.constant 0 : index
      %c0_22 = arith.constant 0 : index
      %28 = vector.load %arg16[%c0_21, %c0_22] : memref<1x64xf32, #tpu.memory_space<vmem>>, vector<1x64xf32>
      %cst_23 = arith.constant 1.200000e+02 : f32
      %29 = vector.broadcast %cst_23 : f32 to vector<1x64xf32>
      %30 = arith.mulf %29, %27 : vector<1x64xf32>
      %31 = arith.subf %28, %30 : vector<1x64xf32>
      %c0_24 = arith.constant 0 : index
      %c0_25 = arith.constant 0 : index
      %32 = vector.load %arg17[%c0_24, %c0_25] : memref<1x64xf32, #tpu.memory_space<vmem>>, vector<1x64xf32>
      %33 = arith.mulf %27, %27 : vector<1x64xf32>
      %cst_26 = arith.constant 1.200000e+02 : f32
      %34 = vector.broadcast %cst_26 : f32 to vector<1x64xf32>
      %35 = arith.mulf %34, %33 : vector<1x64xf32>
      %36 = arith.subf %32, %35 : vector<1x64xf32>
      %c0_27 = arith.constant 0 : index
      %c0_28 = arith.constant 0 : index
      %37 = vector.load %arg4[%c0_27, %c0_28] : memref<1x64xf32, #tpu.memory_space<vmem>>, vector<1x64xf32>
      %c0_29 = arith.constant 0 : index
      %c0_30 = arith.constant 0 : index
      %38 = vector.load %arg5[%c0_29, %c0_30] : memref<1x64xf32, #tpu.memory_space<vmem>>, vector<1x64xf32>
      %cst_31 = arith.constant 1.250000e-01 : f32
      %39 = vector.broadcast %cst_31 : f32 to vector<1x64xf32>
      %40 = arith.mulf %31, %39 : vector<1x64xf32>
      %cst_32 = arith.constant 1.250000e-01 : f32
      %41 = vector.broadcast %cst_32 : f32 to vector<1x64xf32>
      %42 = arith.mulf %36, %41 : vector<1x64xf32>
      %43 = arith.mulf %40, %40 : vector<1x64xf32>
      %44 = arith.subf %42, %43 : vector<1x64xf32>
      %cst_33 = arith.constant 9.99999974E-6 : f32
      %45 = vector.broadcast %cst_33 : f32 to vector<1x64xf32>
      %46 = arith.addf %44, %45 : vector<1x64xf32>
      %47 = math.rsqrt %46 : vector<1x64xf32>
      %48 = arith.mulf %37, %47 : vector<1x64xf32>
      %49 = arith.mulf %40, %48 : vector<1x64xf32>
      %50 = arith.subf %38, %49 : vector<1x64xf32>
      %c0_i32_34 = arith.constant 0 : i32
      %c128_i32_35 = arith.constant 128 : i32
      %51 = arith.muli %c0_i32_34, %c128_i32_35 : i32
      %52 = tpu.assume_multiple %51, 128 : i32
      %53 = arith.index_cast %52 : i32 to index
      %c0_36 = arith.constant 0 : index
      %54 = vector.load %arg13[%53, %c0_36] : memref<128x64xf32, #tpu.memory_space<vmem>>, vector<128x64xf32>
      %55 = vector.broadcast %48 : vector<1x64xf32> to vector<128x64xf32>
      %56 = arith.mulf %54, %55 : vector<128x64xf32>
      %57 = vector.broadcast %50 : vector<1x64xf32> to vector<128x64xf32>
      %58 = arith.addf %56, %57 : vector<128x64xf32>
      %cst_37 = arith.constant 0.000000e+00 : f32
      %59 = vector.broadcast %cst_37 : f32 to vector<128x64xf32>
      %60 = arith.maximumf %58, %59 : vector<128x64xf32>
      %61 = arith.index_cast %52 : i32 to index
      %c0_38 = arith.constant 0 : index
      %62 = vector.load %arg14[%61, %c0_38] : memref<128x64xf32, #tpu.memory_space<vmem>>, vector<128x64xf32>
      tpu.vector_store %arg14[%61, %c0_38], %60 {strides = array<i32>} : memref<128x64xf32, #tpu.memory_space<vmem>>, vector<128x64xf32>,
      %c1_i32 = arith.constant 1 : i32
      %c0_39 = arith.constant 0 : index
      %c0_40 = arith.constant 0 : index
      %c0_41 = arith.constant 0 : index
      %63 = vector.load %arg6[%c0_39, %c0_40, %c0_41] : memref<6x64x64xf32, #tpu.memory_space<vmem>>, vector<1x64x64xf32>
      %64 = vector.shape_cast %63 : vector<1x64x64xf32> to vector<64x64xf32>
      %c0_42 = arith.constant 0 : index
      %c0_43 = arith.constant 0 : index
      %c0_44 = arith.constant 0 : index
      %65 = vector.load %arg7[%c0_42, %c0_43, %c0_44] : memref<6x1x64xf32, #tpu.memory_space<vmem>>, vector<1x1x64xf32>
      %66 = vector.shape_cast %65 : vector<1x1x64xf32> to vector<1x64xf32>
      %cst_45 = arith.constant 0.000000e+00 : f32
      %67 = vector.broadcast %cst_45 : f32 to vector<1x64xf32>
      %c0_i32_46 = arith.constant 0 : i32
      %c0_i32_47 = arith.constant 0 : i32
      %68 = arith.addi %c0_i32_46, %c0_i32_47 : i32
      %c1_i32_48 = arith.constant 1 : i32
      %69:2 = scf.for %arg18 = %c0_i32_46 to %68 step %c1_i32_48 iter_args(%arg19 = %67, %arg20 = %67) -> (vector<1x64xf32>, vector<1x64xf32>)  : i32 {
        %c128_i32_249 = arith.constant 128 : i32
        %407 = arith.muli %arg18, %c128_i32_249 : i32
        %408 = tpu.assume_multiple %407, 128 : i32
        %409 = arith.index_cast %408 : i32 to index
        %c0_250 = arith.constant 0 : index
        %410 = vector.load %arg14[%409, %c0_250] : memref<128x64xf32, #tpu.memory_space<vmem>>, vector<128x64xf32>
        %cst_251 = arith.constant dense<0.000000e+00> : vector<128x64xf32>
        %411 = tpu.matmul %410, %64, %cst_251 {dimension_numbers = #tpu.dot_dimension_numbers<[1], [0], [0], [1], [0, 0, 1, 1], [], []>} : vector<128x64xf32>, vector<64x64xf32>, vector<128x64xf32> -> vector<128x64xf32>
        %412 = vector.broadcast %66 : vector<1x64xf32> to vector<128x64xf32>
        %413 = arith.addf %411, %412 : vector<128x64xf32>
        %414 = arith.index_cast %408 : i32 to index
        %c0_252 = arith.constant 0 : index
        %415 = vector.load %arg15[%414, %c0_252] : memref<128x64xf32, #tpu.memory_space<vmem>>, vector<128x64xf32>
        tpu.vector_store %arg15[%414, %c0_252], %413 {strides = array<i32>} : memref<128x64xf32, #tpu.memory_space<vmem>>, vector<128x64xf32>,
        %cst_253 = arith.constant dense<0.000000e+00> : vector<64xf32>
        %416 = vector.multi_reduction <add>, %413, %cst_253 [0] : vector<128x64xf32> to vector<64xf32>
        %417 = vector.shape_cast %416 : vector<64xf32> to vector<1x64xf32>
        %418 = arith.addf %arg19, %417 : vector<1x64xf32>
        %419 = arith.mulf %413, %413 : vector<128x64xf32>
        %cst_254 = arith.constant dense<0.000000e+00> : vector<64xf32>
        %420 = vector.multi_reduction <add>, %419, %cst_254 [0] : vector<128x64xf32> to vector<64xf32>
        %421 = vector.shape_cast %420 : vector<64xf32> to vector<1x64xf32>
        %422 = arith.addf %arg20, %421 : vector<1x64xf32>
        scf.yield %418, %422 : vector<1x64xf32>, vector<1x64xf32>
      }
      %c0_i32_49 = arith.constant 0 : i32
      %c0_50 = arith.constant 0 : index
      %c0_51 = arith.constant 0 : index
      %70 = vector.load %arg14[%c0_50, %c0_51] : memref<128x64xf32, #tpu.memory_space<vmem>>, vector<128x64xf32>
      %cst_52 = arith.constant dense<0.000000e+00> : vector<128x64xf32>
      %71 = tpu.matmul %70, %64, %cst_52 {dimension_numbers = #tpu.dot_dimension_numbers<[1], [0], [0], [1], [0, 0, 1, 1], [], []>} : vector<128x64xf32>, vector<64x64xf32>, vector<128x64xf32> -> vector<128x64xf32>
      %72 = vector.broadcast %66 : vector<1x64xf32> to vector<128x64xf32>
      %73 = arith.addf %71, %72 : vector<128x64xf32>
      %c0_53 = arith.constant 0 : index
      %c0_54 = arith.constant 0 : index
      %74 = vector.load %arg15[%c0_53, %c0_54] : memref<128x64xf32, #tpu.memory_space<vmem>>, vector<128x64xf32>
      tpu.vector_store %arg15[%c0_53, %c0_54], %73 {strides = array<i32>} : memref<128x64xf32, #tpu.memory_space<vmem>>, vector<128x64xf32>,
      %75 = tpu.iota {dimensions = array<i32: 0>} : vector<128x1xi32>
      %c8_i32 = arith.constant 8 : i32
      %76 = vector.broadcast %c8_i32 : i32 to vector<128x1xi32>
      %77 = arith.cmpi slt, %75, %76 : vector<128x1xi32>
      %78 = arith.extui %77 : vector<128x1xi1> to vector<128x1xi32>
      %79 = arith.sitofp %78 : vector<128x1xi32> to vector<128x1xf32>
      %80 = vector.broadcast %79 : vector<128x1xf32> to vector<128x64xf32>
      %81 = arith.mulf %73, %80 : vector<128x64xf32>
      %cst_55 = arith.constant dense<0.000000e+00> : vector<64xf32>
      %82 = vector.multi_reduction <add>, %81, %cst_55 [0] : vector<128x64xf32> to vector<64xf32>
      %83 = vector.shape_cast %82 : vector<64xf32> to vector<1x64xf32>
      %84 = arith.addf %69#0, %83 : vector<1x64xf32>
      %85 = arith.mulf %81, %73 : vector<128x64xf32>
      %cst_56 = arith.constant dense<0.000000e+00> : vector<64xf32>
      %86 = vector.multi_reduction <add>, %85, %cst_56 [0] : vector<128x64xf32> to vector<64xf32>
      %87 = vector.shape_cast %86 : vector<64xf32> to vector<1x64xf32>
      %88 = arith.addf %69#1, %87 : vector<1x64xf32>
      %c0_57 = arith.constant 0 : index
      %c0_58 = arith.constant 0 : index
      %c0_59 = arith.constant 0 : index
      %89 = vector.load %arg8[%c0_57, %c0_58, %c0_59] : memref<6x1x64xf32, #tpu.memory_space<vmem>>, vector<1x1x64xf32>
      %90 = vector.shape_cast %89 : vector<1x1x64xf32> to vector<1x64xf32>
      %c0_60 = arith.constant 0 : index
      %c0_61 = arith.constant 0 : index
      %c0_62 = arith.constant 0 : index
      %91 = vector.load %arg9[%c0_60, %c0_61, %c0_62] : memref<6x1x64xf32, #tpu.memory_space<vmem>>, vector<1x1x64xf32>
      %92 = vector.shape_cast %91 : vector<1x1x64xf32> to vector<1x64xf32>
      %cst_63 = arith.constant 1.250000e-01 : f32
      %93 = vector.broadcast %cst_63 : f32 to vector<1x64xf32>
      %94 = arith.mulf %84, %93 : vector<1x64xf32>
      %cst_64 = arith.constant 1.250000e-01 : f32
      %95 = vector.broadcast %cst_64 : f32 to vector<1x64xf32>
      %96 = arith.mulf %88, %95 : vector<1x64xf32>
      %97 = arith.mulf %94, %94 : vector<1x64xf32>
      %98 = arith.subf %96, %97 : vector<1x64xf32>
      %cst_65 = arith.constant 9.99999974E-6 : f32
      %99 = vector.broadcast %cst_65 : f32 to vector<1x64xf32>
      %100 = arith.addf %98, %99 : vector<1x64xf32>
      %101 = math.rsqrt %100 : vector<1x64xf32>
      %102 = arith.mulf %90, %101 : vector<1x64xf32>
      %103 = arith.mulf %94, %102 : vector<1x64xf32>
      %104 = arith.subf %92, %103 : vector<1x64xf32>
      %c0_i32_66 = arith.constant 0 : i32
      %c128_i32_67 = arith.constant 128 : i32
      %105 = arith.muli %c0_i32_66, %c128_i32_67 : i32
      %106 = tpu.assume_multiple %105, 128 : i32
      %107 = arith.index_cast %106 : i32 to index
      %c0_68 = arith.constant 0 : index
      %108 = vector.load %arg15[%107, %c0_68] : memref<128x64xf32, #tpu.memory_space<vmem>>, vector<128x64xf32>
      %109 = vector.broadcast %102 : vector<1x64xf32> to vector<128x64xf32>
      %110 = arith.mulf %108, %109 : vector<128x64xf32>
      %111 = vector.broadcast %104 : vector<1x64xf32> to vector<128x64xf32>
      %112 = arith.addf %110, %111 : vector<128x64xf32>
      %cst_69 = arith.constant 0.000000e+00 : f32
      %113 = vector.broadcast %cst_69 : f32 to vector<128x64xf32>
      %114 = arith.maximumf %112, %113 : vector<128x64xf32>
      %115 = arith.index_cast %106 : i32 to index
      %c0_70 = arith.constant 0 : index
      %116 = vector.load %arg15[%115, %c0_70] : memref<128x64xf32, #tpu.memory_space<vmem>>, vector<128x64xf32>
      tpu.vector_store %arg15[%115, %c0_70], %114 {strides = array<i32>} : memref<128x64xf32, #tpu.memory_space<vmem>>, vector<128x64xf32>,
      %c1_i32_71 = arith.constant 1 : i32
      %c1 = arith.constant 1 : index
      %c0_72 = arith.constant 0 : index
      %c0_73 = arith.constant 0 : index
      %117 = vector.load %arg6[%c1, %c0_72, %c0_73] : memref<6x64x64xf32, #tpu.memory_space<vmem>>, vector<1x64x64xf32>
      %118 = vector.shape_cast %117 : vector<1x64x64xf32> to vector<64x64xf32>
      %c1_74 = arith.constant 1 : index
      %c0_75 = arith.constant 0 : index
      %c0_76 = arith.constant 0 : index
      %119 = vector.load %arg7[%c1_74, %c0_75, %c0_76] : memref<6x1x64xf32, #tpu.memory_space<vmem>>, vector<1x1x64xf32>
      %120 = vector.shape_cast %119 : vector<1x1x64xf32> to vector<1x64xf32>
      %cst_77 = arith.constant 0.000000e+00 : f32
      %121 = vector.broadcast %cst_77 : f32 to vector<1x64xf32>
      %c0_i32_78 = arith.constant 0 : i32
      %c0_i32_79 = arith.constant 0 : i32
      %122 = arith.addi %c0_i32_78, %c0_i32_79 : i32
      %c1_i32_80 = arith.constant 1 : i32
      %123:2 = scf.for %arg18 = %c0_i32_78 to %122 step %c1_i32_80 iter_args(%arg19 = %121, %arg20 = %121) -> (vector<1x64xf32>, vector<1x64xf32>)  : i32 {
        %c128_i32_249 = arith.constant 128 : i32
        %407 = arith.muli %arg18, %c128_i32_249 : i32
        %408 = tpu.assume_multiple %407, 128 : i32
        %409 = arith.index_cast %408 : i32 to index
        %c0_250 = arith.constant 0 : index
        %410 = vector.load %arg15[%409, %c0_250] : memref<128x64xf32, #tpu.memory_space<vmem>>, vector<128x64xf32>
        %cst_251 = arith.constant dense<0.000000e+00> : vector<128x64xf32>
        %411 = tpu.matmul %410, %118, %cst_251 {dimension_numbers = #tpu.dot_dimension_numbers<[1], [0], [0], [1], [0, 0, 1, 1], [], []>} : vector<128x64xf32>, vector<64x64xf32>, vector<128x64xf32> -> vector<128x64xf32>
        %412 = vector.broadcast %120 : vector<1x64xf32> to vector<128x64xf32>
        %413 = arith.addf %411, %412 : vector<128x64xf32>
        %414 = arith.index_cast %408 : i32 to index
        %c0_252 = arith.constant 0 : index
        %415 = vector.load %arg15[%414, %c0_252] : memref<128x64xf32, #tpu.memory_space<vmem>>, vector<128x64xf32>
        tpu.vector_store %arg15[%414, %c0_252], %413 {strides = array<i32>} : memref<128x64xf32, #tpu.memory_space<vmem>>, vector<128x64xf32>,
        %cst_253 = arith.constant dense<0.000000e+00> : vector<64xf32>
        %416 = vector.multi_reduction <add>, %413, %cst_253 [0] : vector<128x64xf32> to vector<64xf32>
        %417 = vector.shape_cast %416 : vector<64xf32> to vector<1x64xf32>
        %418 = arith.addf %arg19, %417 : vector<1x64xf32>
        %419 = arith.mulf %413, %413 : vector<128x64xf32>
        %cst_254 = arith.constant dense<0.000000e+00> : vector<64xf32>
        %420 = vector.multi_reduction <add>, %419, %cst_254 [0] : vector<128x64xf32> to vector<64xf32>
        %421 = vector.shape_cast %420 : vector<64xf32> to vector<1x64xf32>
        %422 = arith.addf %arg20, %421 : vector<1x64xf32>
        scf.yield %418, %422 : vector<1x64xf32>, vector<1x64xf32>
      }
      %c0_i32_81 = arith.constant 0 : i32
      %c0_82 = arith.constant 0 : index
      %c0_83 = arith.constant 0 : index
      %124 = vector.load %arg15[%c0_82, %c0_83] : memref<128x64xf32, #tpu.memory_space<vmem>>, vector<128x64xf32>
      %cst_84 = arith.constant dense<0.000000e+00> : vector<128x64xf32>
      %125 = tpu.matmul %124, %118, %cst_84 {dimension_numbers = #tpu.dot_dimension_numbers<[1], [0], [0], [1], [0, 0, 1, 1], [], []>} : vector<128x64xf32>, vector<64x64xf32>, vector<128x64xf32> -> vector<128x64xf32>
      %126 = vector.broadcast %120 : vector<1x64xf32> to vector<128x64xf32>
      %127 = arith.addf %125, %126 : vector<128x64xf32>
      %c0_85 = arith.constant 0 : index
      %c0_86 = arith.constant 0 : index
      %128 = vector.load %arg15[%c0_85, %c0_86] : memref<128x64xf32, #tpu.memory_space<vmem>>, vector<128x64xf32>
      tpu.vector_store %arg15[%c0_85, %c0_86], %127 {strides = array<i32>} : memref<128x64xf32, #tpu.memory_space<vmem>>, vector<128x64xf32>,
      %129 = tpu.iota {dimensions = array<i32: 0>} : vector<128x1xi32>
      %c8_i32_87 = arith.constant 8 : i32
      %130 = vector.broadcast %c8_i32_87 : i32 to vector<128x1xi32>
      %131 = arith.cmpi slt, %129, %130 : vector<128x1xi32>
      %132 = arith.extui %131 : vector<128x1xi1> to vector<128x1xi32>
      %133 = arith.sitofp %132 : vector<128x1xi32> to vector<128x1xf32>
      %134 = vector.broadcast %133 : vector<128x1xf32> to vector<128x64xf32>
      %135 = arith.mulf %127, %134 : vector<128x64xf32>
      %cst_88 = arith.constant dense<0.000000e+00> : vector<64xf32>
      %136 = vector.multi_reduction <add>, %135, %cst_88 [0] : vector<128x64xf32> to vector<64xf32>
      %137 = vector.shape_cast %136 : vector<64xf32> to vector<1x64xf32>
      %138 = arith.addf %123#0, %137 : vector<1x64xf32>
      %139 = arith.mulf %135, %127 : vector<128x64xf32>
      %cst_89 = arith.constant dense<0.000000e+00> : vector<64xf32>
      %140 = vector.multi_reduction <add>, %139, %cst_89 [0] : vector<128x64xf32> to vector<64xf32>
      %141 = vector.shape_cast %140 : vector<64xf32> to vector<1x64xf32>
      %142 = arith.addf %123#1, %141 : vector<1x64xf32>
      %c1_90 = arith.constant 1 : index
      %c0_91 = arith.constant 0 : index
      %c0_92 = arith.constant 0 : index
      %143 = vector.load %arg8[%c1_90, %c0_91, %c0_92] : memref<6x1x64xf32, #tpu.memory_space<vmem>>, vector<1x1x64xf32>
      %144 = vector.shape_cast %143 : vector<1x1x64xf32> to vector<1x64xf32>
      %c1_93 = arith.constant 1 : index
      %c0_94 = arith.constant 0 : index
      %c0_95 = arith.constant 0 : index
      %145 = vector.load %arg9[%c1_93, %c0_94, %c0_95] : memref<6x1x64xf32, #tpu.memory_space<vmem>>, vector<1x1x64xf32>
      %146 = vector.shape_cast %145 : vector<1x1x64xf32> to vector<1x64xf32>
      %cst_96 = arith.constant 1.250000e-01 : f32
      %147 = vector.broadcast %cst_96 : f32 to vector<1x64xf32>
      %148 = arith.mulf %138, %147 : vector<1x64xf32>
      %cst_97 = arith.constant 1.250000e-01 : f32
      %149 = vector.broadcast %cst_97 : f32 to vector<1x64xf32>
      %150 = arith.mulf %142, %149 : vector<1x64xf32>
      %151 = arith.mulf %148, %148 : vector<1x64xf32>
      %152 = arith.subf %150, %151 : vector<1x64xf32>
      %cst_98 = arith.constant 9.99999974E-6 : f32
      %153 = vector.broadcast %cst_98 : f32 to vector<1x64xf32>
      %154 = arith.addf %152, %153 : vector<1x64xf32>
      %155 = math.rsqrt %154 : vector<1x64xf32>
      %156 = arith.mulf %144, %155 : vector<1x64xf32>
      %157 = arith.mulf %148, %156 : vector<1x64xf32>
      %158 = arith.subf %146, %157 : vector<1x64xf32>
      %c0_i32_99 = arith.constant 0 : i32
      %c128_i32_100 = arith.constant 128 : i32
      %159 = arith.muli %c0_i32_99, %c128_i32_100 : i32
      %160 = tpu.assume_multiple %159, 128 : i32
      %161 = arith.index_cast %160 : i32 to index
      %c0_101 = arith.constant 0 : index
      %162 = vector.load %arg15[%161, %c0_101] : memref<128x64xf32, #tpu.memory_space<vmem>>, vector<128x64xf32>
      %163 = vector.broadcast %156 : vector<1x64xf32> to vector<128x64xf32>
      %164 = arith.mulf %162, %163 : vector<128x64xf32>
      %165 = vector.broadcast %158 : vector<1x64xf32> to vector<128x64xf32>
      %166 = arith.addf %164, %165 : vector<128x64xf32>
      %167 = arith.index_cast %160 : i32 to index
      %c0_102 = arith.constant 0 : index
      %168 = vector.load %arg14[%167, %c0_102] : memref<128x64xf32, #tpu.memory_space<vmem>>, vector<128x64xf32>
      %169 = arith.addf %166, %168 : vector<128x64xf32>
      %cst_103 = arith.constant 0.000000e+00 : f32
      %170 = vector.broadcast %cst_103 : f32 to vector<128x64xf32>
      %171 = arith.maximumf %169, %170 : vector<128x64xf32>
      %172 = arith.index_cast %160 : i32 to index
      %c0_104 = arith.constant 0 : index
      %173 = vector.load %arg14[%172, %c0_104] : memref<128x64xf32, #tpu.memory_space<vmem>>, vector<128x64xf32>
      tpu.vector_store %arg14[%172, %c0_104], %171 {strides = array<i32>} : memref<128x64xf32, #tpu.memory_space<vmem>>, vector<128x64xf32>,
      %c1_i32_105 = arith.constant 1 : i32
      %c2 = arith.constant 2 : index
      %c0_106 = arith.constant 0 : index
      %c0_107 = arith.constant 0 : index
      %174 = vector.load %arg6[%c2, %c0_106, %c0_107] : memref<6x64x64xf32, #tpu.memory_space<vmem>>, vector<1x64x64xf32>
      %175 = vector.shape_cast %174 : vector<1x64x64xf32> to vector<64x64xf32>
      %c2_108 = arith.constant 2 : index
      %c0_109 = arith.constant 0 : index
      %c0_110 = arith.constant 0 : index
      %176 = vector.load %arg7[%c2_108, %c0_109, %c0_110] : memref<6x1x64xf32, #tpu.memory_space<vmem>>, vector<1x1x64xf32>
      %177 = vector.shape_cast %176 : vector<1x1x64xf32> to vector<1x64xf32>
      %cst_111 = arith.constant 0.000000e+00 : f32
      %178 = vector.broadcast %cst_111 : f32 to vector<1x64xf32>
      %c0_i32_112 = arith.constant 0 : i32
      %c0_i32_113 = arith.constant 0 : i32
      %179 = arith.addi %c0_i32_112, %c0_i32_113 : i32
      %c1_i32_114 = arith.constant 1 : i32
      %180:2 = scf.for %arg18 = %c0_i32_112 to %179 step %c1_i32_114 iter_args(%arg19 = %178, %arg20 = %178) -> (vector<1x64xf32>, vector<1x64xf32>)  : i32 {
        %c128_i32_249 = arith.constant 128 : i32
        %407 = arith.muli %arg18, %c128_i32_249 : i32
        %408 = tpu.assume_multiple %407, 128 : i32
        %409 = arith.index_cast %408 : i32 to index
        %c0_250 = arith.constant 0 : index
        %410 = vector.load %arg14[%409, %c0_250] : memref<128x64xf32, #tpu.memory_space<vmem>>, vector<128x64xf32>
        %cst_251 = arith.constant dense<0.000000e+00> : vector<128x64xf32>
        %411 = tpu.matmul %410, %175, %cst_251 {dimension_numbers = #tpu.dot_dimension_numbers<[1], [0], [0], [1], [0, 0, 1, 1], [], []>} : vector<128x64xf32>, vector<64x64xf32>, vector<128x64xf32> -> vector<128x64xf32>
        %412 = vector.broadcast %177 : vector<1x64xf32> to vector<128x64xf32>
        %413 = arith.addf %411, %412 : vector<128x64xf32>
        %414 = arith.index_cast %408 : i32 to index
        %c0_252 = arith.constant 0 : index
        %415 = vector.load %arg15[%414, %c0_252] : memref<128x64xf32, #tpu.memory_space<vmem>>, vector<128x64xf32>
        tpu.vector_store %arg15[%414, %c0_252], %413 {strides = array<i32>} : memref<128x64xf32, #tpu.memory_space<vmem>>, vector<128x64xf32>,
        %cst_253 = arith.constant dense<0.000000e+00> : vector<64xf32>
        %416 = vector.multi_reduction <add>, %413, %cst_253 [0] : vector<128x64xf32> to vector<64xf32>
        %417 = vector.shape_cast %416 : vector<64xf32> to vector<1x64xf32>
        %418 = arith.addf %arg19, %417 : vector<1x64xf32>
        %419 = arith.mulf %413, %413 : vector<128x64xf32>
        %cst_254 = arith.constant dense<0.000000e+00> : vector<64xf32>
        %420 = vector.multi_reduction <add>, %419, %cst_254 [0] : vector<128x64xf32> to vector<64xf32>
        %421 = vector.shape_cast %420 : vector<64xf32> to vector<1x64xf32>
        %422 = arith.addf %arg20, %421 : vector<1x64xf32>
        scf.yield %418, %422 : vector<1x64xf32>, vector<1x64xf32>
      }
      %c0_i32_115 = arith.constant 0 : i32
      %c0_116 = arith.constant 0 : index
      %c0_117 = arith.constant 0 : index
      %181 = vector.load %arg14[%c0_116, %c0_117] : memref<128x64xf32, #tpu.memory_space<vmem>>, vector<128x64xf32>
      %cst_118 = arith.constant dense<0.000000e+00> : vector<128x64xf32>
      %182 = tpu.matmul %181, %175, %cst_118 {dimension_numbers = #tpu.dot_dimension_numbers<[1], [0], [0], [1], [0, 0, 1, 1], [], []>} : vector<128x64xf32>, vector<64x64xf32>, vector<128x64xf32> -> vector<128x64xf32>
      %183 = vector.broadcast %177 : vector<1x64xf32> to vector<128x64xf32>
      %184 = arith.addf %182, %183 : vector<128x64xf32>
      %c0_119 = arith.constant 0 : index
      %c0_120 = arith.constant 0 : index
      %185 = vector.load %arg15[%c0_119, %c0_120] : memref<128x64xf32, #tpu.memory_space<vmem>>, vector<128x64xf32>
      tpu.vector_store %arg15[%c0_119, %c0_120], %184 {strides = array<i32>} : memref<128x64xf32, #tpu.memory_space<vmem>>, vector<128x64xf32>,
      %186 = tpu.iota {dimensions = array<i32: 0>} : vector<128x1xi32>
      %c8_i32_121 = arith.constant 8 : i32
      %187 = vector.broadcast %c8_i32_121 : i32 to vector<128x1xi32>
      %188 = arith.cmpi slt, %186, %187 : vector<128x1xi32>
      %189 = arith.extui %188 : vector<128x1xi1> to vector<128x1xi32>
      %190 = arith.sitofp %189 : vector<128x1xi32> to vector<128x1xf32>
      %191 = vector.broadcast %190 : vector<128x1xf32> to vector<128x64xf32>
      %192 = arith.mulf %184, %191 : vector<128x64xf32>
      %cst_122 = arith.constant dense<0.000000e+00> : vector<64xf32>
      %193 = vector.multi_reduction <add>, %192, %cst_122 [0] : vector<128x64xf32> to vector<64xf32>
      %194 = vector.shape_cast %193 : vector<64xf32> to vector<1x64xf32>
      %195 = arith.addf %180#0, %194 : vector<1x64xf32>
      %196 = arith.mulf %192, %184 : vector<128x64xf32>
      %cst_123 = arith.constant dense<0.000000e+00> : vector<64xf32>
      %197 = vector.multi_reduction <add>, %196, %cst_123 [0] : vector<128x64xf32> to vector<64xf32>
      %198 = vector.shape_cast %197 : vector<64xf32> to vector<1x64xf32>
      %199 = arith.addf %180#1, %198 : vector<1x64xf32>
      %c2_124 = arith.constant 2 : index
      %c0_125 = arith.constant 0 : index
      %c0_126 = arith.constant 0 : index
      %200 = vector.load %arg8[%c2_124, %c0_125, %c0_126] : memref<6x1x64xf32, #tpu.memory_space<vmem>>, vector<1x1x64xf32>
      %201 = vector.shape_cast %200 : vector<1x1x64xf32> to vector<1x64xf32>
      %c2_127 = arith.constant 2 : index
      %c0_128 = arith.constant 0 : index
      %c0_129 = arith.constant 0 : index
      %202 = vector.load %arg9[%c2_127, %c0_128, %c0_129] : memref<6x1x64xf32, #tpu.memory_space<vmem>>, vector<1x1x64xf32>
      %203 = vector.shape_cast %202 : vector<1x1x64xf32> to vector<1x64xf32>
      %cst_130 = arith.constant 1.250000e-01 : f32
      %204 = vector.broadcast %cst_130 : f32 to vector<1x64xf32>
      %205 = arith.mulf %195, %204 : vector<1x64xf32>
      %cst_131 = arith.constant 1.250000e-01 : f32
      %206 = vector.broadcast %cst_131 : f32 to vector<1x64xf32>
      %207 = arith.mulf %199, %206 : vector<1x64xf32>
      %208 = arith.mulf %205, %205 : vector<1x64xf32>
      %209 = arith.subf %207, %208 : vector<1x64xf32>
      %cst_132 = arith.constant 9.99999974E-6 : f32
      %210 = vector.broadcast %cst_132 : f32 to vector<1x64xf32>
      %211 = arith.addf %209, %210 : vector<1x64xf32>
      %212 = math.rsqrt %211 : vector<1x64xf32>
      %213 = arith.mulf %201, %212 : vector<1x64xf32>
      %214 = arith.mulf %205, %213 : vector<1x64xf32>
      %215 = arith.subf %203, %214 : vector<1x64xf32>
      %c0_i32_133 = arith.constant 0 : i32
      %c128_i32_134 = arith.constant 128 : i32
      %216 = arith.muli %c0_i32_133, %c128_i32_134 : i32
      %217 = tpu.assume_multiple %216, 128 : i32
      %218 = arith.index_cast %217 : i32 to index
      %c0_135 = arith.constant 0 : index
      %219 = vector.load %arg15[%218, %c0_135] : memref<128x64xf32, #tpu.memory_space<vmem>>, vector<128x64xf32>
      %220 = vector.broadcast %213 : vector<1x64xf32> to vector<128x64xf32>
      %221 = arith.mulf %219, %220 : vector<128x64xf32>
      %222 = vector.broadcast %215 : vector<1x64xf32> to vector<128x64xf32>
      %223 = arith.addf %221, %222 : vector<128x64xf32>
      %cst_136 = arith.constant 0.000000e+00 : f32
      %224 = vector.broadcast %cst_136 : f32 to vector<128x64xf32>
      %225 = arith.maximumf %223, %224 : vector<128x64xf32>
      %226 = arith.index_cast %217 : i32 to index
      %c0_137 = arith.constant 0 : index
      %227 = vector.load %arg15[%226, %c0_137] : memref<128x64xf32, #tpu.memory_space<vmem>>, vector<128x64xf32>
      tpu.vector_store %arg15[%226, %c0_137], %225 {strides = array<i32>} : memref<128x64xf32, #tpu.memory_space<vmem>>, vector<128x64xf32>,
      %c1_i32_138 = arith.constant 1 : i32
      %c3 = arith.constant 3 : index
      %c0_139 = arith.constant 0 : index
      %c0_140 = arith.constant 0 : index
      %228 = vector.load %arg6[%c3, %c0_139, %c0_140] : memref<6x64x64xf32, #tpu.memory_space<vmem>>, vector<1x64x64xf32>
      %229 = vector.shape_cast %228 : vector<1x64x64xf32> to vector<64x64xf32>
      %c3_141 = arith.constant 3 : index
      %c0_142 = arith.constant 0 : index
      %c0_143 = arith.constant 0 : index
      %230 = vector.load %arg7[%c3_141, %c0_142, %c0_143] : memref<6x1x64xf32, #tpu.memory_space<vmem>>, vector<1x1x64xf32>
      %231 = vector.shape_cast %230 : vector<1x1x64xf32> to vector<1x64xf32>
      %cst_144 = arith.constant 0.000000e+00 : f32
      %232 = vector.broadcast %cst_144 : f32 to vector<1x64xf32>
      %c0_i32_145 = arith.constant 0 : i32
      %c0_i32_146 = arith.constant 0 : i32
      %233 = arith.addi %c0_i32_145, %c0_i32_146 : i32
      %c1_i32_147 = arith.constant 1 : i32
      %234:2 = scf.for %arg18 = %c0_i32_145 to %233 step %c1_i32_147 iter_args(%arg19 = %232, %arg20 = %232) -> (vector<1x64xf32>, vector<1x64xf32>)  : i32 {
        %c128_i32_249 = arith.constant 128 : i32
        %407 = arith.muli %arg18, %c128_i32_249 : i32
        %408 = tpu.assume_multiple %407, 128 : i32
        %409 = arith.index_cast %408 : i32 to index
        %c0_250 = arith.constant 0 : index
        %410 = vector.load %arg15[%409, %c0_250] : memref<128x64xf32, #tpu.memory_space<vmem>>, vector<128x64xf32>
        %cst_251 = arith.constant dense<0.000000e+00> : vector<128x64xf32>
        %411 = tpu.matmul %410, %229, %cst_251 {dimension_numbers = #tpu.dot_dimension_numbers<[1], [0], [0], [1], [0, 0, 1, 1], [], []>} : vector<128x64xf32>, vector<64x64xf32>, vector<128x64xf32> -> vector<128x64xf32>
        %412 = vector.broadcast %231 : vector<1x64xf32> to vector<128x64xf32>
        %413 = arith.addf %411, %412 : vector<128x64xf32>
        %414 = arith.index_cast %408 : i32 to index
        %c0_252 = arith.constant 0 : index
        %415 = vector.load %arg15[%414, %c0_252] : memref<128x64xf32, #tpu.memory_space<vmem>>, vector<128x64xf32>
        tpu.vector_store %arg15[%414, %c0_252], %413 {strides = array<i32>} : memref<128x64xf32, #tpu.memory_space<vmem>>, vector<128x64xf32>,
        %cst_253 = arith.constant dense<0.000000e+00> : vector<64xf32>
        %416 = vector.multi_reduction <add>, %413, %cst_253 [0] : vector<128x64xf32> to vector<64xf32>
        %417 = vector.shape_cast %416 : vector<64xf32> to vector<1x64xf32>
        %418 = arith.addf %arg19, %417 : vector<1x64xf32>
        %419 = arith.mulf %413, %413 : vector<128x64xf32>
        %cst_254 = arith.constant dense<0.000000e+00> : vector<64xf32>
        %420 = vector.multi_reduction <add>, %419, %cst_254 [0] : vector<128x64xf32> to vector<64xf32>
        %421 = vector.shape_cast %420 : vector<64xf32> to vector<1x64xf32>
        %422 = arith.addf %arg20, %421 : vector<1x64xf32>
        scf.yield %418, %422 : vector<1x64xf32>, vector<1x64xf32>
      }
      %c0_i32_148 = arith.constant 0 : i32
      %c0_149 = arith.constant 0 : index
      %c0_150 = arith.constant 0 : index
      %235 = vector.load %arg15[%c0_149, %c0_150] : memref<128x64xf32, #tpu.memory_space<vmem>>, vector<128x64xf32>
      %cst_151 = arith.constant dense<0.000000e+00> : vector<128x64xf32>
      %236 = tpu.matmul %235, %229, %cst_151 {dimension_numbers = #tpu.dot_dimension_numbers<[1], [0], [0], [1], [0, 0, 1, 1], [], []>} : vector<128x64xf32>, vector<64x64xf32>, vector<128x64xf32> -> vector<128x64xf32>
      %237 = vector.broadcast %231 : vector<1x64xf32> to vector<128x64xf32>
      %238 = arith.addf %236, %237 : vector<128x64xf32>
      %c0_152 = arith.constant 0 : index
      %c0_153 = arith.constant 0 : index
      %239 = vector.load %arg15[%c0_152, %c0_153] : memref<128x64xf32, #tpu.memory_space<vmem>>, vector<128x64xf32>
      tpu.vector_store %arg15[%c0_152, %c0_153], %238 {strides = array<i32>} : memref<128x64xf32, #tpu.memory_space<vmem>>, vector<128x64xf32>,
      %240 = tpu.iota {dimensions = array<i32: 0>} : vector<128x1xi32>
      %c8_i32_154 = arith.constant 8 : i32
      %241 = vector.broadcast %c8_i32_154 : i32 to vector<128x1xi32>
      %242 = arith.cmpi slt, %240, %241 : vector<128x1xi32>
      %243 = arith.extui %242 : vector<128x1xi1> to vector<128x1xi32>
      %244 = arith.sitofp %243 : vector<128x1xi32> to vector<128x1xf32>
      %245 = vector.broadcast %244 : vector<128x1xf32> to vector<128x64xf32>
      %246 = arith.mulf %238, %245 : vector<128x64xf32>
      %cst_155 = arith.constant dense<0.000000e+00> : vector<64xf32>
      %247 = vector.multi_reduction <add>, %246, %cst_155 [0] : vector<128x64xf32> to vector<64xf32>
      %248 = vector.shape_cast %247 : vector<64xf32> to vector<1x64xf32>
      %249 = arith.addf %234#0, %248 : vector<1x64xf32>
      %250 = arith.mulf %246, %238 : vector<128x64xf32>
      %cst_156 = arith.constant dense<0.000000e+00> : vector<64xf32>
      %251 = vector.multi_reduction <add>, %250, %cst_156 [0] : vector<128x64xf32> to vector<64xf32>
      %252 = vector.shape_cast %251 : vector<64xf32> to vector<1x64xf32>
      %253 = arith.addf %234#1, %252 : vector<1x64xf32>
      %c3_157 = arith.constant 3 : index
      %c0_158 = arith.constant 0 : index
      %c0_159 = arith.constant 0 : index
      %254 = vector.load %arg8[%c3_157, %c0_158, %c0_159] : memref<6x1x64xf32, #tpu.memory_space<vmem>>, vector<1x1x64xf32>
      %255 = vector.shape_cast %254 : vector<1x1x64xf32> to vector<1x64xf32>
      %c3_160 = arith.constant 3 : index
      %c0_161 = arith.constant 0 : index
      %c0_162 = arith.constant 0 : index
      %256 = vector.load %arg9[%c3_160, %c0_161, %c0_162] : memref<6x1x64xf32, #tpu.memory_space<vmem>>, vector<1x1x64xf32>
      %257 = vector.shape_cast %256 : vector<1x1x64xf32> to vector<1x64xf32>
      %cst_163 = arith.constant 1.250000e-01 : f32
      %258 = vector.broadcast %cst_163 : f32 to vector<1x64xf32>
      %259 = arith.mulf %249, %258 : vector<1x64xf32>
      %cst_164 = arith.constant 1.250000e-01 : f32
      %260 = vector.broadcast %cst_164 : f32 to vector<1x64xf32>
      %261 = arith.mulf %253, %260 : vector<1x64xf32>
      %262 = arith.mulf %259, %259 : vector<1x64xf32>
      %263 = arith.subf %261, %262 : vector<1x64xf32>
      %cst_165 = arith.constant 9.99999974E-6 : f32
      %264 = vector.broadcast %cst_165 : f32 to vector<1x64xf32>
      %265 = arith.addf %263, %264 : vector<1x64xf32>
      %266 = math.rsqrt %265 : vector<1x64xf32>
      %267 = arith.mulf %255, %266 : vector<1x64xf32>
      %268 = arith.mulf %259, %267 : vector<1x64xf32>
      %269 = arith.subf %257, %268 : vector<1x64xf32>
      %c0_i32_166 = arith.constant 0 : i32
      %c128_i32_167 = arith.constant 128 : i32
      %270 = arith.muli %c0_i32_166, %c128_i32_167 : i32
      %271 = tpu.assume_multiple %270, 128 : i32
      %272 = arith.index_cast %271 : i32 to index
      %c0_168 = arith.constant 0 : index
      %273 = vector.load %arg15[%272, %c0_168] : memref<128x64xf32, #tpu.memory_space<vmem>>, vector<128x64xf32>
      %274 = vector.broadcast %267 : vector<1x64xf32> to vector<128x64xf32>
      %275 = arith.mulf %273, %274 : vector<128x64xf32>
      %276 = vector.broadcast %269 : vector<1x64xf32> to vector<128x64xf32>
      %277 = arith.addf %275, %276 : vector<128x64xf32>
      %278 = arith.index_cast %271 : i32 to index
      %c0_169 = arith.constant 0 : index
      %279 = vector.load %arg14[%278, %c0_169] : memref<128x64xf32, #tpu.memory_space<vmem>>, vector<128x64xf32>
      %280 = arith.addf %277, %279 : vector<128x64xf32>
      %cst_170 = arith.constant 0.000000e+00 : f32
      %281 = vector.broadcast %cst_170 : f32 to vector<128x64xf32>
      %282 = arith.maximumf %280, %281 : vector<128x64xf32>
      %283 = arith.index_cast %271 : i32 to index
      %c0_171 = arith.constant 0 : index
      %284 = vector.load %arg14[%283, %c0_171] : memref<128x64xf32, #tpu.memory_space<vmem>>, vector<128x64xf32>
      tpu.vector_store %arg14[%283, %c0_171], %282 {strides = array<i32>} : memref<128x64xf32, #tpu.memory_space<vmem>>, vector<128x64xf32>,
      %c1_i32_172 = arith.constant 1 : i32
      %c4 = arith.constant 4 : index
      %c0_173 = arith.constant 0 : index
      %c0_174 = arith.constant 0 : index
      %285 = vector.load %arg6[%c4, %c0_173, %c0_174] : memref<6x64x64xf32, #tpu.memory_space<vmem>>, vector<1x64x64xf32>
      %286 = vector.shape_cast %285 : vector<1x64x64xf32> to vector<64x64xf32>
      %c4_175 = arith.constant 4 : index
      %c0_176 = arith.constant 0 : index
      %c0_177 = arith.constant 0 : index
      %287 = vector.load %arg7[%c4_175, %c0_176, %c0_177] : memref<6x1x64xf32, #tpu.memory_space<vmem>>, vector<1x1x64xf32>
      %288 = vector.shape_cast %287 : vector<1x1x64xf32> to vector<1x64xf32>
      %cst_178 = arith.constant 0.000000e+00 : f32
      %289 = vector.broadcast %cst_178 : f32 to vector<1x64xf32>
      %c0_i32_179 = arith.constant 0 : i32
      %c0_i32_180 = arith.constant 0 : i32
      %290 = arith.addi %c0_i32_179, %c0_i32_180 : i32
      %c1_i32_181 = arith.constant 1 : i32
      %291:2 = scf.for %arg18 = %c0_i32_179 to %290 step %c1_i32_181 iter_args(%arg19 = %289, %arg20 = %289) -> (vector<1x64xf32>, vector<1x64xf32>)  : i32 {
        %c128_i32_249 = arith.constant 128 : i32
        %407 = arith.muli %arg18, %c128_i32_249 : i32
        %408 = tpu.assume_multiple %407, 128 : i32
        %409 = arith.index_cast %408 : i32 to index
        %c0_250 = arith.constant 0 : index
        %410 = vector.load %arg14[%409, %c0_250] : memref<128x64xf32, #tpu.memory_space<vmem>>, vector<128x64xf32>
        %cst_251 = arith.constant dense<0.000000e+00> : vector<128x64xf32>
        %411 = tpu.matmul %410, %286, %cst_251 {dimension_numbers = #tpu.dot_dimension_numbers<[1], [0], [0], [1], [0, 0, 1, 1], [], []>} : vector<128x64xf32>, vector<64x64xf32>, vector<128x64xf32> -> vector<128x64xf32>
        %412 = vector.broadcast %288 : vector<1x64xf32> to vector<128x64xf32>
        %413 = arith.addf %411, %412 : vector<128x64xf32>
        %414 = arith.index_cast %408 : i32 to index
        %c0_252 = arith.constant 0 : index
        %415 = vector.load %arg15[%414, %c0_252] : memref<128x64xf32, #tpu.memory_space<vmem>>, vector<128x64xf32>
        tpu.vector_store %arg15[%414, %c0_252], %413 {strides = array<i32>} : memref<128x64xf32, #tpu.memory_space<vmem>>, vector<128x64xf32>,
        %cst_253 = arith.constant dense<0.000000e+00> : vector<64xf32>
        %416 = vector.multi_reduction <add>, %413, %cst_253 [0] : vector<128x64xf32> to vector<64xf32>
        %417 = vector.shape_cast %416 : vector<64xf32> to vector<1x64xf32>
        %418 = arith.addf %arg19, %417 : vector<1x64xf32>
        %419 = arith.mulf %413, %413 : vector<128x64xf32>
        %cst_254 = arith.constant dense<0.000000e+00> : vector<64xf32>
        %420 = vector.multi_reduction <add>, %419, %cst_254 [0] : vector<128x64xf32> to vector<64xf32>
        %421 = vector.shape_cast %420 : vector<64xf32> to vector<1x64xf32>
        %422 = arith.addf %arg20, %421 : vector<1x64xf32>
        scf.yield %418, %422 : vector<1x64xf32>, vector<1x64xf32>
      }
      %c0_i32_182 = arith.constant 0 : i32
      %c0_183 = arith.constant 0 : index
      %c0_184 = arith.constant 0 : index
      %292 = vector.load %arg14[%c0_183, %c0_184] : memref<128x64xf32, #tpu.memory_space<vmem>>, vector<128x64xf32>
      %cst_185 = arith.constant dense<0.000000e+00> : vector<128x64xf32>
      %293 = tpu.matmul %292, %286, %cst_185 {dimension_numbers = #tpu.dot_dimension_numbers<[1], [0], [0], [1], [0, 0, 1, 1], [], []>} : vector<128x64xf32>, vector<64x64xf32>, vector<128x64xf32> -> vector<128x64xf32>
      %294 = vector.broadcast %288 : vector<1x64xf32> to vector<128x64xf32>
      %295 = arith.addf %293, %294 : vector<128x64xf32>
      %c0_186 = arith.constant 0 : index
      %c0_187 = arith.constant 0 : index
      %296 = vector.load %arg15[%c0_186, %c0_187] : memref<128x64xf32, #tpu.memory_space<vmem>>, vector<128x64xf32>
      tpu.vector_store %arg15[%c0_186, %c0_187], %295 {strides = array<i32>} : memref<128x64xf32, #tpu.memory_space<vmem>>, vector<128x64xf32>,
      %297 = tpu.iota {dimensions = array<i32: 0>} : vector<128x1xi32>
      %c8_i32_188 = arith.constant 8 : i32
      %298 = vector.broadcast %c8_i32_188 : i32 to vector<128x1xi32>
      %299 = arith.cmpi slt, %297, %298 : vector<128x1xi32>
      %300 = arith.extui %299 : vector<128x1xi1> to vector<128x1xi32>
      %301 = arith.sitofp %300 : vector<128x1xi32> to vector<128x1xf32>
      %302 = vector.broadcast %301 : vector<128x1xf32> to vector<128x64xf32>
      %303 = arith.mulf %295, %302 : vector<128x64xf32>
      %cst_189 = arith.constant dense<0.000000e+00> : vector<64xf32>
      %304 = vector.multi_reduction <add>, %303, %cst_189 [0] : vector<128x64xf32> to vector<64xf32>
      %305 = vector.shape_cast %304 : vector<64xf32> to vector<1x64xf32>
      %306 = arith.addf %291#0, %305 : vector<1x64xf32>
      %307 = arith.mulf %303, %295 : vector<128x64xf32>
      %cst_190 = arith.constant dense<0.000000e+00> : vector<64xf32>
      %308 = vector.multi_reduction <add>, %307, %cst_190 [0] : vector<128x64xf32> to vector<64xf32>
      %309 = vector.shape_cast %308 : vector<64xf32> to vector<1x64xf32>
      %310 = arith.addf %291#1, %309 : vector<1x64xf32>
      %c4_191 = arith.constant 4 : index
      %c0_192 = arith.constant 0 : index
      %c0_193 = arith.constant 0 : index
      %311 = vector.load %arg8[%c4_191, %c0_192, %c0_193] : memref<6x1x64xf32, #tpu.memory_space<vmem>>, vector<1x1x64xf32>
      %312 = vector.shape_cast %311 : vector<1x1x64xf32> to vector<1x64xf32>
      %c4_194 = arith.constant 4 : index
      %c0_195 = arith.constant 0 : index
      %c0_196 = arith.constant 0 : index
      %313 = vector.load %arg9[%c4_194, %c0_195, %c0_196] : memref<6x1x64xf32, #tpu.memory_space<vmem>>, vector<1x1x64xf32>
      %314 = vector.shape_cast %313 : vector<1x1x64xf32> to vector<1x64xf32>
      %cst_197 = arith.constant 1.250000e-01 : f32
      %315 = vector.broadcast %cst_197 : f32 to vector<1x64xf32>
      %316 = arith.mulf %306, %315 : vector<1x64xf32>
      %cst_198 = arith.constant 1.250000e-01 : f32
      %317 = vector.broadcast %cst_198 : f32 to vector<1x64xf32>
      %318 = arith.mulf %310, %317 : vector<1x64xf32>
      %319 = arith.mulf %316, %316 : vector<1x64xf32>
      %320 = arith.subf %318, %319 : vector<1x64xf32>
      %cst_199 = arith.constant 9.99999974E-6 : f32
      %321 = vector.broadcast %cst_199 : f32 to vector<1x64xf32>
      %322 = arith.addf %320, %321 : vector<1x64xf32>
      %323 = math.rsqrt %322 : vector<1x64xf32>
      %324 = arith.mulf %312, %323 : vector<1x64xf32>
      %325 = arith.mulf %316, %324 : vector<1x64xf32>
      %326 = arith.subf %314, %325 : vector<1x64xf32>
      %c0_i32_200 = arith.constant 0 : i32
      %c128_i32_201 = arith.constant 128 : i32
      %327 = arith.muli %c0_i32_200, %c128_i32_201 : i32
      %328 = tpu.assume_multiple %327, 128 : i32
      %329 = arith.index_cast %328 : i32 to index
      %c0_202 = arith.constant 0 : index
      %330 = vector.load %arg15[%329, %c0_202] : memref<128x64xf32, #tpu.memory_space<vmem>>, vector<128x64xf32>
      %331 = vector.broadcast %324 : vector<1x64xf32> to vector<128x64xf32>
      %332 = arith.mulf %330, %331 : vector<128x64xf32>
      %333 = vector.broadcast %326 : vector<1x64xf32> to vector<128x64xf32>
      %334 = arith.addf %332, %333 : vector<128x64xf32>
      %cst_203 = arith.constant 0.000000e+00 : f32
      %335 = vector.broadcast %cst_203 : f32 to vector<128x64xf32>
      %336 = arith.maximumf %334, %335 : vector<128x64xf32>
      %337 = arith.index_cast %328 : i32 to index
      %c0_204 = arith.constant 0 : index
      %338 = vector.load %arg15[%337, %c0_204] : memref<128x64xf32, #tpu.memory_space<vmem>>, vector<128x64xf32>
      tpu.vector_store %arg15[%337, %c0_204], %336 {strides = array<i32>} : memref<128x64xf32, #tpu.memory_space<vmem>>, vector<128x64xf32>,
      %c1_i32_205 = arith.constant 1 : i32
      %c5 = arith.constant 5 : index
      %c0_206 = arith.constant 0 : index
      %c0_207 = arith.constant 0 : index
      %339 = vector.load %arg6[%c5, %c0_206, %c0_207] : memref<6x64x64xf32, #tpu.memory_space<vmem>>, vector<1x64x64xf32>
      %340 = vector.shape_cast %339 : vector<1x64x64xf32> to vector<64x64xf32>
      %c5_208 = arith.constant 5 : index
      %c0_209 = arith.constant 0 : index
      %c0_210 = arith.constant 0 : index
      %341 = vector.load %arg7[%c5_208, %c0_209, %c0_210] : memref<6x1x64xf32, #tpu.memory_space<vmem>>, vector<1x1x64xf32>
      %342 = vector.shape_cast %341 : vector<1x1x64xf32> to vector<1x64xf32>
      %cst_211 = arith.constant 0.000000e+00 : f32
      %343 = vector.broadcast %cst_211 : f32 to vector<1x64xf32>
      %c0_i32_212 = arith.constant 0 : i32
      %c0_i32_213 = arith.constant 0 : i32
      %344 = arith.addi %c0_i32_212, %c0_i32_213 : i32
      %c1_i32_214 = arith.constant 1 : i32
      %345:2 = scf.for %arg18 = %c0_i32_212 to %344 step %c1_i32_214 iter_args(%arg19 = %343, %arg20 = %343) -> (vector<1x64xf32>, vector<1x64xf32>)  : i32 {
        %c128_i32_249 = arith.constant 128 : i32
        %407 = arith.muli %arg18, %c128_i32_249 : i32
        %408 = tpu.assume_multiple %407, 128 : i32
        %409 = arith.index_cast %408 : i32 to index
        %c0_250 = arith.constant 0 : index
        %410 = vector.load %arg15[%409, %c0_250] : memref<128x64xf32, #tpu.memory_space<vmem>>, vector<128x64xf32>
        %cst_251 = arith.constant dense<0.000000e+00> : vector<128x64xf32>
        %411 = tpu.matmul %410, %340, %cst_251 {dimension_numbers = #tpu.dot_dimension_numbers<[1], [0], [0], [1], [0, 0, 1, 1], [], []>} : vector<128x64xf32>, vector<64x64xf32>, vector<128x64xf32> -> vector<128x64xf32>
        %412 = vector.broadcast %342 : vector<1x64xf32> to vector<128x64xf32>
        %413 = arith.addf %411, %412 : vector<128x64xf32>
        %414 = arith.index_cast %408 : i32 to index
        %c0_252 = arith.constant 0 : index
        %415 = vector.load %arg15[%414, %c0_252] : memref<128x64xf32, #tpu.memory_space<vmem>>, vector<128x64xf32>
        tpu.vector_store %arg15[%414, %c0_252], %413 {strides = array<i32>} : memref<128x64xf32, #tpu.memory_space<vmem>>, vector<128x64xf32>,
        %cst_253 = arith.constant dense<0.000000e+00> : vector<64xf32>
        %416 = vector.multi_reduction <add>, %413, %cst_253 [0] : vector<128x64xf32> to vector<64xf32>
        %417 = vector.shape_cast %416 : vector<64xf32> to vector<1x64xf32>
        %418 = arith.addf %arg19, %417 : vector<1x64xf32>
        %419 = arith.mulf %413, %413 : vector<128x64xf32>
        %cst_254 = arith.constant dense<0.000000e+00> : vector<64xf32>
        %420 = vector.multi_reduction <add>, %419, %cst_254 [0] : vector<128x64xf32> to vector<64xf32>
        %421 = vector.shape_cast %420 : vector<64xf32> to vector<1x64xf32>
        %422 = arith.addf %arg20, %421 : vector<1x64xf32>
        scf.yield %418, %422 : vector<1x64xf32>, vector<1x64xf32>
      }
      %c0_i32_215 = arith.constant 0 : i32
      %c0_216 = arith.constant 0 : index
      %c0_217 = arith.constant 0 : index
      %346 = vector.load %arg15[%c0_216, %c0_217] : memref<128x64xf32, #tpu.memory_space<vmem>>, vector<128x64xf32>
      %cst_218 = arith.constant dense<0.000000e+00> : vector<128x64xf32>
      %347 = tpu.matmul %346, %340, %cst_218 {dimension_numbers = #tpu.dot_dimension_numbers<[1], [0], [0], [1], [0, 0, 1, 1], [], []>} : vector<128x64xf32>, vector<64x64xf32>, vector<128x64xf32> -> vector<128x64xf32>
      %348 = vector.broadcast %342 : vector<1x64xf32> to vector<128x64xf32>
      %349 = arith.addf %347, %348 : vector<128x64xf32>
      %c0_219 = arith.constant 0 : index
      %c0_220 = arith.constant 0 : index
      %350 = vector.load %arg15[%c0_219, %c0_220] : memref<128x64xf32, #tpu.memory_space<vmem>>, vector<128x64xf32>
      tpu.vector_store %arg15[%c0_219, %c0_220], %349 {strides = array<i32>} : memref<128x64xf32, #tpu.memory_space<vmem>>, vector<128x64xf32>,
      %351 = tpu.iota {dimensions = array<i32: 0>} : vector<128x1xi32>
      %c8_i32_221 = arith.constant 8 : i32
      %352 = vector.broadcast %c8_i32_221 : i32 to vector<128x1xi32>
      %353 = arith.cmpi slt, %351, %352 : vector<128x1xi32>
      %354 = arith.extui %353 : vector<128x1xi1> to vector<128x1xi32>
      %355 = arith.sitofp %354 : vector<128x1xi32> to vector<128x1xf32>
      %356 = vector.broadcast %355 : vector<128x1xf32> to vector<128x64xf32>
      %357 = arith.mulf %349, %356 : vector<128x64xf32>
      %cst_222 = arith.constant dense<0.000000e+00> : vector<64xf32>
      %358 = vector.multi_reduction <add>, %357, %cst_222 [0] : vector<128x64xf32> to vector<64xf32>
      %359 = vector.shape_cast %358 : vector<64xf32> to vector<1x64xf32>
      %360 = arith.addf %345#0, %359 : vector<1x64xf32>
      %361 = arith.mulf %357, %349 : vector<128x64xf32>
      %cst_223 = arith.constant dense<0.000000e+00> : vector<64xf32>
      %362 = vector.multi_reduction <add>, %361, %cst_223 [0] : vector<128x64xf32> to vector<64xf32>
      %363 = vector.shape_cast %362 : vector<64xf32> to vector<1x64xf32>
      %364 = arith.addf %345#1, %363 : vector<1x64xf32>
      %c5_224 = arith.constant 5 : index
      %c0_225 = arith.constant 0 : index
      %c0_226 = arith.constant 0 : index
      %365 = vector.load %arg8[%c5_224, %c0_225, %c0_226] : memref<6x1x64xf32, #tpu.memory_space<vmem>>, vector<1x1x64xf32>
      %366 = vector.shape_cast %365 : vector<1x1x64xf32> to vector<1x64xf32>
      %c5_227 = arith.constant 5 : index
      %c0_228 = arith.constant 0 : index
      %c0_229 = arith.constant 0 : index
      %367 = vector.load %arg9[%c5_227, %c0_228, %c0_229] : memref<6x1x64xf32, #tpu.memory_space<vmem>>, vector<1x1x64xf32>
      %368 = vector.shape_cast %367 : vector<1x1x64xf32> to vector<1x64xf32>
      %cst_230 = arith.constant 1.250000e-01 : f32
      %369 = vector.broadcast %cst_230 : f32 to vector<1x64xf32>
      %370 = arith.mulf %360, %369 : vector<1x64xf32>
      %cst_231 = arith.constant 1.250000e-01 : f32
      %371 = vector.broadcast %cst_231 : f32 to vector<1x64xf32>
      %372 = arith.mulf %364, %371 : vector<1x64xf32>
      %373 = arith.mulf %370, %370 : vector<1x64xf32>
      %374 = arith.subf %372, %373 : vector<1x64xf32>
      %cst_232 = arith.constant 9.99999974E-6 : f32
      %375 = vector.broadcast %cst_232 : f32 to vector<1x64xf32>
      %376 = arith.addf %374, %375 : vector<1x64xf32>
      %377 = math.rsqrt %376 : vector<1x64xf32>
      %378 = arith.mulf %366, %377 : vector<1x64xf32>
      %379 = arith.mulf %370, %378 : vector<1x64xf32>
      %380 = arith.subf %368, %379 : vector<1x64xf32>
      %c0_i32_233 = arith.constant 0 : i32
      %c128_i32_234 = arith.constant 128 : i32
      %381 = arith.muli %c0_i32_233, %c128_i32_234 : i32
      %382 = tpu.assume_multiple %381, 128 : i32
      %383 = arith.index_cast %382 : i32 to index
      %c0_235 = arith.constant 0 : index
      %384 = vector.load %arg15[%383, %c0_235] : memref<128x64xf32, #tpu.memory_space<vmem>>, vector<128x64xf32>
      %385 = vector.broadcast %378 : vector<1x64xf32> to vector<128x64xf32>
      %386 = arith.mulf %384, %385 : vector<128x64xf32>
      %387 = vector.broadcast %380 : vector<1x64xf32> to vector<128x64xf32>
      %388 = arith.addf %386, %387 : vector<128x64xf32>
      %389 = arith.index_cast %382 : i32 to index
      %c0_236 = arith.constant 0 : index
      %390 = vector.load %arg14[%389, %c0_236] : memref<128x64xf32, #tpu.memory_space<vmem>>, vector<128x64xf32>
      %391 = arith.addf %388, %390 : vector<128x64xf32>
      %cst_237 = arith.constant 0.000000e+00 : f32
      %392 = vector.broadcast %cst_237 : f32 to vector<128x64xf32>
      %393 = arith.maximumf %391, %392 : vector<128x64xf32>
      %394 = arith.index_cast %382 : i32 to index
      %c0_238 = arith.constant 0 : index
      %395 = vector.load %arg14[%394, %c0_238] : memref<128x64xf32, #tpu.memory_space<vmem>>, vector<128x64xf32>
      tpu.vector_store %arg14[%394, %c0_238], %393 {strides = array<i32>} : memref<128x64xf32, #tpu.memory_space<vmem>>, vector<128x64xf32>,
      %c1_i32_239 = arith.constant 1 : i32
      %c0_240 = arith.constant 0 : index
      %c0_241 = arith.constant 0 : index
      %396 = vector.load %arg14[%c0_240, %c0_241] : memref<128x64xf32, #tpu.memory_space<vmem>>, vector<128x64xf32>
      %397 = vector.shape_cast %396 : vector<128x64xf32> to vector<1x128x64xf32>
      %c0_242 = arith.constant 0 : index
      %c0_243 = arith.constant 0 : index
      %398 = vector.load %arg10[%c0_242, %c0_243] : memref<1x64xf32, #tpu.memory_space<vmem>>, vector<1x64xf32>
      %399 = vector.shape_cast %398 : vector<1x64xf32> to vector<1x1x64xf32>
      %400 = vector.broadcast %399 : vector<1x1x64xf32> to vector<1x128x64xf32>
      %401 = arith.mulf %397, %400 : vector<1x128x64xf32>
      %cst_244 = arith.constant dense<0.000000e+00> : vector<1x128xf32>
      %402 = vector.multi_reduction <add>, %401, %cst_244 [2] : vector<1x128x64xf32> to vector<1x128xf32>
      %c0_245 = arith.constant 0 : index
      %c0_246 = arith.constant 0 : index
      %403 = vector.load %arg11[%c0_245, %c0_246] : memref<1x1xf32, #tpu.memory_space<vmem>>, vector<1x1xf32>
      %404 = vector.broadcast %403 : vector<1x1xf32> to vector<1x128xf32>
      %405 = arith.addf %402, %404 : vector<1x128xf32>
      %c0_247 = arith.constant 0 : index
      %c0_248 = arith.constant 0 : index
      %406 = vector.load %arg12[%c0_247, %c0_248] : memref<1x128xf32, #tpu.memory_space<vmem>>, vector<1x128xf32>
      tpu.vector_store %arg12[%c0_247, %c0_248], %405 {strides = array<i32>} : memref<1x128xf32, #tpu.memory_space<vmem>>, vector<1x128xf32>,
    } else {
    }
    return
  }
  func.func @transform_0(%arg0: i32) -> (i32, i32) {
    %c0_i32 = arith.constant 0 : i32
    %c0_i32_0 = arith.constant 0 : i32
    return %arg0, %c0_i32 : i32, i32
  }
  func.func @transform_1(%arg0: i32) -> (i32, i32) {
    %c0_i32 = arith.constant 0 : i32
    %c0_i32_0 = arith.constant 0 : i32
    %c0_i32_1 = arith.constant 0 : i32
    return %c0_i32, %c0_i32_0 : i32, i32
  }
  func.func @transform_2(%arg0: i32) -> (i32, i32) {
    %c0_i32 = arith.constant 0 : i32
    %c0_i32_0 = arith.constant 0 : i32
    %c0_i32_1 = arith.constant 0 : i32
    return %c0_i32, %c0_i32_0 : i32, i32
  }
  func.func @transform_3(%arg0: i32) -> (i32, i32) {
    %c0_i32 = arith.constant 0 : i32
    %c0_i32_0 = arith.constant 0 : i32
    %c0_i32_1 = arith.constant 0 : i32
    return %c0_i32, %c0_i32_0 : i32, i32
  }
  func.func @transform_4(%arg0: i32) -> (i32, i32) {
    %c0_i32 = arith.constant 0 : i32
    %c0_i32_0 = arith.constant 0 : i32
    %c0_i32_1 = arith.constant 0 : i32
    return %c0_i32, %c0_i32_0 : i32, i32
  }
  func.func @transform_5(%arg0: i32) -> (i32, i32, i32) {
    %c0_i32 = arith.constant 0 : i32
    %c0_i32_0 = arith.constant 0 : i32
    %c0_i32_1 = arith.constant 0 : i32
    %c0_i32_2 = arith.constant 0 : i32
    return %c0_i32, %c0_i32_0, %c0_i32_1 : i32, i32, i32
  }
  func.func @transform_6(%arg0: i32) -> (i32, i32, i32) {
    %c0_i32 = arith.constant 0 : i32
    %c0_i32_0 = arith.constant 0 : i32
    %c0_i32_1 = arith.constant 0 : i32
    %c0_i32_2 = arith.constant 0 : i32
    return %c0_i32, %c0_i32_0, %c0_i32_1 : i32, i32, i32
  }
  func.func @transform_7(%arg0: i32) -> (i32, i32, i32) {
    %c0_i32 = arith.constant 0 : i32
    %c0_i32_0 = arith.constant 0 : i32
    %c0_i32_1 = arith.constant 0 : i32
    %c0_i32_2 = arith.constant 0 : i32
    return %c0_i32, %c0_i32_0, %c0_i32_1 : i32, i32, i32
  }
  func.func @transform_8(%arg0: i32) -> (i32, i32, i32) {
    %c0_i32 = arith.constant 0 : i32
    %c0_i32_0 = arith.constant 0 : i32
    %c0_i32_1 = arith.constant 0 : i32
    %c0_i32_2 = arith.constant 0 : i32
    return %c0_i32, %c0_i32_0, %c0_i32_1 : i32, i32, i32
  }
  func.func @transform_9(%arg0: i32) -> (i32, i32) {
    %c0_i32 = arith.constant 0 : i32
    %c0_i32_0 = arith.constant 0 : i32
    %c0_i32_1 = arith.constant 0 : i32
    return %c0_i32, %c0_i32_0 : i32, i32
  }
  func.func @transform_10(%arg0: i32) -> (i32, i32) {
    %c0_i32 = arith.constant 0 : i32
    %c0_i32_0 = arith.constant 0 : i32
    %c0_i32_1 = arith.constant 0 : i32
    return %c0_i32, %c0_i32_0 : i32, i32
  }
  func.func @transform_11(%arg0: i32) -> (i32, i32) {
    %c0_i32 = arith.constant 0 : i32
    %c0_i32_0 = arith.constant 0 : i32
    %c0_i32_1 = arith.constant 0 : i32
    return %c0_i32, %c0_i32_0 : i32, i32
  }
}

</mosaic_0001>

<llo_original>
// kernel: tpu_custom_call.1
$region0: #{tpu_custom_call.1}
  #allocation0 [shape = 'u32[]', space=smem, size = 0x4, offset = 0x4, fixed_abs, tag = 'smem constant byte address 0x4 - core index']
  #allocation1 [shape = 'u32[72,128]{1,0:T(1,128)}', space=vmem, size = 0x9000, scoped, tag = 'internal scratch']
  #allocation2 [shape = 'f32[128,64]{1,0:T(8,128)}', space=vmem, size = 0x10000, scoped, tag = 'scratch operand']
  #allocation3 [shape = 'f32[128,64]{1,0:T(8,128)}', space=vmem, size = 0x10000, scoped, tag = 'scratch operand']
  #allocation4 [shape = 'f32[128,64]{1,0:T(8,128)}', space=vmem, size = 0x10000, scoped, tag = 'scratch operand']
  #allocation5 [shape = 'f32[1,64]{1,0:T(1,128)}', space=vmem, size = 0x200, scoped, tag = 'scratch operand']
  #allocation6 [shape = 'f32[1,64]{1,0:T(1,128)}', space=vmem, size = 0x200, scoped, tag = 'scratch operand']
  #allocation7 [shape = 'f32[1,1]{1,0:T(1,128)S(1)}', space=vmem, size = 0x200, scoped, tag = 'scoped memory for tpu_custom_call.1']
  %s0 = inlined_call_operand.vmem [shape: f32[128,128], index: 0, kind: input, shape index: {}]
  %s1 = inlined_call_operand.vmem [shape: f32[128,64], index: 1, kind: input, shape index: {}]
  %s2 = inlined_call_operand.vmem [shape: f32[1,64], index: 2, kind: input, shape index: {}]
  %s3 = inlined_call_operand.vmem [shape: f32[1,64], index: 3, kind: input, shape index: {}]
  %s4 = inlined_call_operand.vmem [shape: f32[1,64], index: 4, kind: input, shape index: {}]
  %s5 = inlined_call_operand.hbm [shape: f32[6,64,64], index: 5, kind: input, shape index: {}]
  %s6 = inlined_call_operand.vmem [shape: f32[6,1,64], index: 6, kind: input, shape index: {}]
  %s7 = inlined_call_operand.vmem [shape: f32[6,1,64], index: 7, kind: input, shape index: {}]
  %s8 = inlined_call_operand.vmem [shape: f32[6,1,64], index: 8, kind: input, shape index: {}]
  %s9 = inlined_call_operand.vmem [shape: f32[1,64], index: 9, kind: input, shape index: {}]
  %s10 = inlined_call_operand.<no memory space> [shape: f32[1,1], index: 10, kind: input, shape index: {}]
  %s11 = inlined_call_operand.hbm [shape: f32[1,128], index: 11, kind: output, shape index: {}]
  %s12 = sld [smem:[#allocation0]]
  $region66: #{tpu_custom_call.1} parent=0
    _
  %s14 = ssub.s32 1, %s12
  %s15 = scalar_select 0, %s14, %s12
  %v16 = vstv %s10
  %17 = vst [vmem:[#allocation7] sm:$0x1] %v16
  $region1: #{tpu_custom_call.1} parent=0
    #allocation8 [shape = 'u8[196608]{0}', space=vmem, size = 0x30000, scoped, tag = 'input window, operand 5, single buffered']
    #allocation9 [shape = 's32[1]{0}', space=sflag, size = 0x4, scoped, tag = 'scoped memory for tpu_custom_call.1']
    #allocation10 [shape = 's32[1]{0}', space=sflag, size = 0x4, scoped, tag = 'scoped memory for tpu_custom_call.1']
    #allocation11 [shape = 'u8[512]{0}', space=vmem, size = 0x400, scoped, tag = 'output window, operand 0, single buffered']
    %18 = vsyncpa [#allocation9], 0
    %19 = vsyncpa [#allocation10], 0
    // Predicated region
    $region2: #{tpu_custom_call.1} parent=1 // pred_check
      _
    $region3: #{tpu_custom_call.1} parent=1 // pred_check_branch
      %21 = sbr.rel (0) target = $region5
    $region4: #{tpu_custom_call.1} parent=1 // pred_region
      _
    $region5: #{tpu_custom_call.1} parent=1 // pred_fallthru
      _
    // Predicated region
    $region6: #{tpu_custom_call.1} parent=1 // pred_check
      _
    $region7: #{tpu_custom_call.1} parent=1 // pred_check_branch
      %23 = sbr.rel (0) target = $region9
    $region8: #{tpu_custom_call.1} parent=1 // pred_region
      _
    $region9: #{tpu_custom_call.1} parent=1 // pred_fallthru
      _
    // Predicated region
    $region10: #{tpu_custom_call.1} parent=1 // pred_check
      _
    $region11: #{tpu_custom_call.1} parent=1 // pred_check_branch
      %25 = sbr.rel (0) target = $region13
    $region12: #{tpu_custom_call.1} parent=1 // pred_region
      _
    $region13: #{tpu_custom_call.1} parent=1 // pred_fallthru
      _
    // Predicated region
    $region14: #{tpu_custom_call.1} parent=1 // pred_check
      _
    $region15: #{tpu_custom_call.1} parent=1 // pred_check_branch
      %27 = sbr.rel (0) target = $region17
    $region16: #{tpu_custom_call.1} parent=1 // pred_region
      _
    $region17: #{tpu_custom_call.1} parent=1 // pred_fallthru
      _
    // Predicated region
    $region18: #{tpu_custom_call.1} parent=1 // pred_check
      _
    $region19: #{tpu_custom_call.1} parent=1 // pred_check_branch
      %29 = sbr.rel (0) target = $region21
    $region20: #{tpu_custom_call.1} parent=1 // pred_region
      _
    $region21: #{tpu_custom_call.1} parent=1 // pred_fallthru
      _
    // Predicated region
    $region22: #{tpu_custom_call.1} parent=1 // pred_check
      _
    $region23: #{tpu_custom_call.1} parent=1 // pred_check_branch
      %31 = sbr.rel (0) target = $region25
    $region24: #{tpu_custom_call.1} parent=1 // pred_region
      %33 = vsyncadd [#allocation9], 0
      %s34 = sshll.u32 %s5, 4
      %s35 = int_to_ptr.hbm [resolvable:$true] %s34
      %s36 = sshll.u32 [#allocation8], 4
      %s37 = int_to_ptr.vmem [resolvable:$true] %s36
      %42 = dma.hbm_to_vmem [thread:$0]  %s35, 6144, %s37, [#allocation9], 128, 128, 8
    $region25: #{tpu_custom_call.1} parent=1 // pred_fallthru
      _
    // Predicated region
    $region26: #{tpu_custom_call.1} parent=1 // pred_check
      _
    $region27: #{tpu_custom_call.1} parent=1 // pred_check_branch
      %44 = sbr.rel (0) target = $region29
    $region28: #{tpu_custom_call.1} parent=1 // pred_region
      _
    $region29: #{tpu_custom_call.1} parent=1 // pred_fallthru
      _
    // Predicated region
    $region30: #{tpu_custom_call.1} parent=1 // pred_check
      _
    $region31: #{tpu_custom_call.1} parent=1 // pred_check_branch
      %46 = sbr.rel (0) target = $region33
    $region32: #{tpu_custom_call.1} parent=1 // pred_region
      _
    $region33: #{tpu_custom_call.1} parent=1 // pred_fallthru
      _
    // Predicated region
    $region34: #{tpu_custom_call.1} parent=1 // pred_check
      _
    $region35: #{tpu_custom_call.1} parent=1 // pred_check_branch
      %48 = sbr.rel (0) target = $region37
    $region36: #{tpu_custom_call.1} parent=1 // pred_region
      _
    $region37: #{tpu_custom_call.1} parent=1 // pred_fallthru
      _
    // Predicated region
    $region38: #{tpu_custom_call.1} parent=1 // pred_check
      _
    $region39: #{tpu_custom_call.1} parent=1 // pred_check_branch
      %50 = sbr.rel (0) target = $region41
    $region40: #{tpu_custom_call.1} parent=1 // pred_region
      _
    $region41: #{tpu_custom_call.1} parent=1 // pred_fallthru
      _
    // Predicated region
    $region42: #{tpu_custom_call.1} parent=1 // pred_check
      _
    $region43: #{tpu_custom_call.1} parent=1 // pred_check_branch
      %52 = sbr.rel (0) target = $region45
    $region44: #{tpu_custom_call.1} parent=1 // pred_region
      _
    $region45: #{tpu_custom_call.1} parent=1 // pred_fallthru
      _
    // Predicated region
    $region46: #{tpu_custom_call.1} parent=1 // pred_check
      _
    $region47: #{tpu_custom_call.1} parent=1 // pred_check_branch
      %54 = sbr.rel (0) target = $region49
    $region48: #{tpu_custom_call.1} parent=1 // pred_region
      %56 = dma.done [#allocation9], 6144
    $region49: #{tpu_custom_call.1} parent=1 // pred_fallthru
      _
    %p57 = scmp.eq.s32.totalorder 0, 0
    // Predicated region
    $region50: #{tpu_custom_call.1} parent=1 // pred_check
      %p58 = pneg %p57
    $region51: #{tpu_custom_call.1} parent=1 // pred_check_branch
      %60 = sbr.rel (%p58) target = $region53
    $region52: #{tpu_custom_call.1} parent=1 // pred_region
      %vm61 = vcmask 516096
      %62 = vst.msk [vmem:[#allocation5] sm:$0x1] %vm61, 0.0
      %63 = vst.msk [vmem:[#allocation6] sm:$0x1] %vm61, 0.0
    $region53: #{tpu_custom_call.1} parent=1 // pred_fallthru
      _
    %v64 = vld [vmem:[%s0] sm:$0xff]
    %v65 = vld [vmem:[%s0 + $0x8] sm:$0xff]
    %v66 = vld [vmem:[%s0 + $0x10] sm:$0xff]
    %v67 = vld [vmem:[%s0 + $0x18] sm:$0xff]
    %v68 = vld [vmem:[%s0 + $0x20] sm:$0xff]
    %v69 = vld [vmem:[%s0 + $0x28] sm:$0xff]
    %v70 = vld [vmem:[%s0 + $0x30] sm:$0xff]
    %v71 = vld [vmem:[%s0 + $0x38] sm:$0xff]
    %v72 = vld [vmem:[%s0 + $0x40] sm:$0xff]
    %v73 = vld [vmem:[%s0 + $0x48] sm:$0xff]
    %v74 = vld [vmem:[%s0 + $0x50] sm:$0xff]
    %v75 = vld [vmem:[%s0 + $0x58] sm:$0xff]
    %v76 = vld [vmem:[%s0 + $0x60] sm:$0xff]
    %v77 = vld [vmem:[%s0 + $0x68] sm:$0xff]
    %v78 = vld [vmem:[%s0 + $0x70] sm:$0xff]
    %v79 = vld [vmem:[%s0 + $0x78] sm:$0xff]
    %v80 = vld [vmem:[%s1] sm:$0xff]
    %v81 = vld [vmem:[%s1 + $0x8] sm:$0xff]
    %v82 = vld [vmem:[%s1 + $0x10] sm:$0xff]
    %v83 = vld [vmem:[%s1 + $0x18] sm:$0xff]
    %v84 = vld [vmem:[%s1 + $0x20] sm:$0xff]
    %v85 = vld [vmem:[%s1 + $0x28] sm:$0xff]
    %v86 = vld [vmem:[%s1 + $0x30] sm:$0xff]
    %v87 = vld [vmem:[%s1 + $0x38] sm:$0xff]
    %v88 = vld [vmem:[%s1 + $0x40] sm:$0xff]
    %v89 = vld [vmem:[%s1 + $0x48] sm:$0xff]
    %v90 = vld [vmem:[%s1 + $0x50] sm:$0xff]
    %v91 = vld [vmem:[%s1 + $0x58] sm:$0xff]
    %v92 = vld [vmem:[%s1 + $0x60] sm:$0xff]
    %v93 = vld [vmem:[%s1 + $0x68] sm:$0xff]
    %v94 = vld [vmem:[%s1 + $0x70] sm:$0xff]
    %v95 = vld [vmem:[%s1 + $0x78] sm:$0xff]
    %v96 = vld [vmem:[%s2] sm:$0x1]
    %v98 = vperm.slane %v96, 0
    %100 = vmatpush.msra.mxu0 %v95
    %101 = vmatpush.msra.mxu0 %v94
    %102 = vmatpush.msra.mxu0 %v93
    %103 = vmatpush.msra.mxu0 %v92
    %104 = vmatpush.msra.mxu0 %v91
    %105 = vmatpush.msra.mxu0 %v90
    %106 = vmatpush.msra.mxu0 %v89
    %107 = vmatpush.msra.mxu0 %v88
    %108 = vmatpush.msra.mxu0 %v87
    %109 = vmatpush.msra.mxu0 %v86
    %110 = vmatpush.msra.mxu0 %v85
    %111 = vmatpush.msra.mxu0 %v84
    %112 = vmatpush.msra.mxu0 %v83
    %113 = vmatpush.msra.mxu0 %v82
    %114 = vmatpush.msra.mxu0 %v81
    %115 = vmatpush.msra.mxu0 %v80
    %116 = vmatmul.f32.gmra.mxu0 %v64
    %v117 = vpop.f32.mrf.mxu0
    %v118 = vadd.f32 %v98, %v117
    %119 = vmatmul.f32.gmra.mxu0 %v65
    %v120 = vpop.f32.mrf.mxu0
    %v121 = vadd.f32 %v98, %v120
    %122 = vmatmul.f32.gmra.mxu0 %v66
    %v123 = vpop.f32.mrf.mxu0
    %v124 = vadd.f32 %v98, %v123
    %125 = vmatmul.f32.gmra.mxu0 %v67
    %v126 = vpop.f32.mrf.mxu0
    %v127 = vadd.f32 %v98, %v126
    %128 = vmatmul.f32.gmra.mxu0 %v68
    %v129 = vpop.f32.mrf.mxu0
    %v130 = vadd.f32 %v98, %v129
    %131 = vmatmul.f32.gmra.mxu0 %v69
    %v132 = vpop.f32.mrf.mxu0
    %v133 = vadd.f32 %v98, %v132
    %134 = vmatmul.f32.gmra.mxu0 %v70
    %v135 = vpop.f32.mrf.mxu0
    %v136 = vadd.f32 %v98, %v135
    %137 = vmatmul.f32.gmra.mxu0 %v71
    %v138 = vpop.f32.mrf.mxu0
    %v139 = vadd.f32 %v98, %v138
    %140 = vmatmul.f32.gmra.mxu0 %v72
    %v141 = vpop.f32.mrf.mxu0
    %v142 = vadd.f32 %v98, %v141
    %143 = vmatmul.f32.gmra.mxu0 %v73
    %v144 = vpop.f32.mrf.mxu0
    %v145 = vadd.f32 %v98, %v144
    %146 = vmatmul.f32.gmra.mxu0 %v74
    %v147 = vpop.f32.mrf.mxu0
    %v148 = vadd.f32 %v98, %v147
    %149 = vmatmul.f32.gmra.mxu0 %v75
    %v150 = vpop.f32.mrf.mxu0
    %v151 = vadd.f32 %v98, %v150
    %152 = vmatmul.f32.gmra.mxu0 %v76
    %v153 = vpop.f32.mrf.mxu0
    %v154 = vadd.f32 %v98, %v153
    %155 = vmatmul.f32.gmra.mxu0 %v77
    %v156 = vpop.f32.mrf.mxu0
    %v157 = vadd.f32 %v98, %v156
    %158 = vmatmul.f32.gmra.mxu0 %v78
    %v159 = vpop.f32.mrf.mxu0
    %v160 = vadd.f32 %v98, %v159
    %161 = vmatmul.f32.gmra.mxu0 %v79
    %v162 = vpop.f32.mrf.mxu0
    %v163 = vadd.f32 %v98, %v162
    %164 = vdwg.mxu0
    %s165 = smul.u32 0, 128
    %s166 = scalar_lea.vmem [#allocation2], %s165
    %vm167 = vcmask 523264
    %168 = vst.msk [vmem:[%s166] sm:$0xff] %vm167, %v118
    %169 = vst.msk [vmem:[%s166 + $0x8] sm:$0xff] %vm167, %v121
    %170 = vst.msk [vmem:[%s166 + $0x10] sm:$0xff] %vm167, %v124
    %171 = vst.msk [vmem:[%s166 + $0x18] sm:$0xff] %vm167, %v127
    %172 = vst.msk [vmem:[%s166 + $0x20] sm:$0xff] %vm167, %v130
    %173 = vst.msk [vmem:[%s166 + $0x28] sm:$0xff] %vm167, %v133
    %174 = vst.msk [vmem:[%s166 + $0x30] sm:$0xff] %vm167, %v136
    %175 = vst.msk [vmem:[%s166 + $0x38] sm:$0xff] %vm167, %v139
    %176 = vst.msk [vmem:[%s166 + $0x40] sm:$0xff] %vm167, %v142
    %177 = vst.msk [vmem:[%s166 + $0x48] sm:$0xff] %vm167, %v145
    %178 = vst.msk [vmem:[%s166 + $0x50] sm:$0xff] %vm167, %v148
    %179 = vst.msk [vmem:[%s166 + $0x58] sm:$0xff] %vm167, %v151
    %180 = vst.msk [vmem:[%s166 + $0x60] sm:$0xff] %vm167, %v154
    %181 = vst.msk [vmem:[%s166 + $0x68] sm:$0xff] %vm167, %v157
    %182 = vst.msk [vmem:[%s166 + $0x70] sm:$0xff] %vm167, %v160
    %183 = vst.msk [vmem:[%s166 + $0x78] sm:$0xff] %vm167, %v163
    %v184 = vld [vmem:[#allocation5] sm:$0x1]
    %v185 = vsel %vm167, %v118, 0.0
    %v186 = vsel %vm167, %v121, 0.0
    %v187 = vadd.f32 %v185, %v186
    %v188 = vsel %vm167, %v124, 0.0
    %v189 = vadd.f32 %v187, %v188
    %v190 = vsel %vm167, %v127, 0.0
    %v191 = vadd.f32 %v189, %v190
    %v192 = vsel %vm167, %v130, 0.0
    %v193 = vadd.f32 %v191, %v192
    %v194 = vsel %vm167, %v133, 0.0
    %v195 = vadd.f32 %v193, %v194
    %v196 = vsel %vm167, %v136, 0.0
    %v197 = vadd.f32 %v195, %v196
    %v198 = vsel %vm167, %v139, 0.0
    %v199 = vadd.f32 %v197, %v198
    %v200 = vsel %vm167, %v142, 0.0
    %v201 = vadd.f32 %v199, %v200
    %v202 = vsel %vm167, %v145, 0.0
    %v203 = vadd.f32 %v201, %v202
    %v204 = vsel %vm167, %v148, 0.0
    %v205 = vadd.f32 %v203, %v204
    %v206 = vsel %vm167, %v151, 0.0
    %v207 = vadd.f32 %v205, %v206
    %v208 = vsel %vm167, %v154, 0.0
    %v209 = vadd.f32 %v207, %v208
    %v210 = vsel %vm167, %v157, 0.0
    %v211 = vadd.f32 %v209, %v210
    %v212 = vsel %vm167, %v160, 0.0
    %v213 = vadd.f32 %v211, %v212
    %v214 = vsel %vm167, %v163, 0.0
    %v215 = vadd.f32 %v213, %v214
    %v216 = vrot.slane %v215, 4
    %v217 = vadd.f32 %v215, %v216
    %v218 = vrot.slane %v217, 2
    %v219 = vadd.f32 %v217, %v218
    %v220 = vrot.slane %v219, 1
    %v221 = vadd.f32 %v219, %v220
    %v222 = vadd.f32 %v184, %v221
    %vm223 = vcmask 516096
    %224 = vst.msk [vmem:[#allocation5] sm:$0x1] %vm223, %v222
    %v225 = vld [vmem:[#allocation6] sm:$0x1]
    %v226 = vmul.f32 %v118, %v118
    %v227 = vmul.f32 %v121, %v121
    %v228 = vmul.f32 %v124, %v124
    %v229 = vmul.f32 %v127, %v127
    %v230 = vmul.f32 %v130, %v130
    %v231 = vmul.f32 %v133, %v133
    %v232 = vmul.f32 %v136, %v136
    %v233 = vmul.f32 %v139, %v139
    %v234 = vmul.f32 %v142, %v142
    %v235 = vmul.f32 %v145, %v145
    %v236 = vmul.f32 %v148, %v148
    %v237 = vmul.f32 %v151, %v151
    %v238 = vmul.f32 %v154, %v154
    %v239 = vmul.f32 %v157, %v157
    %v240 = vmul.f32 %v160, %v160
    %v241 = vmul.f32 %v163, %v163
    %v242 = vsel %vm167, %v226, 0.0
    %v243 = vsel %vm167, %v227, 0.0
    %v244 = vadd.f32 %v242, %v243
    %v245 = vsel %vm167, %v228, 0.0
    %v246 = vadd.f32 %v244, %v245
    %v247 = vsel %vm167, %v229, 0.0
    %v248 = vadd.f32 %v246, %v247
    %v249 = vsel %vm167, %v230, 0.0
    %v250 = vadd.f32 %v248, %v249
    %v251 = vsel %vm167, %v231, 0.0
    %v252 = vadd.f32 %v250, %v251
    %v253 = vsel %vm167, %v232, 0.0
    %v254 = vadd.f32 %v252, %v253
    %v255 = vsel %vm167, %v233, 0.0
    %v256 = vadd.f32 %v254, %v255
    %v257 = vsel %vm167, %v234, 0.0
    %v258 = vadd.f32 %v256, %v257
    %v259 = vsel %vm167, %v235, 0.0
    %v260 = vadd.f32 %v258, %v259
    %v261 = vsel %vm167, %v236, 0.0
    %v262 = vadd.f32 %v260, %v261
    %v263 = vsel %vm167, %v237, 0.0
    %v264 = vadd.f32 %v262, %v263
    %v265 = vsel %vm167, %v238, 0.0
    %v266 = vadd.f32 %v264, %v265
    %v267 = vsel %vm167, %v239, 0.0
    %v268 = vadd.f32 %v266, %v267
    %v269 = vsel %vm167, %v240, 0.0
    %v270 = vadd.f32 %v268, %v269
    %v271 = vsel %vm167, %v241, 0.0
    %v272 = vadd.f32 %v270, %v271
    %v273 = vrot.slane %v272, 4
    %v274 = vadd.f32 %v272, %v273
    %v275 = vrot.slane %v274, 2
    %v276 = vadd.f32 %v274, %v275
    %v277 = vrot.slane %v276, 1
    %v278 = vadd.f32 %v276, %v277
    %v279 = vadd.f32 %v225, %v278
    %280 = vst.msk [vmem:[#allocation6] sm:$0x1] %vm223, %v279
    // Predicated region
    $region54: #{tpu_custom_call.1} parent=1 // pred_check
      %p281 = pneg %p57
    $region55: #{tpu_custom_call.1} parent=1 // pred_check_branch
      %283 = sbr.rel (%p281) target = $region57
    $region56: #{tpu_custom_call.1} parent=1 // pred_region
      %v284 = vld [vmem:[%s2] sm:$0x1]
      %v285 = vld [vmem:[#allocation5] sm:$0x1]
      %v286 = vmul.f32 %v284, 120.0
      %v287 = vsub.f32 %v285, %v286
      %v288 = vld [vmem:[#allocation6] sm:$0x1]
      %v289 = vmul.f32 %v284, %v284
      %v290 = vmul.f32 %v289, 120.0
      %v291 = vsub.f32 %v288, %v290
      %v292 = vld [vmem:[%s3] sm:$0x1]
      %v293 = vld [vmem:[%s4] sm:$0x1]
      %v294 = vmul.f32 %v287, 0.125
      %v295 = vmul.f32 %v291, 0.125
      %v296 = vmul.f32 %v294, %v294
      %v297 = vsub.f32 %v295, %v296
      %v298 = vadd.f32 %v297, 1e-05
      %v299 = vrsqrt.pop %v298
      %v300 = vmul.f32 %v299, %v298
      %v301 = vmul.f32 %v300, %v299
      %v302 = vmul.f32 0.5, %v301
      %v303 = vsub.f32 1.5, %v302
      %v304 = vmul.f32 %v299, %v303
      %vm305 = vweird.f32 %v298
      %vm306 = vweird.f32 %v299
      %vm307 = vmor %vm305, %vm306
      %v308 = vsel %vm307, %v299, %v304
      %v309 = vmul.f32 %v292, %v308
      %v310 = vmul.f32 %v294, %v309
      %v311 = vsub.f32 %v293, %v310
      %v312 = vld [vmem:[#allocation2] sm:$0xff]
      %v313 = vld [vmem:[#allocation2 + $0x8] sm:$0xff]
      %v314 = vld [vmem:[#allocation2 + $0x10] sm:$0xff]
      %v315 = vld [vmem:[#allocation2 + $0x18] sm:$0xff]
      %v316 = vld [vmem:[#allocation2 + $0x20] sm:$0xff]
      %v317 = vld [vmem:[#allocation2 + $0x28] sm:$0xff]
      %v318 = vld [vmem:[#allocation2 + $0x30] sm:$0xff]
      %v319 = vld [vmem:[#allocation2 + $0x38] sm:$0xff]
      %v320 = vld [vmem:[#allocation2 + $0x40] sm:$0xff]
      %v321 = vld [vmem:[#allocation2 + $0x48] sm:$0xff]
      %v322 = vld [vmem:[#allocation2 + $0x50] sm:$0xff]
      %v323 = vld [vmem:[#allocation2 + $0x58] sm:$0xff]
      %v324 = vld [vmem:[#allocation2 + $0x60] sm:$0xff]
      %v325 = vld [vmem:[#allocation2 + $0x68] sm:$0xff]
      %v326 = vld [vmem:[#allocation2 + $0x70] sm:$0xff]
      %v327 = vld [vmem:[#allocation2 + $0x78] sm:$0xff]
      %v329 = vperm.slane %v309, 0
      %v331 = vmul.f32 %v312, %v329
      %v332 = vmul.f32 %v313, %v329
      %v333 = vmul.f32 %v314, %v329
      %v334 = vmul.f32 %v315, %v329
      %v335 = vmul.f32 %v316, %v329
      %v336 = vmul.f32 %v317, %v329
      %v337 = vmul.f32 %v318, %v329
      %v338 = vmul.f32 %v319, %v329
      %v339 = vmul.f32 %v320, %v329
      %v340 = vmul.f32 %v321, %v329
      %v341 = vmul.f32 %v322, %v329
      %v342 = vmul.f32 %v323, %v329
      %v343 = vmul.f32 %v324, %v329
      %v344 = vmul.f32 %v325, %v329
      %v345 = vmul.f32 %v326, %v329
      %v346 = vmul.f32 %v327, %v329
      %v348 = vperm.slane %v311, 0
      %v350 = vadd.f32 %v331, %v348
      %v351 = vadd.f32 %v332, %v348
      %v352 = vadd.f32 %v333, %v348
      %v353 = vadd.f32 %v334, %v348
      %v354 = vadd.f32 %v335, %v348
      %v355 = vadd.f32 %v336, %v348
      %v356 = vadd.f32 %v337, %v348
      %v357 = vadd.f32 %v338, %v348
      %v358 = vadd.f32 %v339, %v348
      %v359 = vadd.f32 %v340, %v348
      %v360 = vadd.f32 %v341, %v348
      %v361 = vadd.f32 %v342, %v348
      %v362 = vadd.f32 %v343, %v348
      %v363 = vadd.f32 %v344, %v348
      %v364 = vadd.f32 %v345, %v348
      %v365 = vadd.f32 %v346, %v348
      %v366 = vmax.f32 %v350, 0.0
      %v367 = vmax.f32 %v351, 0.0
      %v368 = vmax.f32 %v352, 0.0
      %v369 = vmax.f32 %v353, 0.0
      %v370 = vmax.f32 %v354, 0.0
      %v371 = vmax.f32 %v355, 0.0
      %v372 = vmax.f32 %v356, 0.0
      %v373 = vmax.f32 %v357, 0.0
      %v374 = vmax.f32 %v358, 0.0
      %v375 = vmax.f32 %v359, 0.0
      %v376 = vmax.f32 %v360, 0.0
      %v377 = vmax.f32 %v361, 0.0
      %v378 = vmax.f32 %v362, 0.0
      %v379 = vmax.f32 %v363, 0.0
      %v380 = vmax.f32 %v364, 0.0
      %v381 = vmax.f32 %v365, 0.0
      %382 = vst.msk [vmem:[#allocation3] sm:$0xff] %vm167, %v366
      %383 = vst.msk [vmem:[#allocation3 + $0x8] sm:$0xff] %vm167, %v367
      %384 = vst.msk [vmem:[#allocation3 + $0x10] sm:$0xff] %vm167, %v368
      %385 = vst.msk [vmem:[#allocation3 + $0x18] sm:$0xff] %vm167, %v369
      %386 = vst.msk [vmem:[#allocation3 + $0x20] sm:$0xff] %vm167, %v370
      %387 = vst.msk [vmem:[#allocation3 + $0x28] sm:$0xff] %vm167, %v371
      %388 = vst.msk [vmem:[#allocation3 + $0x30] sm:$0xff] %vm167, %v372
      %389 = vst.msk [vmem:[#allocation3 + $0x38] sm:$0xff] %vm167, %v373
      %390 = vst.msk [vmem:[#allocation3 + $0x40] sm:$0xff] %vm167, %v374
      %391 = vst.msk [vmem:[#allocation3 + $0x48] sm:$0xff] %vm167, %v375
      %392 = vst.msk [vmem:[#allocation3 + $0x50] sm:$0xff] %vm167, %v376
      %393 = vst.msk [vmem:[#allocation3 + $0x58] sm:$0xff] %vm167, %v377
      %394 = vst.msk [vmem:[#allocation3 + $0x60] sm:$0xff] %vm167, %v378
      %395 = vst.msk [vmem:[#allocation3 + $0x68] sm:$0xff] %vm167, %v379
      %396 = vst.msk [vmem:[#allocation3 + $0x70] sm:$0xff] %vm167, %v380
      %397 = vst.msk [vmem:[#allocation3 + $0x78] sm:$0xff] %vm167, %v381
      %v398 = vld [vmem:[#allocation8] sm:$0xff]
      %v399 = vld [vmem:[#allocation8 + $0x8] sm:$0xff]
      %v400 = vld [vmem:[#allocation8 + $0x10] sm:$0xff]
      %v401 = vld [vmem:[#allocation8 + $0x18] sm:$0xff]
      %v402 = vld [vmem:[#allocation8 + $0x20] sm:$0xff]
      %v403 = vld [vmem:[#allocation8 + $0x28] sm:$0xff]
      %v404 = vld [vmem:[#allocation8 + $0x30] sm:$0xff]
      %v405 = vld [vmem:[#allocation8 + $0x38] sm:$0xff]
      %v406 = vld [vmem:[%s6] sm:$0x1]
      %v407 = vld [vmem:[#allocation3] sm:$0xff]
      %v408 = vld [vmem:[#allocation3 + $0x8] sm:$0xff]
      %v409 = vld [vmem:[#allocation3 + $0x10] sm:$0xff]
      %v410 = vld [vmem:[#allocation3 + $0x18] sm:$0xff]
      %v411 = vld [vmem:[#allocation3 + $0x20] sm:$0xff]
      %v412 = vld [vmem:[#allocation3 + $0x28] sm:$0xff]
      %v413 = vld [vmem:[#allocation3 + $0x30] sm:$0xff]
      %v414 = vld [vmem:[#allocation3 + $0x38] sm:$0xff]
      %v415 = vld [vmem:[#allocation3 + $0x40] sm:$0xff]
      %v416 = vld [vmem:[#allocation3 + $0x48] sm:$0xff]
      %v417 = vld [vmem:[#allocation3 + $0x50] sm:$0xff]
      %v418 = vld [vmem:[#allocation3 + $0x58] sm:$0xff]
      %v419 = vld [vmem:[#allocation3 + $0x60] sm:$0xff]
      %v420 = vld [vmem:[#allocation3 + $0x68] sm:$0xff]
      %v421 = vld [vmem:[#allocation3 + $0x70] sm:$0xff]
      %v422 = vld [vmem:[#allocation3 + $0x78] sm:$0xff]
      %v424 = vperm.slane %v406, 0
      %v427 = vsel %vm167, %v407, 0
      %v430 = vsel %vm167, %v408, 0
      %v433 = vsel %vm167, %v409, 0
      %v436 = vsel %vm167, %v410, 0
      %v439 = vsel %vm167, %v411, 0
      %v442 = vsel %vm167, %v412, 0
      %v445 = vsel %vm167, %v413, 0
      %v448 = vsel %vm167, %v414, 0
      %v451 = vsel %vm167, %v415, 0
      %v454 = vsel %vm167, %v416, 0
      %v457 = vsel %vm167, %v417, 0
      %v460 = vsel %vm167, %v418, 0
      %v463 = vsel %vm167, %v419, 0
      %v466 = vsel %vm167, %v420, 0
      %v469 = vsel %vm167, %v421, 0
      %v472 = vsel %vm167, %v422, 0
      %474 = vmatpush.msra.mxu0 0.0
      %475 = vmatpush.msra.mxu0 0.0
      %476 = vmatpush.msra.mxu0 0.0
      %477 = vmatpush.msra.mxu0 0.0
      %478 = vmatpush.msra.mxu0 0.0
      %479 = vmatpush.msra.mxu0 0.0
      %480 = vmatpush.msra.mxu0 0.0
      %481 = vmatpush.msra.mxu0 0.0
      %482 = vmatpush.msra.mxu0 %v405
      %483 = vmatpush.msra.mxu0 %v404
      %484 = vmatpush.msra.mxu0 %v403
      %485 = vmatpush.msra.mxu0 %v402
      %486 = vmatpush.msra.mxu0 %v401
      %487 = vmatpush.msra.mxu0 %v400
      %488 = vmatpush.msra.mxu0 %v399
      %489 = vmatpush.msra.mxu0 %v398
      %490 = vmatmul.f32.gmra.mxu0 %v427
      %v491 = vpop.f32.mrf.mxu0
      %v492 = vadd.f32 %v424, %v491
      %493 = vmatmul.f32.gmra.mxu0 %v430
      %v494 = vpop.f32.mrf.mxu0
      %v495 = vadd.f32 %v424, %v494
      %496 = vmatmul.f32.gmra.mxu0 %v433
      %v497 = vpop.f32.mrf.mxu0
      %v498 = vadd.f32 %v424, %v497
      %499 = vmatmul.f32.gmra.mxu0 %v436
      %v500 = vpop.f32.mrf.mxu0
      %v501 = vadd.f32 %v424, %v500
      %502 = vmatmul.f32.gmra.mxu0 %v439
      %v503 = vpop.f32.mrf.mxu0
      %v504 = vadd.f32 %v424, %v503
      %505 = vmatmul.f32.gmra.mxu0 %v442
      %v506 = vpop.f32.mrf.mxu0
      %v507 = vadd.f32 %v424, %v506
      %508 = vmatmul.f32.gmra.mxu0 %v445
      %v509 = vpop.f32.mrf.mxu0
      %v510 = vadd.f32 %v424, %v509
      %511 = vmatmul.f32.gmra.mxu0 %v448
      %v512 = vpop.f32.mrf.mxu0
      %v513 = vadd.f32 %v424, %v512
      %514 = vmatmul.f32.gmra.mxu0 %v451
      %v515 = vpop.f32.mrf.mxu0
      %v516 = vadd.f32 %v424, %v515
      %517 = vmatmul.f32.gmra.mxu0 %v454
      %v518 = vpop.f32.mrf.mxu0
      %v519 = vadd.f32 %v424, %v518
      %520 = vmatmul.f32.gmra.mxu0 %v457
      %v521 = vpop.f32.mrf.mxu0
      %v522 = vadd.f32 %v424, %v521
      %523 = vmatmul.f32.gmra.mxu0 %v460
      %v524 = vpop.f32.mrf.mxu0
      %v525 = vadd.f32 %v424, %v524
      %526 = vmatmul.f32.gmra.mxu0 %v463
      %v527 = vpop.f32.mrf.mxu0
      %v528 = vadd.f32 %v424, %v527
      %529 = vmatmul.f32.gmra.mxu0 %v466
      %v530 = vpop.f32.mrf.mxu0
      %v531 = vadd.f32 %v424, %v530
      %532 = vmatmul.f32.gmra.mxu0 %v469
      %v533 = vpop.f32.mrf.mxu0
      %v534 = vadd.f32 %v424, %v533
      %535 = vmatmul.f32.gmra.mxu0 %v472
      %v536 = vpop.f32.mrf.mxu0
      %v537 = vadd.f32 %v424, %v536
      %538 = vdwg.mxu0
      %539 = vst.msk [vmem:[#allocation4] sm:$0xff] %vm167, %v492
      %540 = vst.msk [vmem:[#allocation4 + $0x8] sm:$0xff] %vm167, %v495
      %541 = vst.msk [vmem:[#allocation4 + $0x10] sm:$0xff] %vm167, %v498
      %542 = vst.msk [vmem:[#allocation4 + $0x18] sm:$0xff] %vm167, %v501
      %543 = vst.msk [vmem:[#allocation4 + $0x20] sm:$0xff] %vm167, %v504
      %544 = vst.msk [vmem:[#allocation4 + $0x28] sm:$0xff] %vm167, %v507
      %545 = vst.msk [vmem:[#allocation4 + $0x30] sm:$0xff] %vm167, %v510
      %546 = vst.msk [vmem:[#allocation4 + $0x38] sm:$0xff] %vm167, %v513
      %547 = vst.msk [vmem:[#allocation4 + $0x40] sm:$0xff] %vm167, %v516
      %548 = vst.msk [vmem:[#allocation4 + $0x48] sm:$0xff] %vm167, %v519
      %549 = vst.msk [vmem:[#allocation4 + $0x50] sm:$0xff] %vm167, %v522
      %550 = vst.msk [vmem:[#allocation4 + $0x58] sm:$0xff] %vm167, %v525
      %551 = vst.msk [vmem:[#allocation4 + $0x60] sm:$0xff] %vm167, %v528
      %552 = vst.msk [vmem:[#allocation4 + $0x68] sm:$0xff] %vm167, %v531
      %553 = vst.msk [vmem:[#allocation4 + $0x70] sm:$0xff] %vm167, %v534
      %554 = vst.msk [vmem:[#allocation4 + $0x78] sm:$0xff] %vm167, %v537
      %v555 = vlaneseq
      %v556 = vshrl.u32 %v555, 7
      %v557 = vadd.s32 %v556, 8
      %v558 = vadd.s32 %v556, 16
      %v559 = vadd.s32 %v556, 24
      %v560 = vadd.s32 %v556, 32
      %v561 = vadd.s32 %v556, 40
      %v562 = vadd.s32 %v556, 48
      %v563 = vadd.s32 %v556, 56
      %v564 = vadd.s32 %v556, 64
      %v565 = vadd.s32 %v556, 72
      %v566 = vadd.s32 %v556, 80
      %v567 = vadd.s32 %v556, 88
      %v568 = vadd.s32 %v556, 96
      %v569 = vadd.s32 %v556, 104
      %v570 = vadd.s32 %v556, 112
      %v571 = vadd.s32 %v556, 120
      %vm572 = vcmp.lt.s32.totalorder %v556, 8
      %vm573 = vcmp.lt.s32.totalorder %v557, 8
      %vm574 = vcmp.lt.s32.totalorder %v558, 8
      %vm575 = vcmp.lt.s32.totalorder %v559, 8
      %vm576 = vcmp.lt.s32.totalorder %v560, 8
      %vm577 = vcmp.lt.s32.totalorder %v561, 8
      %vm578 = vcmp.lt.s32.totalorder %v562, 8
      %vm579 = vcmp.lt.s32.totalorder %v563, 8
      %vm580 = vcmp.lt.s32.totalorder %v564, 8
      %vm581 = vcmp.lt.s32.totalorder %v565, 8
      %vm582 = vcmp.lt.s32.totalorder %v566, 8
      %vm583 = vcmp.lt.s32.totalorder %v567, 8
      %vm584 = vcmp.lt.s32.totalorder %v568, 8
      %vm585 = vcmp.lt.s32.totalorder %v569, 8
      %vm586 = vcmp.lt.s32.totalorder %v570, 8
      %vm587 = vcmp.lt.s32.totalorder %v571, 8
      %v588 = vsel %vm572, 1, 0
      %v589 = vsel %vm573, 1, 0
      %v590 = vsel %vm574, 1, 0
      %v591 = vsel %vm575, 1, 0
      %v592 = vsel %vm576, 1, 0
      %v593 = vsel %vm577, 1, 0
      %v594 = vsel %vm578, 1, 0
      %v595 = vsel %vm579, 1, 0
      %v596 = vsel %vm580, 1, 0
      %v597 = vsel %vm581, 1, 0
      %v598 = vsel %vm582, 1, 0
      %v599 = vsel %vm583, 1, 0
      %v600 = vsel %vm584, 1, 0
      %v601 = vsel %vm585, 1, 0
      %v602 = vsel %vm586, 1, 0
      %v603 = vsel %vm587, 1, 0
      %v604 = vcvt.s32.f32 %v588
      %v605 = vcvt.s32.f32 %v589
      %v606 = vcvt.s32.f32 %v590
      %v607 = vcvt.s32.f32 %v591
      %v608 = vcvt.s32.f32 %v592
      %v609 = vcvt.s32.f32 %v593
      %v610 = vcvt.s32.f32 %v594
      %v611 = vcvt.s32.f32 %v595
      %v612 = vcvt.s32.f32 %v596
      %v613 = vcvt.s32.f32 %v597
      %v614 = vcvt.s32.f32 %v598
      %v615 = vcvt.s32.f32 %v599
      %v616 = vcvt.s32.f32 %v600
      %v617 = vcvt.s32.f32 %v601
      %v618 = vcvt.s32.f32 %v602
      %v619 = vcvt.s32.f32 %v603
      %v620 = vmul.f32 %v492, %v604
      %v621 = vmul.f32 %v495, %v605
      %v622 = vmul.f32 %v498, %v606
      %v623 = vmul.f32 %v501, %v607
      %v624 = vmul.f32 %v504, %v608
      %v625 = vmul.f32 %v507, %v609
      %v626 = vmul.f32 %v510, %v610
      %v627 = vmul.f32 %v513, %v611
      %v628 = vmul.f32 %v516, %v612
      %v629 = vmul.f32 %v519, %v613
      %v630 = vmul.f32 %v522, %v614
      %v631 = vmul.f32 %v525, %v615
      %v632 = vmul.f32 %v528, %v616
      %v633 = vmul.f32 %v531, %v617
      %v634 = vmul.f32 %v534, %v618
      %v635 = vmul.f32 %v537, %v619
      %v636 = vsel %vm167, %v620, 0.0
      %v637 = vsel %vm167, %v621, 0.0
      %v638 = vadd.f32 %v636, %v637
      %v639 = vsel %vm167, %v622, 0.0
      %v640 = vadd.f32 %v638, %v639
      %v641 = vsel %vm167, %v623, 0.0
      %v642 = vadd.f32 %v640, %v641
      %v643 = vsel %vm167, %v624, 0.0
      %v644 = vadd.f32 %v642, %v643
      %v645 = vsel %vm167, %v625, 0.0
      %v646 = vadd.f32 %v644, %v645
      %v647 = vsel %vm167, %v626, 0.0
      %v648 = vadd.f32 %v646, %v647
      %v649 = vsel %vm167, %v627, 0.0
      %v650 = vadd.f32 %v648, %v649
      %v651 = vsel %vm167, %v628, 0.0
      %v652 = vadd.f32 %v650, %v651
      %v653 = vsel %vm167, %v629, 0.0
      %v654 = vadd.f32 %v652, %v653
      %v655 = vsel %vm167, %v630, 0.0
      %v656 = vadd.f32 %v654, %v655
      %v657 = vsel %vm167, %v631, 0.0
      %v658 = vadd.f32 %v656, %v657
      %v659 = vsel %vm167, %v632, 0.0
      %v660 = vadd.f32 %v658, %v659
      %v661 = vsel %vm167, %v633, 0.0
      %v662 = vadd.f32 %v660, %v661
      %v663 = vsel %vm167, %v634, 0.0
      %v664 = vadd.f32 %v662, %v663
      %v665 = vsel %vm167, %v635, 0.0
      %v666 = vadd.f32 %v664, %v665
      %v667 = vrot.slane %v666, 4
      %v668 = vadd.f32 %v666, %v667
      %v669 = vrot.slane %v668, 2
      %v670 = vadd.f32 %v668, %v669
      %v671 = vrot.slane %v670, 1
      %v672 = vadd.f32 %v670, %v671
      %v673 = vadd.f32 %v672, 0.0
      %v674 = vmul.f32 %v620, %v492
      %v675 = vmul.f32 %v621, %v495
      %v676 = vmul.f32 %v622, %v498
      %v677 = vmul.f32 %v623, %v501
      %v678 = vmul.f32 %v624, %v504
      %v679 = vmul.f32 %v625, %v507
      %v680 = vmul.f32 %v626, %v510
      %v681 = vmul.f32 %v627, %v513
      %v682 = vmul.f32 %v628, %v516
      %v683 = vmul.f32 %v629, %v519
      %v684 = vmul.f32 %v630, %v522
      %v685 = vmul.f32 %v631, %v525
      %v686 = vmul.f32 %v632, %v528
      %v687 = vmul.f32 %v633, %v531
      %v688 = vmul.f32 %v634, %v534
      %v689 = vmul.f32 %v635, %v537
      %v690 = vsel %vm167, %v674, 0.0
      %v691 = vsel %vm167, %v675, 0.0
      %v692 = vadd.f32 %v690, %v691
      %v693 = vsel %vm167, %v676, 0.0
      %v694 = vadd.f32 %v692, %v693
      %v695 = vsel %vm167, %v677, 0.0
      %v696 = vadd.f32 %v694, %v695
      %v697 = vsel %vm167, %v678, 0.0
      %v698 = vadd.f32 %v696, %v697
      %v699 = vsel %vm167, %v679, 0.0
      %v700 = vadd.f32 %v698, %v699
      %v701 = vsel %vm167, %v680, 0.0
      %v702 = vadd.f32 %v700, %v701
      %v703 = vsel %vm167, %v681, 0.0
      %v704 = vadd.f32 %v702, %v703
      %v705 = vsel %vm167, %v682, 0.0
      %v706 = vadd.f32 %v704, %v705
      %v707 = vsel %vm167, %v683, 0.0
      %v708 = vadd.f32 %v706, %v707
      %v709 = vsel %vm167, %v684, 0.0
      %v710 = vadd.f32 %v708, %v709
      %v711 = vsel %vm167, %v685, 0.0
      %v712 = vadd.f32 %v710, %v711
      %v713 = vsel %vm167, %v686, 0.0
      %v714 = vadd.f32 %v712, %v713
      %v715 = vsel %vm167, %v687, 0.0
      %v716 = vadd.f32 %v714, %v715
      %v717 = vsel %vm167, %v688, 0.0
      %v718 = vadd.f32 %v716, %v717
      %v719 = vsel %vm167, %v689, 0.0
      %v720 = vadd.f32 %v718, %v719
      %v721 = vrot.slane %v720, 4
      %v722 = vadd.f32 %v720, %v721
      %v723 = vrot.slane %v722, 2
      %v724 = vadd.f32 %v722, %v723
      %v725 = vrot.slane %v724, 1
      %v726 = vadd.f32 %v724, %v725
      %v727 = vadd.f32 %v726, 0.0
      %v728 = vld [vmem:[%s7] sm:$0x1]
      %v729 = vld [vmem:[%s8] sm:$0x1]
      %v730 = vmul.f32 %v673, 0.125
      %v731 = vmul.f32 %v727, 0.125
      %v732 = vmul.f32 %v730, %v730
      %v733 = vsub.f32 %v731, %v732
      %v734 = vadd.f32 %v733, 1e-05
      %v735 = vrsqrt.pop %v734
      %v736 = vmul.f32 %v735, %v734
      %v737 = vmul.f32 %v736, %v735
      %v738 = vmul.f32 0.5, %v737
      %v739 = vsub.f32 1.5, %v738
      %v740 = vmul.f32 %v735, %v739
      %vm741 = vweird.f32 %v734
      %vm742 = vweird.f32 %v735
      %vm743 = vmor %vm741, %vm742
      %v744 = vsel %vm743, %v735, %v740
      %v745 = vmul.f32 %v728, %v744
      %v746 = vmul.f32 %v730, %v745
      %v747 = vsub.f32 %v729, %v746
      %v748 = vld [vmem:[#allocation4] sm:$0xff]
      %v749 = vld [vmem:[#allocation4 + $0x8] sm:$0xff]
      %v750 = vld [vmem:[#allocation4 + $0x10] sm:$0xff]
      %v751 = vld [vmem:[#allocation4 + $0x18] sm:$0xff]
      %v752 = vld [vmem:[#allocation4 + $0x20] sm:$0xff]
      %v753 = vld [vmem:[#allocation4 + $0x28] sm:$0xff]
      %v754 = vld [vmem:[#allocation4 + $0x30] sm:$0xff]
      %v755 = vld [vmem:[#allocation4 + $0x38] sm:$0xff]
      %v756 = vld [vmem:[#allocation4 + $0x40] sm:$0xff]
      %v757 = vld [vmem:[#allocation4 + $0x48] sm:$0xff]
      %v758 = vld [vmem:[#allocation4 + $0x50] sm:$0xff]
      %v759 = vld [vmem:[#allocation4 + $0x58] sm:$0xff]
      %v760 = vld [vmem:[#allocation4 + $0x60] sm:$0xff]
      %v761 = vld [vmem:[#allocation4 + $0x68] sm:$0xff]
      %v762 = vld [vmem:[#allocation4 + $0x70] sm:$0xff]
      %v763 = vld [vmem:[#allocation4 + $0x78] sm:$0xff]
      %v765 = vperm.slane %v745, 0
      %v767 = vmul.f32 %v748, %v765
      %v768 = vmul.f32 %v749, %v765
      %v769 = vmul.f32 %v750, %v765
      %v770 = vmul.f32 %v751, %v765
      %v771 = vmul.f32 %v752, %v765
      %v772 = vmul.f32 %v753, %v765
      %v773 = vmul.f32 %v754, %v765
      %v774 = vmul.f32 %v755, %v765
      %v775 = vmul.f32 %v756, %v765
      %v776 = vmul.f32 %v757, %v765
      %v777 = vmul.f32 %v758, %v765
      %v778 = vmul.f32 %v759, %v765
      %v779 = vmul.f32 %v760, %v765
      %v780 = vmul.f32 %v761, %v765
      %v781 = vmul.f32 %v762, %v765
      %v782 = vmul.f32 %v763, %v765
      %v784 = vperm.slane %v747, 0
      %v786 = vadd.f32 %v767, %v784
      %v787 = vadd.f32 %v768, %v784
      %v788 = vadd.f32 %v769, %v784
      %v789 = vadd.f32 %v770, %v784
      %v790 = vadd.f32 %v771, %v784
      %v791 = vadd.f32 %v772, %v784
      %v792 = vadd.f32 %v773, %v784
      %v793 = vadd.f32 %v774, %v784
      %v794 = vadd.f32 %v775, %v784
      %v795 = vadd.f32 %v776, %v784
      %v796 = vadd.f32 %v777, %v784
      %v797 = vadd.f32 %v778, %v784
      %v798 = vadd.f32 %v779, %v784
      %v799 = vadd.f32 %v780, %v784
      %v800 = vadd.f32 %v781, %v784
      %v801 = vadd.f32 %v782, %v784
      %v802 = vmax.f32 %v786, 0.0
      %v803 = vmax.f32 %v787, 0.0
      %v804 = vmax.f32 %v788, 0.0
      %v805 = vmax.f32 %v789, 0.0
      %v806 = vmax.f32 %v790, 0.0
      %v807 = vmax.f32 %v791, 0.0
      %v808 = vmax.f32 %v792, 0.0
      %v809 = vmax.f32 %v793, 0.0
      %v810 = vmax.f32 %v794, 0.0
      %v811 = vmax.f32 %v795, 0.0
      %v812 = vmax.f32 %v796, 0.0
      %v813 = vmax.f32 %v797, 0.0
      %v814 = vmax.f32 %v798, 0.0
      %v815 = vmax.f32 %v799, 0.0
      %v816 = vmax.f32 %v800, 0.0
      %v817 = vmax.f32 %v801, 0.0
      %818 = vst.msk [vmem:[#allocation4] sm:$0xff] %vm167, %v802
      %819 = vst.msk [vmem:[#allocation4 + $0x8] sm:$0xff] %vm167, %v803
      %820 = vst.msk [vmem:[#allocation4 + $0x10] sm:$0xff] %vm167, %v804
      %821 = vst.msk [vmem:[#allocation4 + $0x18] sm:$0xff] %vm167, %v805
      %822 = vst.msk [vmem:[#allocation4 + $0x20] sm:$0xff] %vm167, %v806
      %823 = vst.msk [vmem:[#allocation4 + $0x28] sm:$0xff] %vm167, %v807
      %824 = vst.msk [vmem:[#allocation4 + $0x30] sm:$0xff] %vm167, %v808
      %825 = vst.msk [vmem:[#allocation4 + $0x38] sm:$0xff] %vm167, %v809
      %826 = vst.msk [vmem:[#allocation4 + $0x40] sm:$0xff] %vm167, %v810
      %827 = vst.msk [vmem:[#allocation4 + $0x48] sm:$0xff] %vm167, %v811
      %828 = vst.msk [vmem:[#allocation4 + $0x50] sm:$0xff] %vm167, %v812
      %829 = vst.msk [vmem:[#allocation4 + $0x58] sm:$0xff] %vm167, %v813
      %830 = vst.msk [vmem:[#allocation4 + $0x60] sm:$0xff] %vm167, %v814
      %831 = vst.msk [vmem:[#allocation4 + $0x68] sm:$0xff] %vm167, %v815
      %832 = vst.msk [vmem:[#allocation4 + $0x70] sm:$0xff] %vm167, %v816
      %833 = vst.msk [vmem:[#allocation4 + $0x78] sm:$0xff] %vm167, %v817
      %s834 = scalar_lea.vmem [#allocation8], 64
      %v835 = vld [vmem:[%s834] sm:$0xff]
      %v836 = vld [vmem:[%s834 + $0x8] sm:$0xff]
      %v837 = vld [vmem:[%s834 + $0x10] sm:$0xff]
      %v838 = vld [vmem:[%s834 + $0x18] sm:$0xff]
      %v839 = vld [vmem:[%s834 + $0x20] sm:$0xff]
      %v840 = vld [vmem:[%s834 + $0x28] sm:$0xff]
      %v841 = vld [vmem:[%s834 + $0x30] sm:$0xff]
      %v842 = vld [vmem:[%s834 + $0x38] sm:$0xff]
      %s843 = scalar_lea.vmem %s6, 1
      %v844 = vld [vmem:[%s843] sm:$0x1]
      %v845 = vld [vmem:[#allocation4] sm:$0xff]
      %v846 = vld [vmem:[#allocation4 + $0x8] sm:$0xff]
      %v847 = vld [vmem:[#allocation4 + $0x10] sm:$0xff]
      %v848 = vld [vmem:[#allocation4 + $0x18] sm:$0xff]
      %v849 = vld [vmem:[#allocation4 + $0x20] sm:$0xff]
      %v850 = vld [vmem:[#allocation4 + $0x28] sm:$0xff]
      %v851 = vld [vmem:[#allocation4 + $0x30] sm:$0xff]
      %v852 = vld [vmem:[#allocation4 + $0x38] sm:$0xff]
      %v853 = vld [vmem:[#allocation4 + $0x40] sm:$0xff]
      %v854 = vld [vmem:[#allocation4 + $0x48] sm:$0xff]
      %v855 = vld [vmem:[#allocation4 + $0x50] sm:$0xff]
      %v856 = vld [vmem:[#allocation4 + $0x58] sm:$0xff]
      %v857 = vld [vmem:[#allocation4 + $0x60] sm:$0xff]
      %v858 = vld [vmem:[#allocation4 + $0x68] sm:$0xff]
      %v859 = vld [vmem:[#allocation4 + $0x70] sm:$0xff]
      %v860 = vld [vmem:[#allocation4 + $0x78] sm:$0xff]
      %v862 = vperm.slane %v844, 0
      %v865 = vsel %vm167, %v845, 0
      %v868 = vsel %vm167, %v846, 0
      %v871 = vsel %vm167, %v847, 0
      %v874 = vsel %vm167, %v848, 0
      %v877 = vsel %vm167, %v849, 0
      %v880 = vsel %vm167, %v850, 0
      %v883 = vsel %vm167, %v851, 0
      %v886 = vsel %vm167, %v852, 0
      %v889 = vsel %vm167, %v853, 0
      %v892 = vsel %vm167, %v854, 0
      %v895 = vsel %vm167, %v855, 0
      %v898 = vsel %vm167, %v856, 0
      %v901 = vsel %vm167, %v857, 0
      %v904 = vsel %vm167, %v858, 0
      %v907 = vsel %vm167, %v859, 0
      %v910 = vsel %vm167, %v860, 0
      %912 = vmatpush.msra.mxu0 0.0
      %913 = vmatpush.msra.mxu0 0.0
      %914 = vmatpush.msra.mxu0 0.0
      %915 = vmatpush.msra.mxu0 0.0
      %916 = vmatpush.msra.mxu0 0.0
      %917 = vmatpush.msra.mxu0 0.0
      %918 = vmatpush.msra.mxu0 0.0
      %919 = vmatpush.msra.mxu0 0.0
      %920 = vmatpush.msra.mxu0 %v842
      %921 = vmatpush.msra.mxu0 %v841
      %922 = vmatpush.msra.mxu0 %v840
      %923 = vmatpush.msra.mxu0 %v839
      %924 = vmatpush.msra.mxu0 %v838
      %925 = vmatpush.msra.mxu0 %v837
      %926 = vmatpush.msra.mxu0 %v836
      %927 = vmatpush.msra.mxu0 %v835
      %928 = vmatmul.f32.gmra.mxu0 %v865
      %v929 = vpop.f32.mrf.mxu0
      %v930 = vadd.f32 %v862, %v929
      %931 = vmatmul.f32.gmra.mxu0 %v868
      %v932 = vpop.f32.mrf.mxu0
      %v933 = vadd.f32 %v862, %v932
      %934 = vmatmul.f32.gmra.mxu0 %v871
      %v935 = vpop.f32.mrf.mxu0
      %v936 = vadd.f32 %v862, %v935
      %937 = vmatmul.f32.gmra.mxu0 %v874
      %v938 = vpop.f32.mrf.mxu0
      %v939 = vadd.f32 %v862, %v938
      %940 = vmatmul.f32.gmra.mxu0 %v877
      %v941 = vpop.f32.mrf.mxu0
      %v942 = vadd.f32 %v862, %v941
      %943 = vmatmul.f32.gmra.mxu0 %v880
      %v944 = vpop.f32.mrf.mxu0
      %v945 = vadd.f32 %v862, %v944
      %946 = vmatmul.f32.gmra.mxu0 %v883
      %v947 = vpop.f32.mrf.mxu0
      %v948 = vadd.f32 %v862, %v947
      %949 = vmatmul.f32.gmra.mxu0 %v886
      %v950 = vpop.f32.mrf.mxu0
      %v951 = vadd.f32 %v862, %v950
      %952 = vmatmul.f32.gmra.mxu0 %v889
      %v953 = vpop.f32.mrf.mxu0
      %v954 = vadd.f32 %v862, %v953
      %955 = vmatmul.f32.gmra.mxu0 %v892
      %v956 = vpop.f32.mrf.mxu0
      %v957 = vadd.f32 %v862, %v956
      %958 = vmatmul.f32.gmra.mxu0 %v895
      %v959 = vpop.f32.mrf.mxu0
      %v960 = vadd.f32 %v862, %v959
      %961 = vmatmul.f32.gmra.mxu0 %v898
      %v962 = vpop.f32.mrf.mxu0
      %v963 = vadd.f32 %v862, %v962
      %964 = vmatmul.f32.gmra.mxu0 %v901
      %v965 = vpop.f32.mrf.mxu0
      %v966 = vadd.f32 %v862, %v965
      %967 = vmatmul.f32.gmra.mxu0 %v904
      %v968 = vpop.f32.mrf.mxu0
      %v969 = vadd.f32 %v862, %v968
      %970 = vmatmul.f32.gmra.mxu0 %v907
      %v971 = vpop.f32.mrf.mxu0
      %v972 = vadd.f32 %v862, %v971
      %973 = vmatmul.f32.gmra.mxu0 %v910
      %v974 = vpop.f32.mrf.mxu0
      %v975 = vadd.f32 %v862, %v974
      %976 = vdwg.mxu0
      %977 = vst.msk [vmem:[#allocation4] sm:$0xff] %vm167, %v930
      %978 = vst.msk [vmem:[#allocation4 + $0x8] sm:$0xff] %vm167, %v933
      %979 = vst.msk [vmem:[#allocation4 + $0x10] sm:$0xff] %vm167, %v936
      %980 = vst.msk [vmem:[#allocation4 + $0x18] sm:$0xff] %vm167, %v939
      %981 = vst.msk [vmem:[#allocation4 + $0x20] sm:$0xff] %vm167, %v942
      %982 = vst.msk [vmem:[#allocation4 + $0x28] sm:$0xff] %vm167, %v945
      %983 = vst.msk [vmem:[#allocation4 + $0x30] sm:$0xff] %vm167, %v948
      %984 = vst.msk [vmem:[#allocation4 + $0x38] sm:$0xff] %vm167, %v951
      %985 = vst.msk [vmem:[#allocation4 + $0x40] sm:$0xff] %vm167, %v954
      %986 = vst.msk [vmem:[#allocation4 + $0x48] sm:$0xff] %vm167, %v957
      %987 = vst.msk [vmem:[#allocation4 + $0x50] sm:$0xff] %vm167, %v960
      %988 = vst.msk [vmem:[#allocation4 + $0x58] sm:$0xff] %vm167, %v963
      %989 = vst.msk [vmem:[#allocation4 + $0x60] sm:$0xff] %vm167, %v966
      %990 = vst.msk [vmem:[#allocation4 + $0x68] sm:$0xff] %vm167, %v969
      %991 = vst.msk [vmem:[#allocation4 + $0x70] sm:$0xff] %vm167, %v972
      %992 = vst.msk [vmem:[#allocation4 + $0x78] sm:$0xff] %vm167, %v975
      %v993 = vmul.f32 %v930, %v604
      %v994 = vmul.f32 %v933, %v605
      %v995 = vmul.f32 %v936, %v606
      %v996 = vmul.f32 %v939, %v607
      %v997 = vmul.f32 %v942, %v608
      %v998 = vmul.f32 %v945, %v609
      %v999 = vmul.f32 %v948, %v610
      %v1000 = vmul.f32 %v951, %v611
      %v1001 = vmul.f32 %v954, %v612
      %v1002 = vmul.f32 %v957, %v613
      %v1003 = vmul.f32 %v960, %v614
      %v1004 = vmul.f32 %v963, %v615
      %v1005 = vmul.f32 %v966, %v616
      %v1006 = vmul.f32 %v969, %v617
      %v1007 = vmul.f32 %v972, %v618
      %v1008 = vmul.f32 %v975, %v619
      %v1009 = vsel %vm167, %v993, 0.0
      %v1010 = vsel %vm167, %v994, 0.0
      %v1011 = vadd.f32 %v1009, %v1010
      %v1012 = vsel %vm167, %v995, 0.0
      %v1013 = vadd.f32 %v1011, %v1012
      %v1014 = vsel %vm167, %v996, 0.0
      %v1015 = vadd.f32 %v1013, %v1014
      %v1016 = vsel %vm167, %v997, 0.0
      %v1017 = vadd.f32 %v1015, %v1016
      %v1018 = vsel %vm167, %v998, 0.0
      %v1019 = vadd.f32 %v1017, %v1018
      %v1020 = vsel %vm167, %v999, 0.0
      %v1021 = vadd.f32 %v1019, %v1020
      %v1022 = vsel %vm167, %v1000, 0.0
      %v1023 = vadd.f32 %v1021, %v1022
      %v1024 = vsel %vm167, %v1001, 0.0
      %v1025 = vadd.f32 %v1023, %v1024
      %v1026 = vsel %vm167, %v1002, 0.0
      %v1027 = vadd.f32 %v1025, %v1026
      %v1028 = vsel %vm167, %v1003, 0.0
      %v1029 = vadd.f32 %v1027, %v1028
      %v1030 = vsel %vm167, %v1004, 0.0
      %v1031 = vadd.f32 %v1029, %v1030
      %v1032 = vsel %vm167, %v1005, 0.0
      %v1033 = vadd.f32 %v1031, %v1032
      %v1034 = vsel %vm167, %v1006, 0.0
      %v1035 = vadd.f32 %v1033, %v1034
      %v1036 = vsel %vm167, %v1007, 0.0
      %v1037 = vadd.f32 %v1035, %v1036
      %v1038 = vsel %vm167, %v1008, 0.0
      %v1039 = vadd.f32 %v1037, %v1038
      %v1040 = vrot.slane %v1039, 4
      %v1041 = vadd.f32 %v1039, %v1040
      %v1042 = vrot.slane %v1041, 2
      %v1043 = vadd.f32 %v1041, %v1042
      %v1044 = vrot.slane %v1043, 1
      %v1045 = vadd.f32 %v1043, %v1044
      %v1046 = vadd.f32 %v1045, 0.0
      %v1047 = vmul.f32 %v993, %v930
      %v1048 = vmul.f32 %v994, %v933
      %v1049 = vmul.f32 %v995, %v936
      %v1050 = vmul.f32 %v996, %v939
      %v1051 = vmul.f32 %v997, %v942
      %v1052 = vmul.f32 %v998, %v945
      %v1053 = vmul.f32 %v999, %v948
      %v1054 = vmul.f32 %v1000, %v951
      %v1055 = vmul.f32 %v1001, %v954
      %v1056 = vmul.f32 %v1002, %v957
      %v1057 = vmul.f32 %v1003, %v960
      %v1058 = vmul.f32 %v1004, %v963
      %v1059 = vmul.f32 %v1005, %v966
      %v1060 = vmul.f32 %v1006, %v969
      %v1061 = vmul.f32 %v1007, %v972
      %v1062 = vmul.f32 %v1008, %v975
      %v1063 = vsel %vm167, %v1047, 0.0
      %v1064 = vsel %vm167, %v1048, 0.0
      %v1065 = vadd.f32 %v1063, %v1064
      %v1066 = vsel %vm167, %v1049, 0.0
      %v1067 = vadd.f32 %v1065, %v1066
      %v1068 = vsel %vm167, %v1050, 0.0
      %v1069 = vadd.f32 %v1067, %v1068
      %v1070 = vsel %vm167, %v1051, 0.0
      %v1071 = vadd.f32 %v1069, %v1070
      %v1072 = vsel %vm167, %v1052, 0.0
      %v1073 = vadd.f32 %v1071, %v1072
      %v1074 = vsel %vm167, %v1053, 0.0
      %v1075 = vadd.f32 %v1073, %v1074
      %v1076 = vsel %vm167, %v1054, 0.0
      %v1077 = vadd.f32 %v1075, %v1076
      %v1078 = vsel %vm167, %v1055, 0.0
      %v1079 = vadd.f32 %v1077, %v1078
      %v1080 = vsel %vm167, %v1056, 0.0
      %v1081 = vadd.f32 %v1079, %v1080
      %v1082 = vsel %vm167, %v1057, 0.0
      %v1083 = vadd.f32 %v1081, %v1082
      %v1084 = vsel %vm167, %v1058, 0.0
      %v1085 = vadd.f32 %v1083, %v1084
      %v1086 = vsel %vm167, %v1059, 0.0
      %v1087 = vadd.f32 %v1085, %v1086
      %v1088 = vsel %vm167, %v1060, 0.0
      %v1089 = vadd.f32 %v1087, %v1088
      %v1090 = vsel %vm167, %v1061, 0.0
      %v1091 = vadd.f32 %v1089, %v1090
      %v1092 = vsel %vm167, %v1062, 0.0
      %v1093 = vadd.f32 %v1091, %v1092
      %v1094 = vrot.slane %v1093, 4
      %v1095 = vadd.f32 %v1093, %v1094
      %v1096 = vrot.slane %v1095, 2
      %v1097 = vadd.f32 %v1095, %v1096
      %v1098 = vrot.slane %v1097, 1
      %v1099 = vadd.f32 %v1097, %v1098
      %v1100 = vadd.f32 %v1099, 0.0
      %s1101 = scalar_lea.vmem %s7, 1
      %v1102 = vld [vmem:[%s1101] sm:$0x1]
      %s1103 = scalar_lea.vmem %s8, 1
      %v1104 = vld [vmem:[%s1103] sm:$0x1]
      %v1105 = vmul.f32 %v1046, 0.125
      %v1106 = vmul.f32 %v1100, 0.125
      %v1107 = vmul.f32 %v1105, %v1105
      %v1108 = vsub.f32 %v1106, %v1107
      %v1109 = vadd.f32 %v1108, 1e-05
      %v1110 = vrsqrt.pop %v1109
      %v1111 = vmul.f32 %v1110, %v1109
      %v1112 = vmul.f32 %v1111, %v1110
      %v1113 = vmul.f32 0.5, %v1112
      %v1114 = vsub.f32 1.5, %v1113
      %v1115 = vmul.f32 %v1110, %v1114
      %vm1116 = vweird.f32 %v1109
      %vm1117 = vweird.f32 %v1110
      %vm1118 = vmor %vm1116, %vm1117
      %v1119 = vsel %vm1118, %v1110, %v1115
      %v1120 = vmul.f32 %v1102, %v1119
      %v1121 = vmul.f32 %v1105, %v1120
      %v1122 = vsub.f32 %v1104, %v1121
      %v1123 = vld [vmem:[#allocation4] sm:$0xff]
      %v1124 = vld [vmem:[#allocation4 + $0x8] sm:$0xff]
      %v1125 = vld [vmem:[#allocation4 + $0x10] sm:$0xff]
      %v1126 = vld [vmem:[#allocation4 + $0x18] sm:$0xff]
      %v1127 = vld [vmem:[#allocation4 + $0x20] sm:$0xff]
      %v1128 = vld [vmem:[#allocation4 + $0x28] sm:$0xff]
      %v1129 = vld [vmem:[#allocation4 + $0x30] sm:$0xff]
      %v1130 = vld [vmem:[#allocation4 + $0x38] sm:$0xff]
      %v1131 = vld [vmem:[#allocation4 + $0x40] sm:$0xff]
      %v1132 = vld [vmem:[#allocation4 + $0x48] sm:$0xff]
      %v1133 = vld [vmem:[#allocation4 + $0x50] sm:$0xff]
      %v1134 = vld [vmem:[#allocation4 + $0x58] sm:$0xff]
      %v1135 = vld [vmem:[#allocation4 + $0x60] sm:$0xff]
      %v1136 = vld [vmem:[#allocation4 + $0x68] sm:$0xff]
      %v1137 = vld [vmem:[#allocation4 + $0x70] sm:$0xff]
      %v1138 = vld [vmem:[#allocation4 + $0x78] sm:$0xff]
      %v1140 = vperm.slane %v1120, 0
      %v1142 = vmul.f32 %v1123, %v1140
      %v1143 = vmul.f32 %v1124, %v1140
      %v1144 = vmul.f32 %v1125, %v1140
      %v1145 = vmul.f32 %v1126, %v1140
      %v1146 = vmul.f32 %v1127, %v1140
      %v1147 = vmul.f32 %v1128, %v1140
      %v1148 = vmul.f32 %v1129, %v1140
      %v1149 = vmul.f32 %v1130, %v1140
      %v1150 = vmul.f32 %v1131, %v1140
      %v1151 = vmul.f32 %v1132, %v1140
      %v1152 = vmul.f32 %v1133, %v1140
      %v1153 = vmul.f32 %v1134, %v1140
      %v1154 = vmul.f32 %v1135, %v1140
      %v1155 = vmul.f32 %v1136, %v1140
      %v1156 = vmul.f32 %v1137, %v1140
      %v1157 = vmul.f32 %v1138, %v1140
      %v1159 = vperm.slane %v1122, 0
      %v1161 = vadd.f32 %v1142, %v1159
      %v1162 = vadd.f32 %v1143, %v1159
      %v1163 = vadd.f32 %v1144, %v1159
      %v1164 = vadd.f32 %v1145, %v1159
      %v1165 = vadd.f32 %v1146, %v1159
      %v1166 = vadd.f32 %v1147, %v1159
      %v1167 = vadd.f32 %v1148, %v1159
      %v1168 = vadd.f32 %v1149, %v1159
      %v1169 = vadd.f32 %v1150, %v1159
      %v1170 = vadd.f32 %v1151, %v1159
      %v1171 = vadd.f32 %v1152, %v1159
      %v1172 = vadd.f32 %v1153, %v1159
      %v1173 = vadd.f32 %v1154, %v1159
      %v1174 = vadd.f32 %v1155, %v1159
      %v1175 = vadd.f32 %v1156, %v1159
      %v1176 = vadd.f32 %v1157, %v1159
      %v1177 = vld [vmem:[#allocation3] sm:$0xff]
      %v1178 = vld [vmem:[#allocation3 + $0x8] sm:$0xff]
      %v1179 = vld [vmem:[#allocation3 + $0x10] sm:$0xff]
      %v1180 = vld [vmem:[#allocation3 + $0x18] sm:$0xff]
      %v1181 = vld [vmem:[#allocation3 + $0x20] sm:$0xff]
      %v1182 = vld [vmem:[#allocation3 + $0x28] sm:$0xff]
      %v1183 = vld [vmem:[#allocation3 + $0x30] sm:$0xff]
      %v1184 = vld [vmem:[#allocation3 + $0x38] sm:$0xff]
      %v1185 = vld [vmem:[#allocation3 + $0x40] sm:$0xff]
      %v1186 = vld [vmem:[#allocation3 + $0x48] sm:$0xff]
      %v1187 = vld [vmem:[#allocation3 + $0x50] sm:$0xff]
      %v1188 = vld [vmem:[#allocation3 + $0x58] sm:$0xff]
      %v1189 = vld [vmem:[#allocation3 + $0x60] sm:$0xff]
      %v1190 = vld [vmem:[#allocation3 + $0x68] sm:$0xff]
      %v1191 = vld [vmem:[#allocation3 + $0x70] sm:$0xff]
      %v1192 = vld [vmem:[#allocation3 + $0x78] sm:$0xff]
      %v1193 = vadd.f32 %v1161, %v1177
      %v1194 = vadd.f32 %v1162, %v1178
      %v1195 = vadd.f32 %v1163, %v1179
      %v1196 = vadd.f32 %v1164, %v1180
      %v1197 = vadd.f32 %v1165, %v1181
      %v1198 = vadd.f32 %v1166, %v1182
      %v1199 = vadd.f32 %v1167, %v1183
      %v1200 = vadd.f32 %v1168, %v1184
      %v1201 = vadd.f32 %v1169, %v1185
      %v1202 = vadd.f32 %v1170, %v1186
      %v1203 = vadd.f32 %v1171, %v1187
      %v1204 = vadd.f32 %v1172, %v1188
      %v1205 = vadd.f32 %v1173, %v1189
      %v1206 = vadd.f32 %v1174, %v1190
      %v1207 = vadd.f32 %v1175, %v1191
      %v1208 = vadd.f32 %v1176, %v1192
      %v1209 = vmax.f32 %v1193, 0.0
      %v1210 = vmax.f32 %v1194, 0.0
      %v1211 = vmax.f32 %v1195, 0.0
      %v1212 = vmax.f32 %v1196, 0.0
      %v1213 = vmax.f32 %v1197, 0.0
      %v1214 = vmax.f32 %v1198, 0.0
      %v1215 = vmax.f32 %v1199, 0.0
      %v1216 = vmax.f32 %v1200, 0.0
      %v1217 = vmax.f32 %v1201, 0.0
      %v1218 = vmax.f32 %v1202, 0.0
      %v1219 = vmax.f32 %v1203, 0.0
      %v1220 = vmax.f32 %v1204, 0.0
      %v1221 = vmax.f32 %v1205, 0.0
      %v1222 = vmax.f32 %v1206, 0.0
      %v1223 = vmax.f32 %v1207, 0.0
      %v1224 = vmax.f32 %v1208, 0.0
      %1225 = vst.msk [vmem:[#allocation3] sm:$0xff] %vm167, %v1209
      %1226 = vst.msk [vmem:[#allocation3 + $0x8] sm:$0xff] %vm167, %v1210
      %1227 = vst.msk [vmem:[#allocation3 + $0x10] sm:$0xff] %vm167, %v1211
      %1228 = vst.msk [vmem:[#allocation3 + $0x18] sm:$0xff] %vm167, %v1212
      %1229 = vst.msk [vmem:[#allocation3 + $0x20] sm:$0xff] %vm167, %v1213
      %1230 = vst.msk [vmem:[#allocation3 + $0x28] sm:$0xff] %vm167, %v1214
      %1231 = vst.msk [vmem:[#allocation3 + $0x30] sm:$0xff] %vm167, %v1215
      %1232 = vst.msk [vmem:[#allocation3 + $0x38] sm:$0xff] %vm167, %v1216
      %1233 = vst.msk [vmem:[#allocation3 + $0x40] sm:$0xff] %vm167, %v1217
      %1234 = vst.msk [vmem:[#allocation3 + $0x48] sm:$0xff] %vm167, %v1218
      %1235 = vst.msk [vmem:[#allocation3 + $0x50] sm:$0xff] %vm167, %v1219
      %1236 = vst.msk [vmem:[#allocation3 + $0x58] sm:$0xff] %vm167, %v1220
      %1237 = vst.msk [vmem:[#allocation3 + $0x60] sm:$0xff] %vm167, %v1221
      %1238 = vst.msk [vmem:[#allocation3 + $0x68] sm:$0xff] %vm167, %v1222
      %1239 = vst.msk [vmem:[#allocation3 + $0x70] sm:$0xff] %vm167, %v1223
      %1240 = vst.msk [vmem:[#allocation3 + $0x78] sm:$0xff] %vm167, %v1224
      %s1241 = scalar_lea.vmem [#allocation8], 128
      %v1242 = vld [vmem:[%s1241] sm:$0xff]
      %v1243 = vld [vmem:[%s1241 + $0x8] sm:$0xff]
      %v1244 = vld [vmem:[%s1241 + $0x10] sm:$0xff]
      %v1245 = vld [vmem:[%s1241 + $0x18] sm:$0xff]
      %v1246 = vld [vmem:[%s1241 + $0x20] sm:$0xff]
      %v1247 = vld [vmem:[%s1241 + $0x28] sm:$0xff]
      %v1248 = vld [vmem:[%s1241 + $0x30] sm:$0xff]
      %v1249 = vld [vmem:[%s1241 + $0x38] sm:$0xff]
      %s1250 = scalar_lea.vmem %s6, 2
      %v1251 = vld [vmem:[%s1250] sm:$0x1]
      %v1252 = vld [vmem:[#allocation3] sm:$0xff]
      %v1253 = vld [vmem:[#allocation3 + $0x8] sm:$0xff]
      %v1254 = vld [vmem:[#allocation3 + $0x10] sm:$0xff]
      %v1255 = vld [vmem:[#allocation3 + $0x18] sm:$0xff]
      %v1256 = vld [vmem:[#allocation3 + $0x20] sm:$0xff]
      %v1257 = vld [vmem:[#allocation3 + $0x28] sm:$0xff]
      %v1258 = vld [vmem:[#allocation3 + $0x30] sm:$0xff]
      %v1259 = vld [vmem:[#allocation3 + $0x38] sm:$0xff]
      %v1260 = vld [vmem:[#allocation3 + $0x40] sm:$0xff]
      %v1261 = vld [vmem:[#allocation3 + $0x48] sm:$0xff]
      %v1262 = vld [vmem:[#allocation3 + $0x50] sm:$0xff]
      %v1263 = vld [vmem:[#allocation3 + $0x58] sm:$0xff]
      %v1264 = vld [vmem:[#allocation3 + $0x60] sm:$0xff]
      %v1265 = vld [vmem:[#allocation3 + $0x68] sm:$0xff]
      %v1266 = vld [vmem:[#allocation3 + $0x70] sm:$0xff]
      %v1267 = vld [vmem:[#allocation3 + $0x78] sm:$0xff]
      %v1269 = vperm.slane %v1251, 0
      %v1272 = vsel %vm167, %v1252, 0
      %v1275 = vsel %vm167, %v1253, 0
      %v1278 = vsel %vm167, %v1254, 0
      %v1281 = vsel %vm167, %v1255, 0
      %v1284 = vsel %vm167, %v1256, 0
      %v1287 = vsel %vm167, %v1257, 0
      %v1290 = vsel %vm167, %v1258, 0
      %v1293 = vsel %vm167, %v1259, 0
      %v1296 = vsel %vm167, %v1260, 0
      %v1299 = vsel %vm167, %v1261, 0
      %v1302 = vsel %vm167, %v1262, 0
      %v1305 = vsel %vm167, %v1263, 0
      %v1308 = vsel %vm167, %v1264, 0
      %v1311 = vsel %vm167, %v1265, 0
      %v1314 = vsel %vm167, %v1266, 0
      %v1317 = vsel %vm167, %v1267, 0
      %1319 = vmatpush.msra.mxu0 0.0
      %1320 = vmatpush.msra.mxu0 0.0
      %1321 = vmatpush.msra.mxu0 0.0
      %1322 = vmatpush.msra.mxu0 0.0
      %1323 = vmatpush.msra.mxu0 0.0
      %1324 = vmatpush.msra.mxu0 0.0
      %1325 = vmatpush.msra.mxu0 0.0
      %1326 = vmatpush.msra.mxu0 0.0
      %1327 = vmatpush.msra.mxu0 %v1249
      %1328 = vmatpush.msra.mxu0 %v1248
      %1329 = vmatpush.msra.mxu0 %v1247
      %1330 = vmatpush.msra.mxu0 %v1246
      %1331 = vmatpush.msra.mxu0 %v1245
      %1332 = vmatpush.msra.mxu0 %v1244
      %1333 = vmatpush.msra.mxu0 %v1243
      %1334 = vmatpush.msra.mxu0 %v1242
      %1335 = vmatmul.f32.gmra.mxu0 %v1272
      %v1336 = vpop.f32.mrf.mxu0
      %v1337 = vadd.f32 %v1269, %v1336
      %1338 = vmatmul.f32.gmra.mxu0 %v1275
      %v1339 = vpop.f32.mrf.mxu0
      %v1340 = vadd.f32 %v1269, %v1339
      %1341 = vmatmul.f32.gmra.mxu0 %v1278
      %v1342 = vpop.f32.mrf.mxu0
      %v1343 = vadd.f32 %v1269, %v1342
      %1344 = vmatmul.f32.gmra.mxu0 %v1281
      %v1345 = vpop.f32.mrf.mxu0
      %v1346 = vadd.f32 %v1269, %v1345
      %1347 = vmatmul.f32.gmra.mxu0 %v1284
      %v1348 = vpop.f32.mrf.mxu0
      %v1349 = vadd.f32 %v1269, %v1348
      %1350 = vmatmul.f32.gmra.mxu0 %v1287
      %v1351 = vpop.f32.mrf.mxu0
      %v1352 = vadd.f32 %v1269, %v1351
      %1353 = vmatmul.f32.gmra.mxu0 %v1290
      %v1354 = vpop.f32.mrf.mxu0
      %v1355 = vadd.f32 %v1269, %v1354
      %1356 = vmatmul.f32.gmra.mxu0 %v1293
      %v1357 = vpop.f32.mrf.mxu0
      %v1358 = vadd.f32 %v1269, %v1357
      %1359 = vmatmul.f32.gmra.mxu0 %v1296
      %v1360 = vpop.f32.mrf.mxu0
      %v1361 = vadd.f32 %v1269, %v1360
      %1362 = vmatmul.f32.gmra.mxu0 %v1299
      %v1363 = vpop.f32.mrf.mxu0
      %v1364 = vadd.f32 %v1269, %v1363
      %1365 = vmatmul.f32.gmra.mxu0 %v1302
      %v1366 = vpop.f32.mrf.mxu0
      %v1367 = vadd.f32 %v1269, %v1366
      %1368 = vmatmul.f32.gmra.mxu0 %v1305
      %v1369 = vpop.f32.mrf.mxu0
      %v1370 = vadd.f32 %v1269, %v1369
      %1371 = vmatmul.f32.gmra.mxu0 %v1308
      %v1372 = vpop.f32.mrf.mxu0
      %v1373 = vadd.f32 %v1269, %v1372
      %1374 = vmatmul.f32.gmra.mxu0 %v1311
      %v1375 = vpop.f32.mrf.mxu0
      %v1376 = vadd.f32 %v1269, %v1375
      %1377 = vmatmul.f32.gmra.mxu0 %v1314
      %v1378 = vpop.f32.mrf.mxu0
      %v1379 = vadd.f32 %v1269, %v1378
      %1380 = vmatmul.f32.gmra.mxu0 %v1317
      %v1381 = vpop.f32.mrf.mxu0
      %v1382 = vadd.f32 %v1269, %v1381
      %1383 = vdwg.mxu0
      %1384 = vst.msk [vmem:[#allocation4] sm:$0xff] %vm167, %v1337
      %1385 = vst.msk [vmem:[#allocation4 + $0x8] sm:$0xff] %vm167, %v1340
      %1386 = vst.msk [vmem:[#allocation4 + $0x10] sm:$0xff] %vm167, %v1343
      %1387 = vst.msk [vmem:[#allocation4 + $0x18] sm:$0xff] %vm167, %v1346
      %1388 = vst.msk [vmem:[#allocation4 + $0x20] sm:$0xff] %vm167, %v1349
      %1389 = vst.msk [vmem:[#allocation4 + $0x28] sm:$0xff] %vm167, %v1352
      %1390 = vst.msk [vmem:[#allocation4 + $0x30] sm:$0xff] %vm167, %v1355
      %1391 = vst.msk [vmem:[#allocation4 + $0x38] sm:$0xff] %vm167, %v1358
      %1392 = vst.msk [vmem:[#allocation4 + $0x40] sm:$0xff] %vm167, %v1361
      %1393 = vst.msk [vmem:[#allocation4 + $0x48] sm:$0xff] %vm167, %v1364
      %1394 = vst.msk [vmem:[#allocation4 + $0x50] sm:$0xff] %vm167, %v1367
      %1395 = vst.msk [vmem:[#allocation4 + $0x58] sm:$0xff] %vm167, %v1370
      %1396 = vst.msk [vmem:[#allocation4 + $0x60] sm:$0xff] %vm167, %v1373
      %1397 = vst.msk [vmem:[#allocation4 + $0x68] sm:$0xff] %vm167, %v1376
      %1398 = vst.msk [vmem:[#allocation4 + $0x70] sm:$0xff] %vm167, %v1379
      %1399 = vst.msk [vmem:[#allocation4 + $0x78] sm:$0xff] %vm167, %v1382
      %v1400 = vmul.f32 %v1337, %v604
      %v1401 = vmul.f32 %v1340, %v605
      %v1402 = vmul.f32 %v1343, %v606
      %v1403 = vmul.f32 %v1346, %v607
      %v1404 = vmul.f32 %v1349, %v608
      %v1405 = vmul.f32 %v1352, %v609
      %v1406 = vmul.f32 %v1355, %v610
      %v1407 = vmul.f32 %v1358, %v611
      %v1408 = vmul.f32 %v1361, %v612
      %v1409 = vmul.f32 %v1364, %v613
      %v1410 = vmul.f32 %v1367, %v614
      %v1411 = vmul.f32 %v1370, %v615
      %v1412 = vmul.f32 %v1373, %v616
      %v1413 = vmul.f32 %v1376, %v617
      %v1414 = vmul.f32 %v1379, %v618
      %v1415 = vmul.f32 %v1382, %v619
      %v1416 = vsel %vm167, %v1400, 0.0
      %v1417 = vsel %vm167, %v1401, 0.0
      %v1418 = vadd.f32 %v1416, %v1417
      %v1419 = vsel %vm167, %v1402, 0.0
      %v1420 = vadd.f32 %v1418, %v1419
      %v1421 = vsel %vm167, %v1403, 0.0
      %v1422 = vadd.f32 %v1420, %v1421
      %v1423 = vsel %vm167, %v1404, 0.0
      %v1424 = vadd.f32 %v1422, %v1423
      %v1425 = vsel %vm167, %v1405, 0.0
      %v1426 = vadd.f32 %v1424, %v1425
      %v1427 = vsel %vm167, %v1406, 0.0
      %v1428 = vadd.f32 %v1426, %v1427
      %v1429 = vsel %vm167, %v1407, 0.0
      %v1430 = vadd.f32 %v1428, %v1429
      %v1431 = vsel %vm167, %v1408, 0.0
      %v1432 = vadd.f32 %v1430, %v1431
      %v1433 = vsel %vm167, %v1409, 0.0
      %v1434 = vadd.f32 %v1432, %v1433
      %v1435 = vsel %vm167, %v1410, 0.0
      %v1436 = vadd.f32 %v1434, %v1435
      %v1437 = vsel %vm167, %v1411, 0.0
      %v1438 = vadd.f32 %v1436, %v1437
      %v1439 = vsel %vm167, %v1412, 0.0
      %v1440 = vadd.f32 %v1438, %v1439
      %v1441 = vsel %vm167, %v1413, 0.0
      %v1442 = vadd.f32 %v1440, %v1441
      %v1443 = vsel %vm167, %v1414, 0.0
      %v1444 = vadd.f32 %v1442, %v1443
      %v1445 = vsel %vm167, %v1415, 0.0
      %v1446 = vadd.f32 %v1444, %v1445
      %v1447 = vrot.slane %v1446, 4
      %v1448 = vadd.f32 %v1446, %v1447
      %v1449 = vrot.slane %v1448, 2
      %v1450 = vadd.f32 %v1448, %v1449
      %v1451 = vrot.slane %v1450, 1
      %v1452 = vadd.f32 %v1450, %v1451
      %v1453 = vadd.f32 %v1452, 0.0
      %v1454 = vmul.f32 %v1400, %v1337
      %v1455 = vmul.f32 %v1401, %v1340
      %v1456 = vmul.f32 %v1402, %v1343
      %v1457 = vmul.f32 %v1403, %v1346
      %v1458 = vmul.f32 %v1404, %v1349
      %v1459 = vmul.f32 %v1405, %v1352
      %v1460 = vmul.f32 %v1406, %v1355
      %v1461 = vmul.f32 %v1407, %v1358
      %v1462 = vmul.f32 %v1408, %v1361
      %v1463 = vmul.f32 %v1409, %v1364
      %v1464 = vmul.f32 %v1410, %v1367
      %v1465 = vmul.f32 %v1411, %v1370
      %v1466 = vmul.f32 %v1412, %v1373
      %v1467 = vmul.f32 %v1413, %v1376
      %v1468 = vmul.f32 %v1414, %v1379
      %v1469 = vmul.f32 %v1415, %v1382
      %v1470 = vsel %vm167, %v1454, 0.0
      %v1471 = vsel %vm167, %v1455, 0.0
      %v1472 = vadd.f32 %v1470, %v1471
      %v1473 = vsel %vm167, %v1456, 0.0
      %v1474 = vadd.f32 %v1472, %v1473
      %v1475 = vsel %vm167, %v1457, 0.0
      %v1476 = vadd.f32 %v1474, %v1475
      %v1477 = vsel %vm167, %v1458, 0.0
      %v1478 = vadd.f32 %v1476, %v1477
      %v1479 = vsel %vm167, %v1459, 0.0
      %v1480 = vadd.f32 %v1478, %v1479
      %v1481 = vsel %vm167, %v1460, 0.0
      %v1482 = vadd.f32 %v1480, %v1481
      %v1483 = vsel %vm167, %v1461, 0.0
      %v1484 = vadd.f32 %v1482, %v1483
      %v1485 = vsel %vm167, %v1462, 0.0
      %v1486 = vadd.f32 %v1484, %v1485
      %v1487 = vsel %vm167, %v1463, 0.0
      %v1488 = vadd.f32 %v1486, %v1487
      %v1489 = vsel %vm167, %v1464, 0.0
      %v1490 = vadd.f32 %v1488, %v1489
      %v1491 = vsel %vm167, %v1465, 0.0
      %v1492 = vadd.f32 %v1490, %v1491
      %v1493 = vsel %vm167, %v1466, 0.0
      %v1494 = vadd.f32 %v1492, %v1493
      %v1495 = vsel %vm167, %v1467, 0.0
      %v1496 = vadd.f32 %v1494, %v1495
      %v1497 = vsel %vm167, %v1468, 0.0
      %v1498 = vadd.f32 %v1496, %v1497
      %v1499 = vsel %vm167, %v1469, 0.0
      %v1500 = vadd.f32 %v1498, %v1499
      %v1501 = vrot.slane %v1500, 4
      %v1502 = vadd.f32 %v1500, %v1501
      %v1503 = vrot.slane %v1502, 2
      %v1504 = vadd.f32 %v1502, %v1503
      %v1505 = vrot.slane %v1504, 1
      %v1506 = vadd.f32 %v1504, %v1505
      %v1507 = vadd.f32 %v1506, 0.0
      %s1508 = scalar_lea.vmem %s7, 2
      %v1509 = vld [vmem:[%s1508] sm:$0x1]
      %s1510 = scalar_lea.vmem %s8, 2
      %v1511 = vld [vmem:[%s1510] sm:$0x1]
      %v1512 = vmul.f32 %v1453, 0.125
      %v1513 = vmul.f32 %v1507, 0.125
      %v1514 = vmul.f32 %v1512, %v1512
      %v1515 = vsub.f32 %v1513, %v1514
      %v1516 = vadd.f32 %v1515, 1e-05
      %v1517 = vrsqrt.pop %v1516
      %v1518 = vmul.f32 %v1517, %v1516
      %v1519 = vmul.f32 %v1518, %v1517
      %v1520 = vmul.f32 0.5, %v1519
      %v1521 = vsub.f32 1.5, %v1520
      %v1522 = vmul.f32 %v1517, %v1521
      %vm1523 = vweird.f32 %v1516
      %vm1524 = vweird.f32 %v1517
      %vm1525 = vmor %vm1523, %vm1524
      %v1526 = vsel %vm1525, %v1517, %v1522
      %v1527 = vmul.f32 %v1509, %v1526
      %v1528 = vmul.f32 %v1512, %v1527
      %v1529 = vsub.f32 %v1511, %v1528
      %v1530 = vld [vmem:[#allocation4] sm:$0xff]
      %v1531 = vld [vmem:[#allocation4 + $0x8] sm:$0xff]
      %v1532 = vld [vmem:[#allocation4 + $0x10] sm:$0xff]
      %v1533 = vld [vmem:[#allocation4 + $0x18] sm:$0xff]
      %v1534 = vld [vmem:[#allocation4 + $0x20] sm:$0xff]
      %v1535 = vld [vmem:[#allocation4 + $0x28] sm:$0xff]
      %v1536 = vld [vmem:[#allocation4 + $0x30] sm:$0xff]
      %v1537 = vld [vmem:[#allocation4 + $0x38] sm:$0xff]
      %v1538 = vld [vmem:[#allocation4 + $0x40] sm:$0xff]
      %v1539 = vld [vmem:[#allocation4 + $0x48] sm:$0xff]
      %v1540 = vld [vmem:[#allocation4 + $0x50] sm:$0xff]
      %v1541 = vld [vmem:[#allocation4 + $0x58] sm:$0xff]
      %v1542 = vld [vmem:[#allocation4 + $0x60] sm:$0xff]
      %v1543 = vld [vmem:[#allocation4 + $0x68] sm:$0xff]
      %v1544 = vld [vmem:[#allocation4 + $0x70] sm:$0xff]
      %v1545 = vld [vmem:[#allocation4 + $0x78] sm:$0xff]
      %v1547 = vperm.slane %v1527, 0
      %v1549 = vmul.f32 %v1530, %v1547
      %v1550 = vmul.f32 %v1531, %v1547
      %v1551 = vmul.f32 %v1532, %v1547
      %v1552 = vmul.f32 %v1533, %v1547
      %v1553 = vmul.f32 %v1534, %v1547
      %v1554 = vmul.f32 %v1535, %v1547
      %v1555 = vmul.f32 %v1536, %v1547
      %v1556 = vmul.f32 %v1537, %v1547
      %v1557 = vmul.f32 %v1538, %v1547
      %v1558 = vmul.f32 %v1539, %v1547
      %v1559 = vmul.f32 %v1540, %v1547
      %v1560 = vmul.f32 %v1541, %v1547
      %v1561 = vmul.f32 %v1542, %v1547
      %v1562 = vmul.f32 %v1543, %v1547
      %v1563 = vmul.f32 %v1544, %v1547
      %v1564 = vmul.f32 %v1545, %v1547
      %v1566 = vperm.slane %v1529, 0
      %v1568 = vadd.f32 %v1549, %v1566
      %v1569 = vadd.f32 %v1550, %v1566
      %v1570 = vadd.f32 %v1551, %v1566
      %v1571 = vadd.f32 %v1552, %v1566
      %v1572 = vadd.f32 %v1553, %v1566
      %v1573 = vadd.f32 %v1554, %v1566
      %v1574 = vadd.f32 %v1555, %v1566
      %v1575 = vadd.f32 %v1556, %v1566
      %v1576 = vadd.f32 %v1557, %v1566
      %v1577 = vadd.f32 %v1558, %v1566
      %v1578 = vadd.f32 %v1559, %v1566
      %v1579 = vadd.f32 %v1560, %v1566
      %v1580 = vadd.f32 %v1561, %v1566
      %v1581 = vadd.f32 %v1562, %v1566
      %v1582 = vadd.f32 %v1563, %v1566
      %v1583 = vadd.f32 %v1564, %v1566
      %v1584 = vmax.f32 %v1568, 0.0
      %v1585 = vmax.f32 %v1569, 0.0
      %v1586 = vmax.f32 %v1570, 0.0
      %v1587 = vmax.f32 %v1571, 0.0
      %v1588 = vmax.f32 %v1572, 0.0
      %v1589 = vmax.f32 %v1573, 0.0
      %v1590 = vmax.f32 %v1574, 0.0
      %v1591 = vmax.f32 %v1575, 0.0
      %v1592 = vmax.f32 %v1576, 0.0
      %v1593 = vmax.f32 %v1577, 0.0
      %v1594 = vmax.f32 %v1578, 0.0
      %v1595 = vmax.f32 %v1579, 0.0
      %v1596 = vmax.f32 %v1580, 0.0
      %v1597 = vmax.f32 %v1581, 0.0
      %v1598 = vmax.f32 %v1582, 0.0
      %v1599 = vmax.f32 %v1583, 0.0
      %1600 = vst.msk [vmem:[#allocation4] sm:$0xff] %vm167, %v1584
      %1601 = vst.msk [vmem:[#allocation4 + $0x8] sm:$0xff] %vm167, %v1585
      %1602 = vst.msk [vmem:[#allocation4 + $0x10] sm:$0xff] %vm167, %v1586
      %1603 = vst.msk [vmem:[#allocation4 + $0x18] sm:$0xff] %vm167, %v1587
      %1604 = vst.msk [vmem:[#allocation4 + $0x20] sm:$0xff] %vm167, %v1588
      %1605 = vst.msk [vmem:[#allocation4 + $0x28] sm:$0xff] %vm167, %v1589
      %1606 = vst.msk [vmem:[#allocation4 + $0x30] sm:$0xff] %vm167, %v1590
      %1607 = vst.msk [vmem:[#allocation4 + $0x38] sm:$0xff] %vm167, %v1591
      %1608 = vst.msk [vmem:[#allocation4 + $0x40] sm:$0xff] %vm167, %v1592
      %1609 = vst.msk [vmem:[#allocation4 + $0x48] sm:$0xff] %vm167, %v1593
      %1610 = vst.msk [vmem:[#allocation4 + $0x50] sm:$0xff] %vm167, %v1594
      %1611 = vst.msk [vmem:[#allocation4 + $0x58] sm:$0xff] %vm167, %v1595
      %1612 = vst.msk [vmem:[#allocation4 + $0x60] sm:$0xff] %vm167, %v1596
      %1613 = vst.msk [vmem:[#allocation4 + $0x68] sm:$0xff] %vm167, %v1597
      %1614 = vst.msk [vmem:[#allocation4 + $0x70] sm:$0xff] %vm167, %v1598
      %1615 = vst.msk [vmem:[#allocation4 + $0x78] sm:$0xff] %vm167, %v1599
      %s1616 = scalar_lea.vmem [#allocation8], 192
      %v1617 = vld [vmem:[%s1616] sm:$0xff]
      %v1618 = vld [vmem:[%s1616 + $0x8] sm:$0xff]
      %v1619 = vld [vmem:[%s1616 + $0x10] sm:$0xff]
      %v1620 = vld [vmem:[%s1616 + $0x18] sm:$0xff]
      %v1621 = vld [vmem:[%s1616 + $0x20] sm:$0xff]
      %v1622 = vld [vmem:[%s1616 + $0x28] sm:$0xff]
      %v1623 = vld [vmem:[%s1616 + $0x30] sm:$0xff]
      %v1624 = vld [vmem:[%s1616 + $0x38] sm:$0xff]
      %s1625 = scalar_lea.vmem %s6, 3
      %v1626 = vld [vmem:[%s1625] sm:$0x1]
      %v1627 = vld [vmem:[#allocation4] sm:$0xff]
      %v1628 = vld [vmem:[#allocation4 + $0x8] sm:$0xff]
      %v1629 = vld [vmem:[#allocation4 + $0x10] sm:$0xff]
      %v1630 = vld [vmem:[#allocation4 + $0x18] sm:$0xff]
      %v1631 = vld [vmem:[#allocation4 + $0x20] sm:$0xff]
      %v1632 = vld [vmem:[#allocation4 + $0x28] sm:$0xff]
      %v1633 = vld [vmem:[#allocation4 + $0x30] sm:$0xff]
      %v1634 = vld [vmem:[#allocation4 + $0x38] sm:$0xff]
      %v1635 = vld [vmem:[#allocation4 + $0x40] sm:$0xff]
      %v1636 = vld [vmem:[#allocation4 + $0x48] sm:$0xff]
      %v1637 = vld [vmem:[#allocation4 + $0x50] sm:$0xff]
      %v1638 = vld [vmem:[#allocation4 + $0x58] sm:$0xff]
      %v1639 = vld [vmem:[#allocation4 + $0x60] sm:$0xff]
      %v1640 = vld [vmem:[#allocation4 + $0x68] sm:$0xff]
      %v1641 = vld [vmem:[#allocation4 + $0x70] sm:$0xff]
      %v1642 = vld [vmem:[#allocation4 + $0x78] sm:$0xff]
      %v1644 = vperm.slane %v1626, 0
      %v1647 = vsel %vm167, %v1627, 0
      %v1650 = vsel %vm167, %v1628, 0
      %v1653 = vsel %vm167, %v1629, 0
      %v1656 = vsel %vm167, %v1630, 0
      %v1659 = vsel %vm167, %v1631, 0
      %v1662 = vsel %vm167, %v1632, 0
      %v1665 = vsel %vm167, %v1633, 0
      %v1668 = vsel %vm167, %v1634, 0
      %v1671 = vsel %vm167, %v1635, 0
      %v1674 = vsel %vm167, %v1636, 0
      %v1677 = vsel %vm167, %v1637, 0
      %v1680 = vsel %vm167, %v1638, 0
      %v1683 = vsel %vm167, %v1639, 0
      %v1686 = vsel %vm167, %v1640, 0
      %v1689 = vsel %vm167, %v1641, 0
      %v1692 = vsel %vm167, %v1642, 0
      %1694 = vmatpush.msra.mxu0 0.0
      %1695 = vmatpush.msra.mxu0 0.0
      %1696 = vmatpush.msra.mxu0 0.0
      %1697 = vmatpush.msra.mxu0 0.0
      %1698 = vmatpush.msra.mxu0 0.0
      %1699 = vmatpush.msra.mxu0 0.0
      %1700 = vmatpush.msra.mxu0 0.0
      %1701 = vmatpush.msra.mxu0 0.0
      %1702 = vmatpush.msra.mxu0 %v1624
      %1703 = vmatpush.msra.mxu0 %v1623
      %1704 = vmatpush.msra.mxu0 %v1622
      %1705 = vmatpush.msra.mxu0 %v1621
      %1706 = vmatpush.msra.mxu0 %v1620
      %1707 = vmatpush.msra.mxu0 %v1619
      %1708 = vmatpush.msra.mxu0 %v1618
      %1709 = vmatpush.msra.mxu0 %v1617
      %1710 = vmatmul.f32.gmra.mxu0 %v1647
      %v1711 = vpop.f32.mrf.mxu0
      %v1712 = vadd.f32 %v1644, %v1711
      %1713 = vmatmul.f32.gmra.mxu0 %v1650
      %v1714 = vpop.f32.mrf.mxu0
      %v1715 = vadd.f32 %v1644, %v1714
      %1716 = vmatmul.f32.gmra.mxu0 %v1653
      %v1717 = vpop.f32.mrf.mxu0
      %v1718 = vadd.f32 %v1644, %v1717
      %1719 = vmatmul.f32.gmra.mxu0 %v1656
      %v1720 = vpop.f32.mrf.mxu0
      %v1721 = vadd.f32 %v1644, %v1720
      %1722 = vmatmul.f32.gmra.mxu0 %v1659
      %v1723 = vpop.f32.mrf.mxu0
      %v1724 = vadd.f32 %v1644, %v1723
      %1725 = vmatmul.f32.gmra.mxu0 %v1662
      %v1726 = vpop.f32.mrf.mxu0
      %v1727 = vadd.f32 %v1644, %v1726
      %1728 = vmatmul.f32.gmra.mxu0 %v1665
      %v1729 = vpop.f32.mrf.mxu0
      %v1730 = vadd.f32 %v1644, %v1729
      %1731 = vmatmul.f32.gmra.mxu0 %v1668
      %v1732 = vpop.f32.mrf.mxu0
      %v1733 = vadd.f32 %v1644, %v1732
      %1734 = vmatmul.f32.gmra.mxu0 %v1671
      %v1735 = vpop.f32.mrf.mxu0
      %v1736 = vadd.f32 %v1644, %v1735
      %1737 = vmatmul.f32.gmra.mxu0 %v1674
      %v1738 = vpop.f32.mrf.mxu0
      %v1739 = vadd.f32 %v1644, %v1738
      %1740 = vmatmul.f32.gmra.mxu0 %v1677
      %v1741 = vpop.f32.mrf.mxu0
      %v1742 = vadd.f32 %v1644, %v1741
      %1743 = vmatmul.f32.gmra.mxu0 %v1680
      %v1744 = vpop.f32.mrf.mxu0
      %v1745 = vadd.f32 %v1644, %v1744
      %1746 = vmatmul.f32.gmra.mxu0 %v1683
      %v1747 = vpop.f32.mrf.mxu0
      %v1748 = vadd.f32 %v1644, %v1747
      %1749 = vmatmul.f32.gmra.mxu0 %v1686
      %v1750 = vpop.f32.mrf.mxu0
      %v1751 = vadd.f32 %v1644, %v1750
      %1752 = vmatmul.f32.gmra.mxu0 %v1689
      %v1753 = vpop.f32.mrf.mxu0
      %v1754 = vadd.f32 %v1644, %v1753
      %1755 = vmatmul.f32.gmra.mxu0 %v1692
      %v1756 = vpop.f32.mrf.mxu0
      %v1757 = vadd.f32 %v1644, %v1756
      %1758 = vdwg.mxu0
      %1759 = vst.msk [vmem:[#allocation4] sm:$0xff] %vm167, %v1712
      %1760 = vst.msk [vmem:[#allocation4 + $0x8] sm:$0xff] %vm167, %v1715
      %1761 = vst.msk [vmem:[#allocation4 + $0x10] sm:$0xff] %vm167, %v1718
      %1762 = vst.msk [vmem:[#allocation4 + $0x18] sm:$0xff] %vm167, %v1721
      %1763 = vst.msk [vmem:[#allocation4 + $0x20] sm:$0xff] %vm167, %v1724
      %1764 = vst.msk [vmem:[#allocation4 + $0x28] sm:$0xff] %vm167, %v1727
      %1765 = vst.msk [vmem:[#allocation4 + $0x30] sm:$0xff] %vm167, %v1730
      %1766 = vst.msk [vmem:[#allocation4 + $0x38] sm:$0xff] %vm167, %v1733
      %1767 = vst.msk [vmem:[#allocation4 + $0x40] sm:$0xff] %vm167, %v1736
      %1768 = vst.msk [vmem:[#allocation4 + $0x48] sm:$0xff] %vm167, %v1739
      %1769 = vst.msk [vmem:[#allocation4 + $0x50] sm:$0xff] %vm167, %v1742
      %1770 = vst.msk [vmem:[#allocation4 + $0x58] sm:$0xff] %vm167, %v1745
      %1771 = vst.msk [vmem:[#allocation4 + $0x60] sm:$0xff] %vm167, %v1748
      %1772 = vst.msk [vmem:[#allocation4 + $0x68] sm:$0xff] %vm167, %v1751
      %1773 = vst.msk [vmem:[#allocation4 + $0x70] sm:$0xff] %vm167, %v1754
      %1774 = vst.msk [vmem:[#allocation4 + $0x78] sm:$0xff] %vm167, %v1757
      %v1775 = vmul.f32 %v1712, %v604
      %v1776 = vmul.f32 %v1715, %v605
      %v1777 = vmul.f32 %v1718, %v606
      %v1778 = vmul.f32 %v1721, %v607
      %v1779 = vmul.f32 %v1724, %v608
      %v1780 = vmul.f32 %v1727, %v609
      %v1781 = vmul.f32 %v1730, %v610
      %v1782 = vmul.f32 %v1733, %v611
      %v1783 = vmul.f32 %v1736, %v612
      %v1784 = vmul.f32 %v1739, %v613
      %v1785 = vmul.f32 %v1742, %v614
      %v1786 = vmul.f32 %v1745, %v615
      %v1787 = vmul.f32 %v1748, %v616
      %v1788 = vmul.f32 %v1751, %v617
      %v1789 = vmul.f32 %v1754, %v618
      %v1790 = vmul.f32 %v1757, %v619
      %v1791 = vsel %vm167, %v1775, 0.0
      %v1792 = vsel %vm167, %v1776, 0.0
      %v1793 = vadd.f32 %v1791, %v1792
      %v1794 = vsel %vm167, %v1777, 0.0
      %v1795 = vadd.f32 %v1793, %v1794
      %v1796 = vsel %vm167, %v1778, 0.0
      %v1797 = vadd.f32 %v1795, %v1796
      %v1798 = vsel %vm167, %v1779, 0.0
      %v1799 = vadd.f32 %v1797, %v1798
      %v1800 = vsel %vm167, %v1780, 0.0
      %v1801 = vadd.f32 %v1799, %v1800
      %v1802 = vsel %vm167, %v1781, 0.0
      %v1803 = vadd.f32 %v1801, %v1802
      %v1804 = vsel %vm167, %v1782, 0.0
      %v1805 = vadd.f32 %v1803, %v1804
      %v1806 = vsel %vm167, %v1783, 0.0
      %v1807 = vadd.f32 %v1805, %v1806
      %v1808 = vsel %vm167, %v1784, 0.0
      %v1809 = vadd.f32 %v1807, %v1808
      %v1810 = vsel %vm167, %v1785, 0.0
      %v1811 = vadd.f32 %v1809, %v1810
      %v1812 = vsel %vm167, %v1786, 0.0
      %v1813 = vadd.f32 %v1811, %v1812
      %v1814 = vsel %vm167, %v1787, 0.0
      %v1815 = vadd.f32 %v1813, %v1814
      %v1816 = vsel %vm167, %v1788, 0.0
      %v1817 = vadd.f32 %v1815, %v1816
      %v1818 = vsel %vm167, %v1789, 0.0
      %v1819 = vadd.f32 %v1817, %v1818
      %v1820 = vsel %vm167, %v1790, 0.0
      %v1821 = vadd.f32 %v1819, %v1820
      %v1822 = vrot.slane %v1821, 4
      %v1823 = vadd.f32 %v1821, %v1822
      %v1824 = vrot.slane %v1823, 2
      %v1825 = vadd.f32 %v1823, %v1824
      %v1826 = vrot.slane %v1825, 1
      %v1827 = vadd.f32 %v1825, %v1826
      %v1828 = vadd.f32 %v1827, 0.0
      %v1829 = vmul.f32 %v1775, %v1712
      %v1830 = vmul.f32 %v1776, %v1715
      %v1831 = vmul.f32 %v1777, %v1718
      %v1832 = vmul.f32 %v1778, %v1721
      %v1833 = vmul.f32 %v1779, %v1724
      %v1834 = vmul.f32 %v1780, %v1727
      %v1835 = vmul.f32 %v1781, %v1730
      %v1836 = vmul.f32 %v1782, %v1733
      %v1837 = vmul.f32 %v1783, %v1736
      %v1838 = vmul.f32 %v1784, %v1739
      %v1839 = vmul.f32 %v1785, %v1742
      %v1840 = vmul.f32 %v1786, %v1745
      %v1841 = vmul.f32 %v1787, %v1748
      %v1842 = vmul.f32 %v1788, %v1751
      %v1843 = vmul.f32 %v1789, %v1754
      %v1844 = vmul.f32 %v1790, %v1757
      %v1845 = vsel %vm167, %v1829, 0.0
      %v1846 = vsel %vm167, %v1830, 0.0
      %v1847 = vadd.f32 %v1845, %v1846
      %v1848 = vsel %vm167, %v1831, 0.0
      %v1849 = vadd.f32 %v1847, %v1848
      %v1850 = vsel %vm167, %v1832, 0.0
      %v1851 = vadd.f32 %v1849, %v1850
      %v1852 = vsel %vm167, %v1833, 0.0
      %v1853 = vadd.f32 %v1851, %v1852
      %v1854 = vsel %vm167, %v1834, 0.0
      %v1855 = vadd.f32 %v1853, %v1854
      %v1856 = vsel %vm167, %v1835, 0.0
      %v1857 = vadd.f32 %v1855, %v1856
      %v1858 = vsel %vm167, %v1836, 0.0
      %v1859 = vadd.f32 %v1857, %v1858
      %v1860 = vsel %vm167, %v1837, 0.0
      %v1861 = vadd.f32 %v1859, %v1860
      %v1862 = vsel %vm167, %v1838, 0.0
      %v1863 = vadd.f32 %v1861, %v1862
      %v1864 = vsel %vm167, %v1839, 0.0
      %v1865 = vadd.f32 %v1863, %v1864
      %v1866 = vsel %vm167, %v1840, 0.0
      %v1867 = vadd.f32 %v1865, %v1866
      %v1868 = vsel %vm167, %v1841, 0.0
      %v1869 = vadd.f32 %v1867, %v1868
      %v1870 = vsel %vm167, %v1842, 0.0
      %v1871 = vadd.f32 %v1869, %v1870
      %v1872 = vsel %vm167, %v1843, 0.0
      %v1873 = vadd.f32 %v1871, %v1872
      %v1874 = vsel %vm167, %v1844, 0.0
      %v1875 = vadd.f32 %v1873, %v1874
      %v1876 = vrot.slane %v1875, 4
      %v1877 = vadd.f32 %v1875, %v1876
      %v1878 = vrot.slane %v1877, 2
      %v1879 = vadd.f32 %v1877, %v1878
      %v1880 = vrot.slane %v1879, 1
      %v1881 = vadd.f32 %v1879, %v1880
      %v1882 = vadd.f32 %v1881, 0.0
      %s1883 = scalar_lea.vmem %s7, 3
      %v1884 = vld [vmem:[%s1883] sm:$0x1]
      %s1885 = scalar_lea.vmem %s8, 3
      %v1886 = vld [vmem:[%s1885] sm:$0x1]
      %v1887 = vmul.f32 %v1828, 0.125
      %v1888 = vmul.f32 %v1882, 0.125
      %v1889 = vmul.f32 %v1887, %v1887
      %v1890 = vsub.f32 %v1888, %v1889
      %v1891 = vadd.f32 %v1890, 1e-05
      %v1892 = vrsqrt.pop %v1891
      %v1893 = vmul.f32 %v1892, %v1891
      %v1894 = vmul.f32 %v1893, %v1892
      %v1895 = vmul.f32 0.5, %v1894
      %v1896 = vsub.f32 1.5, %v1895
      %v1897 = vmul.f32 %v1892, %v1896
      %vm1898 = vweird.f32 %v1891
      %vm1899 = vweird.f32 %v1892
      %vm1900 = vmor %vm1898, %vm1899
      %v1901 = vsel %vm1900, %v1892, %v1897
      %v1902 = vmul.f32 %v1884, %v1901
      %v1903 = vmul.f32 %v1887, %v1902
      %v1904 = vsub.f32 %v1886, %v1903
      %v1905 = vld [vmem:[#allocation4] sm:$0xff]
      %v1906 = vld [vmem:[#allocation4 + $0x8] sm:$0xff]
      %v1907 = vld [vmem:[#allocation4 + $0x10] sm:$0xff]
      %v1908 = vld [vmem:[#allocation4 + $0x18] sm:$0xff]
      %v1909 = vld [vmem:[#allocation4 + $0x20] sm:$0xff]
      %v1910 = vld [vmem:[#allocation4 + $0x28] sm:$0xff]
      %v1911 = vld [vmem:[#allocation4 + $0x30] sm:$0xff]
      %v1912 = vld [vmem:[#allocation4 + $0x38] sm:$0xff]
      %v1913 = vld [vmem:[#allocation4 + $0x40] sm:$0xff]
      %v1914 = vld [vmem:[#allocation4 + $0x48] sm:$0xff]
      %v1915 = vld [vmem:[#allocation4 + $0x50] sm:$0xff]
      %v1916 = vld [vmem:[#allocation4 + $0x58] sm:$0xff]
      %v1917 = vld [vmem:[#allocation4 + $0x60] sm:$0xff]
      %v1918 = vld [vmem:[#allocation4 + $0x68] sm:$0xff]
      %v1919 = vld [vmem:[#allocation4 + $0x70] sm:$0xff]
      %v1920 = vld [vmem:[#allocation4 + $0x78] sm:$0xff]
      %v1922 = vperm.slane %v1902, 0
      %v1924 = vmul.f32 %v1905, %v1922
      %v1925 = vmul.f32 %v1906, %v1922
      %v1926 = vmul.f32 %v1907, %v1922
      %v1927 = vmul.f32 %v1908, %v1922
      %v1928 = vmul.f32 %v1909, %v1922
      %v1929 = vmul.f32 %v1910, %v1922
      %v1930 = vmul.f32 %v1911, %v1922
      %v1931 = vmul.f32 %v1912, %v1922
      %v1932 = vmul.f32 %v1913, %v1922
      %v1933 = vmul.f32 %v1914, %v1922
      %v1934 = vmul.f32 %v1915, %v1922
      %v1935 = vmul.f32 %v1916, %v1922
      %v1936 = vmul.f32 %v1917, %v1922
      %v1937 = vmul.f32 %v1918, %v1922
      %v1938 = vmul.f32 %v1919, %v1922
      %v1939 = vmul.f32 %v1920, %v1922
      %v1941 = vperm.slane %v1904, 0
      %v1943 = vadd.f32 %v1924, %v1941
      %v1944 = vadd.f32 %v1925, %v1941
      %v1945 = vadd.f32 %v1926, %v1941
      %v1946 = vadd.f32 %v1927, %v1941
      %v1947 = vadd.f32 %v1928, %v1941
      %v1948 = vadd.f32 %v1929, %v1941
      %v1949 = vadd.f32 %v1930, %v1941
      %v1950 = vadd.f32 %v1931, %v1941
      %v1951 = vadd.f32 %v1932, %v1941
      %v1952 = vadd.f32 %v1933, %v1941
      %v1953 = vadd.f32 %v1934, %v1941
      %v1954 = vadd.f32 %v1935, %v1941
      %v1955 = vadd.f32 %v1936, %v1941
      %v1956 = vadd.f32 %v1937, %v1941
      %v1957 = vadd.f32 %v1938, %v1941
      %v1958 = vadd.f32 %v1939, %v1941
      %v1959 = vld [vmem:[#allocation3] sm:$0xff]
      %v1960 = vld [vmem:[#allocation3 + $0x8] sm:$0xff]
      %v1961 = vld [vmem:[#allocation3 + $0x10] sm:$0xff]
      %v1962 = vld [vmem:[#allocation3 + $0x18] sm:$0xff]
      %v1963 = vld [vmem:[#allocation3 + $0x20] sm:$0xff]
      %v1964 = vld [vmem:[#allocation3 + $0x28] sm:$0xff]
      %v1965 = vld [vmem:[#allocation3 + $0x30] sm:$0xff]
      %v1966 = vld [vmem:[#allocation3 + $0x38] sm:$0xff]
      %v1967 = vld [vmem:[#allocation3 + $0x40] sm:$0xff]
      %v1968 = vld [vmem:[#allocation3 + $0x48] sm:$0xff]
      %v1969 = vld [vmem:[#allocation3 + $0x50] sm:$0xff]
      %v1970 = vld [vmem:[#allocation3 + $0x58] sm:$0xff]
      %v1971 = vld [vmem:[#allocation3 + $0x60] sm:$0xff]
      %v1972 = vld [vmem:[#allocation3 + $0x68] sm:$0xff]
      %v1973 = vld [vmem:[#allocation3 + $0x70] sm:$0xff]
      %v1974 = vld [vmem:[#allocation3 + $0x78] sm:$0xff]
      %v1975 = vadd.f32 %v1943, %v1959
      %v1976 = vadd.f32 %v1944, %v1960
      %v1977 = vadd.f32 %v1945, %v1961
      %v1978 = vadd.f32 %v1946, %v1962
      %v1979 = vadd.f32 %v1947, %v1963
      %v1980 = vadd.f32 %v1948, %v1964
      %v1981 = vadd.f32 %v1949, %v1965
      %v1982 = vadd.f32 %v1950, %v1966
      %v1983 = vadd.f32 %v1951, %v1967
      %v1984 = vadd.f32 %v1952, %v1968
      %v1985 = vadd.f32 %v1953, %v1969
      %v1986 = vadd.f32 %v1954, %v1970
      %v1987 = vadd.f32 %v1955, %v1971
      %v1988 = vadd.f32 %v1956, %v1972
      %v1989 = vadd.f32 %v1957, %v1973
      %v1990 = vadd.f32 %v1958, %v1974
      %v1991 = vmax.f32 %v1975, 0.0
      %v1992 = vmax.f32 %v1976, 0.0
      %v1993 = vmax.f32 %v1977, 0.0
      %v1994 = vmax.f32 %v1978, 0.0
      %v1995 = vmax.f32 %v1979, 0.0
      %v1996 = vmax.f32 %v1980, 0.0
      %v1997 = vmax.f32 %v1981, 0.0
      %v1998 = vmax.f32 %v1982, 0.0
      %v1999 = vmax.f32 %v1983, 0.0
      %v2000 = vmax.f32 %v1984, 0.0
      %v2001 = vmax.f32 %v1985, 0.0
      %v2002 = vmax.f32 %v1986, 0.0
      %v2003 = vmax.f32 %v1987, 0.0
      %v2004 = vmax.f32 %v1988, 0.0
      %v2005 = vmax.f32 %v1989, 0.0
      %v2006 = vmax.f32 %v1990, 0.0
      %2007 = vst.msk [vmem:[#allocation3] sm:$0xff] %vm167, %v1991
      %2008 = vst.msk [vmem:[#allocation3 + $0x8] sm:$0xff] %vm167, %v1992
      %2009 = vst.msk [vmem:[#allocation3 + $0x10] sm:$0xff] %vm167, %v1993
      %2010 = vst.msk [vmem:[#allocation3 + $0x18] sm:$0xff] %vm167, %v1994
      %2011 = vst.msk [vmem:[#allocation3 + $0x20] sm:$0xff] %vm167, %v1995
      %2012 = vst.msk [vmem:[#allocation3 + $0x28] sm:$0xff] %vm167, %v1996
      %2013 = vst.msk [vmem:[#allocation3 + $0x30] sm:$0xff] %vm167, %v1997
      %2014 = vst.msk [vmem:[#allocation3 + $0x38] sm:$0xff] %vm167, %v1998
      %2015 = vst.msk [vmem:[#allocation3 + $0x40] sm:$0xff] %vm167, %v1999
      %2016 = vst.msk [vmem:[#allocation3 + $0x48] sm:$0xff] %vm167, %v2000
      %2017 = vst.msk [vmem:[#allocation3 + $0x50] sm:$0xff] %vm167, %v2001
      %2018 = vst.msk [vmem:[#allocation3 + $0x58] sm:$0xff] %vm167, %v2002
      %2019 = vst.msk [vmem:[#allocation3 + $0x60] sm:$0xff] %vm167, %v2003
      %2020 = vst.msk [vmem:[#allocation3 + $0x68] sm:$0xff] %vm167, %v2004
      %2021 = vst.msk [vmem:[#allocation3 + $0x70] sm:$0xff] %vm167, %v2005
      %2022 = vst.msk [vmem:[#allocation3 + $0x78] sm:$0xff] %vm167, %v2006
      %s2023 = scalar_lea.vmem [#allocation8], 256
      %v2024 = vld [vmem:[%s2023] sm:$0xff]
      %v2025 = vld [vmem:[%s2023 + $0x8] sm:$0xff]
      %v2026 = vld [vmem:[%s2023 + $0x10] sm:$0xff]
      %v2027 = vld [vmem:[%s2023 + $0x18] sm:$0xff]
      %v2028 = vld [vmem:[%s2023 + $0x20] sm:$0xff]
      %v2029 = vld [vmem:[%s2023 + $0x28] sm:$0xff]
      %v2030 = vld [vmem:[%s2023 + $0x30] sm:$0xff]
      %v2031 = vld [vmem:[%s2023 + $0x38] sm:$0xff]
      %s2032 = scalar_lea.vmem %s6, 4
      %v2033 = vld [vmem:[%s2032] sm:$0x1]
      %v2034 = vld [vmem:[#allocation3] sm:$0xff]
      %v2035 = vld [vmem:[#allocation3 + $0x8] sm:$0xff]
      %v2036 = vld [vmem:[#allocation3 + $0x10] sm:$0xff]
      %v2037 = vld [vmem:[#allocation3 + $0x18] sm:$0xff]
      %v2038 = vld [vmem:[#allocation3 + $0x20] sm:$0xff]
      %v2039 = vld [vmem:[#allocation3 + $0x28] sm:$0xff]
      %v2040 = vld [vmem:[#allocation3 + $0x30] sm:$0xff]
      %v2041 = vld [vmem:[#allocation3 + $0x38] sm:$0xff]
      %v2042 = vld [vmem:[#allocation3 + $0x40] sm:$0xff]
      %v2043 = vld [vmem:[#allocation3 + $0x48] sm:$0xff]
      %v2044 = vld [vmem:[#allocation3 + $0x50] sm:$0xff]
      %v2045 = vld [vmem:[#allocation3 + $0x58] sm:$0xff]
      %v2046 = vld [vmem:[#allocation3 + $0x60] sm:$0xff]
      %v2047 = vld [vmem:[#allocation3 + $0x68] sm:$0xff]
      %v2048 = vld [vmem:[#allocation3 + $0x70] sm:$0xff]
      %v2049 = vld [vmem:[#allocation3 + $0x78] sm:$0xff]
      %v2051 = vperm.slane %v2033, 0
      %v2054 = vsel %vm167, %v2034, 0
      %v2057 = vsel %vm167, %v2035, 0
      %v2060 = vsel %vm167, %v2036, 0
      %v2063 = vsel %vm167, %v2037, 0
      %v2066 = vsel %vm167, %v2038, 0
      %v2069 = vsel %vm167, %v2039, 0
      %v2072 = vsel %vm167, %v2040, 0
      %v2075 = vsel %vm167, %v2041, 0
      %v2078 = vsel %vm167, %v2042, 0
      %v2081 = vsel %vm167, %v2043, 0
      %v2084 = vsel %vm167, %v2044, 0
      %v2087 = vsel %vm167, %v2045, 0
      %v2090 = vsel %vm167, %v2046, 0
      %v2093 = vsel %vm167, %v2047, 0
      %v2096 = vsel %vm167, %v2048, 0
      %v2099 = vsel %vm167, %v2049, 0
      %2101 = vmatpush.msra.mxu0 0.0
      %2102 = vmatpush.msra.mxu0 0.0
      %2103 = vmatpush.msra.mxu0 0.0
      %2104 = vmatpush.msra.mxu0 0.0
      %2105 = vmatpush.msra.mxu0 0.0
      %2106 = vmatpush.msra.mxu0 0.0
      %2107 = vmatpush.msra.mxu0 0.0
      %2108 = vmatpush.msra.mxu0 0.0
      %2109 = vmatpush.msra.mxu0 %v2031
      %2110 = vmatpush.msra.mxu0 %v2030
      %2111 = vmatpush.msra.mxu0 %v2029
      %2112 = vmatpush.msra.mxu0 %v2028
      %2113 = vmatpush.msra.mxu0 %v2027
      %2114 = vmatpush.msra.mxu0 %v2026
      %2115 = vmatpush.msra.mxu0 %v2025
      %2116 = vmatpush.msra.mxu0 %v2024
      %2117 = vmatmul.f32.gmra.mxu0 %v2054
      %v2118 = vpop.f32.mrf.mxu0
      %v2119 = vadd.f32 %v2051, %v2118
      %2120 = vmatmul.f32.gmra.mxu0 %v2057
      %v2121 = vpop.f32.mrf.mxu0
      %v2122 = vadd.f32 %v2051, %v2121
      %2123 = vmatmul.f32.gmra.mxu0 %v2060
      %v2124 = vpop.f32.mrf.mxu0
      %v2125 = vadd.f32 %v2051, %v2124
      %2126 = vmatmul.f32.gmra.mxu0 %v2063
      %v2127 = vpop.f32.mrf.mxu0
      %v2128 = vadd.f32 %v2051, %v2127
      %2129 = vmatmul.f32.gmra.mxu0 %v2066
      %v2130 = vpop.f32.mrf.mxu0
      %v2131 = vadd.f32 %v2051, %v2130
      %2132 = vmatmul.f32.gmra.mxu0 %v2069
      %v2133 = vpop.f32.mrf.mxu0
      %v2134 = vadd.f32 %v2051, %v2133
      %2135 = vmatmul.f32.gmra.mxu0 %v2072
      %v2136 = vpop.f32.mrf.mxu0
      %v2137 = vadd.f32 %v2051, %v2136
      %2138 = vmatmul.f32.gmra.mxu0 %v2075
      %v2139 = vpop.f32.mrf.mxu0
      %v2140 = vadd.f32 %v2051, %v2139
      %2141 = vmatmul.f32.gmra.mxu0 %v2078
      %v2142 = vpop.f32.mrf.mxu0
      %v2143 = vadd.f32 %v2051, %v2142
      %2144 = vmatmul.f32.gmra.mxu0 %v2081
      %v2145 = vpop.f32.mrf.mxu0
      %v2146 = vadd.f32 %v2051, %v2145
      %2147 = vmatmul.f32.gmra.mxu0 %v2084
      %v2148 = vpop.f32.mrf.mxu0
      %v2149 = vadd.f32 %v2051, %v2148
      %2150 = vmatmul.f32.gmra.mxu0 %v2087
      %v2151 = vpop.f32.mrf.mxu0
      %v2152 = vadd.f32 %v2051, %v2151
      %2153 = vmatmul.f32.gmra.mxu0 %v2090
      %v2154 = vpop.f32.mrf.mxu0
      %v2155 = vadd.f32 %v2051, %v2154
      %2156 = vmatmul.f32.gmra.mxu0 %v2093
      %v2157 = vpop.f32.mrf.mxu0
      %v2158 = vadd.f32 %v2051, %v2157
      %2159 = vmatmul.f32.gmra.mxu0 %v2096
      %v2160 = vpop.f32.mrf.mxu0
      %v2161 = vadd.f32 %v2051, %v2160
      %2162 = vmatmul.f32.gmra.mxu0 %v2099
      %v2163 = vpop.f32.mrf.mxu0
      %v2164 = vadd.f32 %v2051, %v2163
      %2165 = vdwg.mxu0
      %2166 = vst.msk [vmem:[#allocation4] sm:$0xff] %vm167, %v2119
      %2167 = vst.msk [vmem:[#allocation4 + $0x8] sm:$0xff] %vm167, %v2122
      %2168 = vst.msk [vmem:[#allocation4 + $0x10] sm:$0xff] %vm167, %v2125
      %2169 = vst.msk [vmem:[#allocation4 + $0x18] sm:$0xff] %vm167, %v2128
      %2170 = vst.msk [vmem:[#allocation4 + $0x20] sm:$0xff] %vm167, %v2131
      %2171 = vst.msk [vmem:[#allocation4 + $0x28] sm:$0xff] %vm167, %v2134
      %2172 = vst.msk [vmem:[#allocation4 + $0x30] sm:$0xff] %vm167, %v2137
      %2173 = vst.msk [vmem:[#allocation4 + $0x38] sm:$0xff] %vm167, %v2140
      %2174 = vst.msk [vmem:[#allocation4 + $0x40] sm:$0xff] %vm167, %v2143
      %2175 = vst.msk [vmem:[#allocation4 + $0x48] sm:$0xff] %vm167, %v2146
      %2176 = vst.msk [vmem:[#allocation4 + $0x50] sm:$0xff] %vm167, %v2149
      %2177 = vst.msk [vmem:[#allocation4 + $0x58] sm:$0xff] %vm167, %v2152
      %2178 = vst.msk [vmem:[#allocation4 + $0x60] sm:$0xff] %vm167, %v2155
      %2179 = vst.msk [vmem:[#allocation4 + $0x68] sm:$0xff] %vm167, %v2158
      %2180 = vst.msk [vmem:[#allocation4 + $0x70] sm:$0xff] %vm167, %v2161
      %2181 = vst.msk [vmem:[#allocation4 + $0x78] sm:$0xff] %vm167, %v2164
      %v2182 = vmul.f32 %v2119, %v604
      %v2183 = vmul.f32 %v2122, %v605
      %v2184 = vmul.f32 %v2125, %v606
      %v2185 = vmul.f32 %v2128, %v607
      %v2186 = vmul.f32 %v2131, %v608
      %v2187 = vmul.f32 %v2134, %v609
      %v2188 = vmul.f32 %v2137, %v610
      %v2189 = vmul.f32 %v2140, %v611
      %v2190 = vmul.f32 %v2143, %v612
      %v2191 = vmul.f32 %v2146, %v613
      %v2192 = vmul.f32 %v2149, %v614
      %v2193 = vmul.f32 %v2152, %v615
      %v2194 = vmul.f32 %v2155, %v616
      %v2195 = vmul.f32 %v2158, %v617
      %v2196 = vmul.f32 %v2161, %v618
      %v2197 = vmul.f32 %v2164, %v619
      %v2198 = vsel %vm167, %v2182, 0.0
      %v2199 = vsel %vm167, %v2183, 0.0
      %v2200 = vadd.f32 %v2198, %v2199
      %v2201 = vsel %vm167, %v2184, 0.0
      %v2202 = vadd.f32 %v2200, %v2201
      %v2203 = vsel %vm167, %v2185, 0.0
      %v2204 = vadd.f32 %v2202, %v2203
      %v2205 = vsel %vm167, %v2186, 0.0
      %v2206 = vadd.f32 %v2204, %v2205
      %v2207 = vsel %vm167, %v2187, 0.0
      %v2208 = vadd.f32 %v2206, %v2207
      %v2209 = vsel %vm167, %v2188, 0.0
      %v2210 = vadd.f32 %v2208, %v2209
      %v2211 = vsel %vm167, %v2189, 0.0
      %v2212 = vadd.f32 %v2210, %v2211
      %v2213 = vsel %vm167, %v2190, 0.0
      %v2214 = vadd.f32 %v2212, %v2213
      %v2215 = vsel %vm167, %v2191, 0.0
      %v2216 = vadd.f32 %v2214, %v2215
      %v2217 = vsel %vm167, %v2192, 0.0
      %v2218 = vadd.f32 %v2216, %v2217
      %v2219 = vsel %vm167, %v2193, 0.0
      %v2220 = vadd.f32 %v2218, %v2219
      %v2221 = vsel %vm167, %v2194, 0.0
      %v2222 = vadd.f32 %v2220, %v2221
      %v2223 = vsel %vm167, %v2195, 0.0
      %v2224 = vadd.f32 %v2222, %v2223
      %v2225 = vsel %vm167, %v2196, 0.0
      %v2226 = vadd.f32 %v2224, %v2225
      %v2227 = vsel %vm167, %v2197, 0.0
      %v2228 = vadd.f32 %v2226, %v2227
      %v2229 = vrot.slane %v2228, 4
      %v2230 = vadd.f32 %v2228, %v2229
      %v2231 = vrot.slane %v2230, 2
      %v2232 = vadd.f32 %v2230, %v2231
      %v2233 = vrot.slane %v2232, 1
      %v2234 = vadd.f32 %v2232, %v2233
      %v2235 = vadd.f32 %v2234, 0.0
      %v2236 = vmul.f32 %v2182, %v2119
      %v2237 = vmul.f32 %v2183, %v2122
      %v2238 = vmul.f32 %v2184, %v2125
      %v2239 = vmul.f32 %v2185, %v2128
      %v2240 = vmul.f32 %v2186, %v2131
      %v2241 = vmul.f32 %v2187, %v2134
      %v2242 = vmul.f32 %v2188, %v2137
      %v2243 = vmul.f32 %v2189, %v2140
      %v2244 = vmul.f32 %v2190, %v2143
      %v2245 = vmul.f32 %v2191, %v2146
      %v2246 = vmul.f32 %v2192, %v2149
      %v2247 = vmul.f32 %v2193, %v2152
      %v2248 = vmul.f32 %v2194, %v2155
      %v2249 = vmul.f32 %v2195, %v2158
      %v2250 = vmul.f32 %v2196, %v2161
      %v2251 = vmul.f32 %v2197, %v2164
      %v2252 = vsel %vm167, %v2236, 0.0
      %v2253 = vsel %vm167, %v2237, 0.0
      %v2254 = vadd.f32 %v2252, %v2253
      %v2255 = vsel %vm167, %v2238, 0.0
      %v2256 = vadd.f32 %v2254, %v2255
      %v2257 = vsel %vm167, %v2239, 0.0
      %v2258 = vadd.f32 %v2256, %v2257
      %v2259 = vsel %vm167, %v2240, 0.0
      %v2260 = vadd.f32 %v2258, %v2259
      %v2261 = vsel %vm167, %v2241, 0.0
      %v2262 = vadd.f32 %v2260, %v2261
      %v2263 = vsel %vm167, %v2242, 0.0
      %v2264 = vadd.f32 %v2262, %v2263
      %v2265 = vsel %vm167, %v2243, 0.0
      %v2266 = vadd.f32 %v2264, %v2265
      %v2267 = vsel %vm167, %v2244, 0.0
      %v2268 = vadd.f32 %v2266, %v2267
      %v2269 = vsel %vm167, %v2245, 0.0
      %v2270 = vadd.f32 %v2268, %v2269
      %v2271 = vsel %vm167, %v2246, 0.0
      %v2272 = vadd.f32 %v2270, %v2271
      %v2273 = vsel %vm167, %v2247, 0.0
      %v2274 = vadd.f32 %v2272, %v2273
      %v2275 = vsel %vm167, %v2248, 0.0
      %v2276 = vadd.f32 %v2274, %v2275
      %v2277 = vsel %vm167, %v2249, 0.0
      %v2278 = vadd.f32 %v2276, %v2277
      %v2279 = vsel %vm167, %v2250, 0.0
      %v2280 = vadd.f32 %v2278, %v2279
      %v2281 = vsel %vm167, %v2251, 0.0
      %v2282 = vadd.f32 %v2280, %v2281
      %v2283 = vrot.slane %v2282, 4
      %v2284 = vadd.f32 %v2282, %v2283
      %v2285 = vrot.slane %v2284, 2
      %v2286 = vadd.f32 %v2284, %v2285
      %v2287 = vrot.slane %v2286, 1
      %v2288 = vadd.f32 %v2286, %v2287
      %v2289 = vadd.f32 %v2288, 0.0
      %s2290 = scalar_lea.vmem %s7, 4
      %v2291 = vld [vmem:[%s2290] sm:$0x1]
      %s2292 = scalar_lea.vmem %s8, 4
      %v2293 = vld [vmem:[%s2292] sm:$0x1]
      %v2294 = vmul.f32 %v2235, 0.125
      %v2295 = vmul.f32 %v2289, 0.125
      %v2296 = vmul.f32 %v2294, %v2294
      %v2297 = vsub.f32 %v2295, %v2296
      %v2298 = vadd.f32 %v2297, 1e-05
      %v2299 = vrsqrt.pop %v2298
      %v2300 = vmul.f32 %v2299, %v2298
      %v2301 = vmul.f32 %v2300, %v2299
      %v2302 = vmul.f32 0.5, %v2301
      %v2303 = vsub.f32 1.5, %v2302
      %v2304 = vmul.f32 %v2299, %v2303
      %vm2305 = vweird.f32 %v2298
      %vm2306 = vweird.f32 %v2299
      %vm2307 = vmor %vm2305, %vm2306
      %v2308 = vsel %vm2307, %v2299, %v2304
      %v2309 = vmul.f32 %v2291, %v2308
      %v2310 = vmul.f32 %v2294, %v2309
      %v2311 = vsub.f32 %v2293, %v2310
      %v2312 = vld [vmem:[#allocation4] sm:$0xff]
      %v2313 = vld [vmem:[#allocation4 + $0x8] sm:$0xff]
      %v2314 = vld [vmem:[#allocation4 + $0x10] sm:$0xff]
      %v2315 = vld [vmem:[#allocation4 + $0x18] sm:$0xff]
      %v2316 = vld [vmem:[#allocation4 + $0x20] sm:$0xff]
      %v2317 = vld [vmem:[#allocation4 + $0x28] sm:$0xff]
      %v2318 = vld [vmem:[#allocation4 + $0x30] sm:$0xff]
      %v2319 = vld [vmem:[#allocation4 + $0x38] sm:$0xff]
      %v2320 = vld [vmem:[#allocation4 + $0x40] sm:$0xff]
      %v2321 = vld [vmem:[#allocation4 + $0x48] sm:$0xff]
      %v2322 = vld [vmem:[#allocation4 + $0x50] sm:$0xff]
      %v2323 = vld [vmem:[#allocation4 + $0x58] sm:$0xff]
      %v2324 = vld [vmem:[#allocation4 + $0x60] sm:$0xff]
      %v2325 = vld [vmem:[#allocation4 + $0x68] sm:$0xff]
      %v2326 = vld [vmem:[#allocation4 + $0x70] sm:$0xff]
      %v2327 = vld [vmem:[#allocation4 + $0x78] sm:$0xff]
      %v2329 = vperm.slane %v2309, 0
      %v2331 = vmul.f32 %v2312, %v2329
      %v2332 = vmul.f32 %v2313, %v2329
      %v2333 = vmul.f32 %v2314, %v2329
      %v2334 = vmul.f32 %v2315, %v2329
      %v2335 = vmul.f32 %v2316, %v2329
      %v2336 = vmul.f32 %v2317, %v2329
      %v2337 = vmul.f32 %v2318, %v2329
      %v2338 = vmul.f32 %v2319, %v2329
      %v2339 = vmul.f32 %v2320, %v2329
      %v2340 = vmul.f32 %v2321, %v2329
      %v2341 = vmul.f32 %v2322, %v2329
      %v2342 = vmul.f32 %v2323, %v2329
      %v2343 = vmul.f32 %v2324, %v2329
      %v2344 = vmul.f32 %v2325, %v2329
      %v2345 = vmul.f32 %v2326, %v2329
      %v2346 = vmul.f32 %v2327, %v2329
      %v2348 = vperm.slane %v2311, 0
      %v2350 = vadd.f32 %v2331, %v2348
      %v2351 = vadd.f32 %v2332, %v2348
      %v2352 = vadd.f32 %v2333, %v2348
      %v2353 = vadd.f32 %v2334, %v2348
      %v2354 = vadd.f32 %v2335, %v2348
      %v2355 = vadd.f32 %v2336, %v2348
      %v2356 = vadd.f32 %v2337, %v2348
      %v2357 = vadd.f32 %v2338, %v2348
      %v2358 = vadd.f32 %v2339, %v2348
      %v2359 = vadd.f32 %v2340, %v2348
      %v2360 = vadd.f32 %v2341, %v2348
      %v2361 = vadd.f32 %v2342, %v2348
      %v2362 = vadd.f32 %v2343, %v2348
      %v2363 = vadd.f32 %v2344, %v2348
      %v2364 = vadd.f32 %v2345, %v2348
      %v2365 = vadd.f32 %v2346, %v2348
      %v2366 = vmax.f32 %v2350, 0.0
      %v2367 = vmax.f32 %v2351, 0.0
      %v2368 = vmax.f32 %v2352, 0.0
      %v2369 = vmax.f32 %v2353, 0.0
      %v2370 = vmax.f32 %v2354, 0.0
      %v2371 = vmax.f32 %v2355, 0.0
      %v2372 = vmax.f32 %v2356, 0.0
      %v2373 = vmax.f32 %v2357, 0.0
      %v2374 = vmax.f32 %v2358, 0.0
      %v2375 = vmax.f32 %v2359, 0.0
      %v2376 = vmax.f32 %v2360, 0.0
      %v2377 = vmax.f32 %v2361, 0.0
      %v2378 = vmax.f32 %v2362, 0.0
      %v2379 = vmax.f32 %v2363, 0.0
      %v2380 = vmax.f32 %v2364, 0.0
      %v2381 = vmax.f32 %v2365, 0.0
      %2382 = vst.msk [vmem:[#allocation4] sm:$0xff] %vm167, %v2366
      %2383 = vst.msk [vmem:[#allocation4 + $0x8] sm:$0xff] %vm167, %v2367
      %2384 = vst.msk [vmem:[#allocation4 + $0x10] sm:$0xff] %vm167, %v2368
      %2385 = vst.msk [vmem:[#allocation4 + $0x18] sm:$0xff] %vm167, %v2369
      %2386 = vst.msk [vmem:[#allocation4 + $0x20] sm:$0xff] %vm167, %v2370
      %2387 = vst.msk [vmem:[#allocation4 + $0x28] sm:$0xff] %vm167, %v2371
      %2388 = vst.msk [vmem:[#allocation4 + $0x30] sm:$0xff] %vm167, %v2372
      %2389 = vst.msk [vmem:[#allocation4 + $0x38] sm:$0xff] %vm167, %v2373
      %2390 = vst.msk [vmem:[#allocation4 + $0x40] sm:$0xff] %vm167, %v2374
      %2391 = vst.msk [vmem:[#allocation4 + $0x48] sm:$0xff] %vm167, %v2375
      %2392 = vst.msk [vmem:[#allocation4 + $0x50] sm:$0xff] %vm167, %v2376
      %2393 = vst.msk [vmem:[#allocation4 + $0x58] sm:$0xff] %vm167, %v2377
      %2394 = vst.msk [vmem:[#allocation4 + $0x60] sm:$0xff] %vm167, %v2378
      %2395 = vst.msk [vmem:[#allocation4 + $0x68] sm:$0xff] %vm167, %v2379
      %2396 = vst.msk [vmem:[#allocation4 + $0x70] sm:$0xff] %vm167, %v2380
      %2397 = vst.msk [vmem:[#allocation4 + $0x78] sm:$0xff] %vm167, %v2381
      %s2398 = scalar_lea.vmem [#allocation8], 320
      %v2399 = vld [vmem:[%s2398] sm:$0xff]
      %v2400 = vld [vmem:[%s2398 + $0x8] sm:$0xff]
      %v2401 = vld [vmem:[%s2398 + $0x10] sm:$0xff]
      %v2402 = vld [vmem:[%s2398 + $0x18] sm:$0xff]
      %v2403 = vld [vmem:[%s2398 + $0x20] sm:$0xff]
      %v2404 = vld [vmem:[%s2398 + $0x28] sm:$0xff]
      %v2405 = vld [vmem:[%s2398 + $0x30] sm:$0xff]
      %v2406 = vld [vmem:[%s2398 + $0x38] sm:$0xff]
      %s2407 = scalar_lea.vmem %s6, 5
      %v2408 = vld [vmem:[%s2407] sm:$0x1]
      %v2409 = vld [vmem:[#allocation4] sm:$0xff]
      %v2410 = vld [vmem:[#allocation4 + $0x8] sm:$0xff]
      %v2411 = vld [vmem:[#allocation4 + $0x10] sm:$0xff]
      %v2412 = vld [vmem:[#allocation4 + $0x18] sm:$0xff]
      %v2413 = vld [vmem:[#allocation4 + $0x20] sm:$0xff]
      %v2414 = vld [vmem:[#allocation4 + $0x28] sm:$0xff]
      %v2415 = vld [vmem:[#allocation4 + $0x30] sm:$0xff]
      %v2416 = vld [vmem:[#allocation4 + $0x38] sm:$0xff]
      %v2417 = vld [vmem:[#allocation4 + $0x40] sm:$0xff]
      %v2418 = vld [vmem:[#allocation4 + $0x48] sm:$0xff]
      %v2419 = vld [vmem:[#allocation4 + $0x50] sm:$0xff]
      %v2420 = vld [vmem:[#allocation4 + $0x58] sm:$0xff]
      %v2421 = vld [vmem:[#allocation4 + $0x60] sm:$0xff]
      %v2422 = vld [vmem:[#allocation4 + $0x68] sm:$0xff]
      %v2423 = vld [vmem:[#allocation4 + $0x70] sm:$0xff]
      %v2424 = vld [vmem:[#allocation4 + $0x78] sm:$0xff]
      %v2426 = vperm.slane %v2408, 0
      %v2429 = vsel %vm167, %v2409, 0
      %v2432 = vsel %vm167, %v2410, 0
      %v2435 = vsel %vm167, %v2411, 0
      %v2438 = vsel %vm167, %v2412, 0
      %v2441 = vsel %vm167, %v2413, 0
      %v2444 = vsel %vm167, %v2414, 0
      %v2447 = vsel %vm167, %v2415, 0
      %v2450 = vsel %vm167, %v2416, 0
      %v2453 = vsel %vm167, %v2417, 0
      %v2456 = vsel %vm167, %v2418, 0
      %v2459 = vsel %vm167, %v2419, 0
      %v2462 = vsel %vm167, %v2420, 0
      %v2465 = vsel %vm167, %v2421, 0
      %v2468 = vsel %vm167, %v2422, 0
      %v2471 = vsel %vm167, %v2423, 0
      %v2474 = vsel %vm167, %v2424, 0
      %2476 = vmatpush.msra.mxu0 0.0
      %2477 = vmatpush.msra.mxu0 0.0
      %2478 = vmatpush.msra.mxu0 0.0
      %2479 = vmatpush.msra.mxu0 0.0
      %2480 = vmatpush.msra.mxu0 0.0
      %2481 = vmatpush.msra.mxu0 0.0
      %2482 = vmatpush.msra.mxu0 0.0
      %2483 = vmatpush.msra.mxu0 0.0
      %2484 = vmatpush.msra.mxu0 %v2406
      %2485 = vmatpush.msra.mxu0 %v2405
      %2486 = vmatpush.msra.mxu0 %v2404
      %2487 = vmatpush.msra.mxu0 %v2403
      %2488 = vmatpush.msra.mxu0 %v2402
      %2489 = vmatpush.msra.mxu0 %v2401
      %2490 = vmatpush.msra.mxu0 %v2400
      %2491 = vmatpush.msra.mxu0 %v2399
      %2492 = vmatmul.f32.gmra.mxu0 %v2429
      %v2493 = vpop.f32.mrf.mxu0
      %v2494 = vadd.f32 %v2426, %v2493
      %2495 = vmatmul.f32.gmra.mxu0 %v2432
      %v2496 = vpop.f32.mrf.mxu0
      %v2497 = vadd.f32 %v2426, %v2496
      %2498 = vmatmul.f32.gmra.mxu0 %v2435
      %v2499 = vpop.f32.mrf.mxu0
      %v2500 = vadd.f32 %v2426, %v2499
      %2501 = vmatmul.f32.gmra.mxu0 %v2438
      %v2502 = vpop.f32.mrf.mxu0
      %v2503 = vadd.f32 %v2426, %v2502
      %2504 = vmatmul.f32.gmra.mxu0 %v2441
      %v2505 = vpop.f32.mrf.mxu0
      %v2506 = vadd.f32 %v2426, %v2505
      %2507 = vmatmul.f32.gmra.mxu0 %v2444
      %v2508 = vpop.f32.mrf.mxu0
      %v2509 = vadd.f32 %v2426, %v2508
      %2510 = vmatmul.f32.gmra.mxu0 %v2447
      %v2511 = vpop.f32.mrf.mxu0
      %v2512 = vadd.f32 %v2426, %v2511
      %2513 = vmatmul.f32.gmra.mxu0 %v2450
      %v2514 = vpop.f32.mrf.mxu0
      %v2515 = vadd.f32 %v2426, %v2514
      %2516 = vmatmul.f32.gmra.mxu0 %v2453
      %v2517 = vpop.f32.mrf.mxu0
      %v2518 = vadd.f32 %v2426, %v2517
      %2519 = vmatmul.f32.gmra.mxu0 %v2456
      %v2520 = vpop.f32.mrf.mxu0
      %v2521 = vadd.f32 %v2426, %v2520
      %2522 = vmatmul.f32.gmra.mxu0 %v2459
      %v2523 = vpop.f32.mrf.mxu0
      %v2524 = vadd.f32 %v2426, %v2523
      %2525 = vmatmul.f32.gmra.mxu0 %v2462
      %v2526 = vpop.f32.mrf.mxu0
      %v2527 = vadd.f32 %v2426, %v2526
      %2528 = vmatmul.f32.gmra.mxu0 %v2465
      %v2529 = vpop.f32.mrf.mxu0
      %v2530 = vadd.f32 %v2426, %v2529
      %2531 = vmatmul.f32.gmra.mxu0 %v2468
      %v2532 = vpop.f32.mrf.mxu0
      %v2533 = vadd.f32 %v2426, %v2532
      %2534 = vmatmul.f32.gmra.mxu0 %v2471
      %v2535 = vpop.f32.mrf.mxu0
      %v2536 = vadd.f32 %v2426, %v2535
      %2537 = vmatmul.f32.gmra.mxu0 %v2474
      %v2538 = vpop.f32.mrf.mxu0
      %v2539 = vadd.f32 %v2426, %v2538
      %2540 = vdwg.mxu0
      %2541 = vst.msk [vmem:[#allocation4] sm:$0xff] %vm167, %v2494
      %2542 = vst.msk [vmem:[#allocation4 + $0x8] sm:$0xff] %vm167, %v2497
      %2543 = vst.msk [vmem:[#allocation4 + $0x10] sm:$0xff] %vm167, %v2500
      %2544 = vst.msk [vmem:[#allocation4 + $0x18] sm:$0xff] %vm167, %v2503
      %2545 = vst.msk [vmem:[#allocation4 + $0x20] sm:$0xff] %vm167, %v2506
      %2546 = vst.msk [vmem:[#allocation4 + $0x28] sm:$0xff] %vm167, %v2509
      %2547 = vst.msk [vmem:[#allocation4 + $0x30] sm:$0xff] %vm167, %v2512
      %2548 = vst.msk [vmem:[#allocation4 + $0x38] sm:$0xff] %vm167, %v2515
      %2549 = vst.msk [vmem:[#allocation4 + $0x40] sm:$0xff] %vm167, %v2518
      %2550 = vst.msk [vmem:[#allocation4 + $0x48] sm:$0xff] %vm167, %v2521
      %2551 = vst.msk [vmem:[#allocation4 + $0x50] sm:$0xff] %vm167, %v2524
      %2552 = vst.msk [vmem:[#allocation4 + $0x58] sm:$0xff] %vm167, %v2527
      %2553 = vst.msk [vmem:[#allocation4 + $0x60] sm:$0xff] %vm167, %v2530
      %2554 = vst.msk [vmem:[#allocation4 + $0x68] sm:$0xff] %vm167, %v2533
      %2555 = vst.msk [vmem:[#allocation4 + $0x70] sm:$0xff] %vm167, %v2536
      %2556 = vst.msk [vmem:[#allocation4 + $0x78] sm:$0xff] %vm167, %v2539
      %v2557 = vmul.f32 %v2494, %v604
      %v2558 = vmul.f32 %v2497, %v605
      %v2559 = vmul.f32 %v2500, %v606
      %v2560 = vmul.f32 %v2503, %v607
      %v2561 = vmul.f32 %v2506, %v608
      %v2562 = vmul.f32 %v2509, %v609
      %v2563 = vmul.f32 %v2512, %v610
      %v2564 = vmul.f32 %v2515, %v611
      %v2565 = vmul.f32 %v2518, %v612
      %v2566 = vmul.f32 %v2521, %v613
      %v2567 = vmul.f32 %v2524, %v614
      %v2568 = vmul.f32 %v2527, %v615
      %v2569 = vmul.f32 %v2530, %v616
      %v2570 = vmul.f32 %v2533, %v617
      %v2571 = vmul.f32 %v2536, %v618
      %v2572 = vmul.f32 %v2539, %v619
      %v2573 = vsel %vm167, %v2557, 0.0
      %v2574 = vsel %vm167, %v2558, 0.0
      %v2575 = vadd.f32 %v2573, %v2574
      %v2576 = vsel %vm167, %v2559, 0.0
      %v2577 = vadd.f32 %v2575, %v2576
      %v2578 = vsel %vm167, %v2560, 0.0
      %v2579 = vadd.f32 %v2577, %v2578
      %v2580 = vsel %vm167, %v2561, 0.0
      %v2581 = vadd.f32 %v2579, %v2580
      %v2582 = vsel %vm167, %v2562, 0.0
      %v2583 = vadd.f32 %v2581, %v2582
      %v2584 = vsel %vm167, %v2563, 0.0
      %v2585 = vadd.f32 %v2583, %v2584
      %v2586 = vsel %vm167, %v2564, 0.0
      %v2587 = vadd.f32 %v2585, %v2586
      %v2588 = vsel %vm167, %v2565, 0.0
      %v2589 = vadd.f32 %v2587, %v2588
      %v2590 = vsel %vm167, %v2566, 0.0
      %v2591 = vadd.f32 %v2589, %v2590
      %v2592 = vsel %vm167, %v2567, 0.0
      %v2593 = vadd.f32 %v2591, %v2592
      %v2594 = vsel %vm167, %v2568, 0.0
      %v2595 = vadd.f32 %v2593, %v2594
      %v2596 = vsel %vm167, %v2569, 0.0
      %v2597 = vadd.f32 %v2595, %v2596
      %v2598 = vsel %vm167, %v2570, 0.0
      %v2599 = vadd.f32 %v2597, %v2598
      %v2600 = vsel %vm167, %v2571, 0.0
      %v2601 = vadd.f32 %v2599, %v2600
      %v2602 = vsel %vm167, %v2572, 0.0
      %v2603 = vadd.f32 %v2601, %v2602
      %v2604 = vrot.slane %v2603, 4
      %v2605 = vadd.f32 %v2603, %v2604
      %v2606 = vrot.slane %v2605, 2
      %v2607 = vadd.f32 %v2605, %v2606
      %v2608 = vrot.slane %v2607, 1
      %v2609 = vadd.f32 %v2607, %v2608
      %v2610 = vadd.f32 %v2609, 0.0
      %v2611 = vmul.f32 %v2557, %v2494
      %v2612 = vmul.f32 %v2558, %v2497
      %v2613 = vmul.f32 %v2559, %v2500
      %v2614 = vmul.f32 %v2560, %v2503
      %v2615 = vmul.f32 %v2561, %v2506
      %v2616 = vmul.f32 %v2562, %v2509
      %v2617 = vmul.f32 %v2563, %v2512
      %v2618 = vmul.f32 %v2564, %v2515
      %v2619 = vmul.f32 %v2565, %v2518
      %v2620 = vmul.f32 %v2566, %v2521
      %v2621 = vmul.f32 %v2567, %v2524
      %v2622 = vmul.f32 %v2568, %v2527
      %v2623 = vmul.f32 %v2569, %v2530
      %v2624 = vmul.f32 %v2570, %v2533
      %v2625 = vmul.f32 %v2571, %v2536
      %v2626 = vmul.f32 %v2572, %v2539
      %v2627 = vsel %vm167, %v2611, 0.0
      %v2628 = vsel %vm167, %v2612, 0.0
      %v2629 = vadd.f32 %v2627, %v2628
      %v2630 = vsel %vm167, %v2613, 0.0
      %v2631 = vadd.f32 %v2629, %v2630
      %v2632 = vsel %vm167, %v2614, 0.0
      %v2633 = vadd.f32 %v2631, %v2632
      %v2634 = vsel %vm167, %v2615, 0.0
      %v2635 = vadd.f32 %v2633, %v2634
      %v2636 = vsel %vm167, %v2616, 0.0
      %v2637 = vadd.f32 %v2635, %v2636
      %v2638 = vsel %vm167, %v2617, 0.0
      %v2639 = vadd.f32 %v2637, %v2638
      %v2640 = vsel %vm167, %v2618, 0.0
      %v2641 = vadd.f32 %v2639, %v2640
      %v2642 = vsel %vm167, %v2619, 0.0
      %v2643 = vadd.f32 %v2641, %v2642
      %v2644 = vsel %vm167, %v2620, 0.0
      %v2645 = vadd.f32 %v2643, %v2644
      %v2646 = vsel %vm167, %v2621, 0.0
      %v2647 = vadd.f32 %v2645, %v2646
      %v2648 = vsel %vm167, %v2622, 0.0
      %v2649 = vadd.f32 %v2647, %v2648
      %v2650 = vsel %vm167, %v2623, 0.0
      %v2651 = vadd.f32 %v2649, %v2650
      %v2652 = vsel %vm167, %v2624, 0.0
      %v2653 = vadd.f32 %v2651, %v2652
      %v2654 = vsel %vm167, %v2625, 0.0
      %v2655 = vadd.f32 %v2653, %v2654
      %v2656 = vsel %vm167, %v2626, 0.0
      %v2657 = vadd.f32 %v2655, %v2656
      %v2658 = vrot.slane %v2657, 4
      %v2659 = vadd.f32 %v2657, %v2658
      %v2660 = vrot.slane %v2659, 2
      %v2661 = vadd.f32 %v2659, %v2660
      %v2662 = vrot.slane %v2661, 1
      %v2663 = vadd.f32 %v2661, %v2662
      %v2664 = vadd.f32 %v2663, 0.0
      %s2665 = scalar_lea.vmem %s7, 5
      %v2666 = vld [vmem:[%s2665] sm:$0x1]
      %s2667 = scalar_lea.vmem %s8, 5
      %v2668 = vld [vmem:[%s2667] sm:$0x1]
      %v2669 = vmul.f32 %v2610, 0.125
      %v2670 = vmul.f32 %v2664, 0.125
      %v2671 = vmul.f32 %v2669, %v2669
      %v2672 = vsub.f32 %v2670, %v2671
      %v2673 = vadd.f32 %v2672, 1e-05
      %v2674 = vrsqrt.pop %v2673
      %v2675 = vmul.f32 %v2674, %v2673
      %v2676 = vmul.f32 %v2675, %v2674
      %v2677 = vmul.f32 0.5, %v2676
      %v2678 = vsub.f32 1.5, %v2677
      %v2679 = vmul.f32 %v2674, %v2678
      %vm2680 = vweird.f32 %v2673
      %vm2681 = vweird.f32 %v2674
      %vm2682 = vmor %vm2680, %vm2681
      %v2683 = vsel %vm2682, %v2674, %v2679
      %v2684 = vmul.f32 %v2666, %v2683
      %v2685 = vmul.f32 %v2669, %v2684
      %v2686 = vsub.f32 %v2668, %v2685
      %v2687 = vld [vmem:[#allocation4] sm:$0xff]
      %v2688 = vld [vmem:[#allocation4 + $0x8] sm:$0xff]
      %v2689 = vld [vmem:[#allocation4 + $0x10] sm:$0xff]
      %v2690 = vld [vmem:[#allocation4 + $0x18] sm:$0xff]
      %v2691 = vld [vmem:[#allocation4 + $0x20] sm:$0xff]
      %v2692 = vld [vmem:[#allocation4 + $0x28] sm:$0xff]
      %v2693 = vld [vmem:[#allocation4 + $0x30] sm:$0xff]
      %v2694 = vld [vmem:[#allocation4 + $0x38] sm:$0xff]
      %v2695 = vld [vmem:[#allocation4 + $0x40] sm:$0xff]
      %v2696 = vld [vmem:[#allocation4 + $0x48] sm:$0xff]
      %v2697 = vld [vmem:[#allocation4 + $0x50] sm:$0xff]
      %v2698 = vld [vmem:[#allocation4 + $0x58] sm:$0xff]
      %v2699 = vld [vmem:[#allocation4 + $0x60] sm:$0xff]
      %v2700 = vld [vmem:[#allocation4 + $0x68] sm:$0xff]
      %v2701 = vld [vmem:[#allocation4 + $0x70] sm:$0xff]
      %v2702 = vld [vmem:[#allocation4 + $0x78] sm:$0xff]
      %v2704 = vperm.slane %v2684, 0
      %v2706 = vmul.f32 %v2687, %v2704
      %v2707 = vmul.f32 %v2688, %v2704
      %v2708 = vmul.f32 %v2689, %v2704
      %v2709 = vmul.f32 %v2690, %v2704
      %v2710 = vmul.f32 %v2691, %v2704
      %v2711 = vmul.f32 %v2692, %v2704
      %v2712 = vmul.f32 %v2693, %v2704
      %v2713 = vmul.f32 %v2694, %v2704
      %v2714 = vmul.f32 %v2695, %v2704
      %v2715 = vmul.f32 %v2696, %v2704
      %v2716 = vmul.f32 %v2697, %v2704
      %v2717 = vmul.f32 %v2698, %v2704
      %v2718 = vmul.f32 %v2699, %v2704
      %v2719 = vmul.f32 %v2700, %v2704
      %v2720 = vmul.f32 %v2701, %v2704
      %v2721 = vmul.f32 %v2702, %v2704
      %v2723 = vperm.slane %v2686, 0
      %v2725 = vadd.f32 %v2706, %v2723
      %v2726 = vadd.f32 %v2707, %v2723
      %v2727 = vadd.f32 %v2708, %v2723
      %v2728 = vadd.f32 %v2709, %v2723
      %v2729 = vadd.f32 %v2710, %v2723
      %v2730 = vadd.f32 %v2711, %v2723
      %v2731 = vadd.f32 %v2712, %v2723
      %v2732 = vadd.f32 %v2713, %v2723
      %v2733 = vadd.f32 %v2714, %v2723
      %v2734 = vadd.f32 %v2715, %v2723
      %v2735 = vadd.f32 %v2716, %v2723
      %v2736 = vadd.f32 %v2717, %v2723
      %v2737 = vadd.f32 %v2718, %v2723
      %v2738 = vadd.f32 %v2719, %v2723
      %v2739 = vadd.f32 %v2720, %v2723
      %v2740 = vadd.f32 %v2721, %v2723
      %v2741 = vld [vmem:[#allocation3] sm:$0xff]
      %v2742 = vld [vmem:[#allocation3 + $0x8] sm:$0xff]
      %v2743 = vld [vmem:[#allocation3 + $0x10] sm:$0xff]
      %v2744 = vld [vmem:[#allocation3 + $0x18] sm:$0xff]
      %v2745 = vld [vmem:[#allocation3 + $0x20] sm:$0xff]
      %v2746 = vld [vmem:[#allocation3 + $0x28] sm:$0xff]
      %v2747 = vld [vmem:[#allocation3 + $0x30] sm:$0xff]
      %v2748 = vld [vmem:[#allocation3 + $0x38] sm:$0xff]
      %v2749 = vld [vmem:[#allocation3 + $0x40] sm:$0xff]
      %v2750 = vld [vmem:[#allocation3 + $0x48] sm:$0xff]
      %v2751 = vld [vmem:[#allocation3 + $0x50] sm:$0xff]
      %v2752 = vld [vmem:[#allocation3 + $0x58] sm:$0xff]
      %v2753 = vld [vmem:[#allocation3 + $0x60] sm:$0xff]
      %v2754 = vld [vmem:[#allocation3 + $0x68] sm:$0xff]
      %v2755 = vld [vmem:[#allocation3 + $0x70] sm:$0xff]
      %v2756 = vld [vmem:[#allocation3 + $0x78] sm:$0xff]
      %v2757 = vadd.f32 %v2725, %v2741
      %v2758 = vadd.f32 %v2726, %v2742
      %v2759 = vadd.f32 %v2727, %v2743
      %v2760 = vadd.f32 %v2728, %v2744
      %v2761 = vadd.f32 %v2729, %v2745
      %v2762 = vadd.f32 %v2730, %v2746
      %v2763 = vadd.f32 %v2731, %v2747
      %v2764 = vadd.f32 %v2732, %v2748
      %v2765 = vadd.f32 %v2733, %v2749
      %v2766 = vadd.f32 %v2734, %v2750
      %v2767 = vadd.f32 %v2735, %v2751
      %v2768 = vadd.f32 %v2736, %v2752
      %v2769 = vadd.f32 %v2737, %v2753
      %v2770 = vadd.f32 %v2738, %v2754
      %v2771 = vadd.f32 %v2739, %v2755
      %v2772 = vadd.f32 %v2740, %v2756
      %v2773 = vmax.f32 %v2757, 0.0
      %v2774 = vmax.f32 %v2758, 0.0
      %v2775 = vmax.f32 %v2759, 0.0
      %v2776 = vmax.f32 %v2760, 0.0
      %v2777 = vmax.f32 %v2761, 0.0
      %v2778 = vmax.f32 %v2762, 0.0
      %v2779 = vmax.f32 %v2763, 0.0
      %v2780 = vmax.f32 %v2764, 0.0
      %v2781 = vmax.f32 %v2765, 0.0
      %v2782 = vmax.f32 %v2766, 0.0
      %v2783 = vmax.f32 %v2767, 0.0
      %v2784 = vmax.f32 %v2768, 0.0
      %v2785 = vmax.f32 %v2769, 0.0
      %v2786 = vmax.f32 %v2770, 0.0
      %v2787 = vmax.f32 %v2771, 0.0
      %v2788 = vmax.f32 %v2772, 0.0
      %2789 = vst.msk [vmem:[#allocation3] sm:$0xff] %vm167, %v2773
      %2790 = vst.msk [vmem:[#allocation3 + $0x8] sm:$0xff] %vm167, %v2774
      %2791 = vst.msk [vmem:[#allocation3 + $0x10] sm:$0xff] %vm167, %v2775
      %2792 = vst.msk [vmem:[#allocation3 + $0x18] sm:$0xff] %vm167, %v2776
      %2793 = vst.msk [vmem:[#allocation3 + $0x20] sm:$0xff] %vm167, %v2777
      %2794 = vst.msk [vmem:[#allocation3 + $0x28] sm:$0xff] %vm167, %v2778
      %2795 = vst.msk [vmem:[#allocation3 + $0x30] sm:$0xff] %vm167, %v2779
      %2796 = vst.msk [vmem:[#allocation3 + $0x38] sm:$0xff] %vm167, %v2780
      %2797 = vst.msk [vmem:[#allocation3 + $0x40] sm:$0xff] %vm167, %v2781
      %2798 = vst.msk [vmem:[#allocation3 + $0x48] sm:$0xff] %vm167, %v2782
      %2799 = vst.msk [vmem:[#allocation3 + $0x50] sm:$0xff] %vm167, %v2783
      %2800 = vst.msk [vmem:[#allocation3 + $0x58] sm:$0xff] %vm167, %v2784
      %2801 = vst.msk [vmem:[#allocation3 + $0x60] sm:$0xff] %vm167, %v2785
      %2802 = vst.msk [vmem:[#allocation3 + $0x68] sm:$0xff] %vm167, %v2786
      %2803 = vst.msk [vmem:[#allocation3 + $0x70] sm:$0xff] %vm167, %v2787
      %2804 = vst.msk [vmem:[#allocation3 + $0x78] sm:$0xff] %vm167, %v2788
      %v2805 = vld [vmem:[#allocation3] sm:$0xff]
      %v2806 = vld [vmem:[#allocation3 + $0x8] sm:$0xff]
      %v2807 = vld [vmem:[#allocation3 + $0x10] sm:$0xff]
      %v2808 = vld [vmem:[#allocation3 + $0x18] sm:$0xff]
      %v2809 = vld [vmem:[#allocation3 + $0x20] sm:$0xff]
      %v2810 = vld [vmem:[#allocation3 + $0x28] sm:$0xff]
      %v2811 = vld [vmem:[#allocation3 + $0x30] sm:$0xff]
      %v2812 = vld [vmem:[#allocation3 + $0x38] sm:$0xff]
      %v2813 = vld [vmem:[#allocation3 + $0x40] sm:$0xff]
      %v2814 = vld [vmem:[#allocation3 + $0x48] sm:$0xff]
      %v2815 = vld [vmem:[#allocation3 + $0x50] sm:$0xff]
      %v2816 = vld [vmem:[#allocation3 + $0x58] sm:$0xff]
      %v2817 = vld [vmem:[#allocation3 + $0x60] sm:$0xff]
      %v2818 = vld [vmem:[#allocation3 + $0x68] sm:$0xff]
      %v2819 = vld [vmem:[#allocation3 + $0x70] sm:$0xff]
      %v2820 = vld [vmem:[#allocation3 + $0x78] sm:$0xff]
      %v2821 = vld [vmem:[%s9] sm:$0x1]
      %v2823 = vperm.slane %v2821, 0
      %v2825 = vmul.f32 %v2805, %v2823
      %v2826 = vmul.f32 %v2806, %v2823
      %v2827 = vmul.f32 %v2807, %v2823
      %v2828 = vmul.f32 %v2808, %v2823
      %v2829 = vmul.f32 %v2809, %v2823
      %v2830 = vmul.f32 %v2810, %v2823
      %v2831 = vmul.f32 %v2811, %v2823
      %v2832 = vmul.f32 %v2812, %v2823
      %v2833 = vmul.f32 %v2813, %v2823
      %v2834 = vmul.f32 %v2814, %v2823
      %v2835 = vmul.f32 %v2815, %v2823
      %v2836 = vmul.f32 %v2816, %v2823
      %v2837 = vmul.f32 %v2817, %v2823
      %v2838 = vmul.f32 %v2818, %v2823
      %v2839 = vmul.f32 %v2819, %v2823
      %v2840 = vmul.f32 %v2820, %v2823
      %v2841 = vsel %vm167, %v2825, 0.0
      %2842 = vadd.xlane.f32.xlu0 %v2841
      %v2843 = vpop.xlane.xlu0 %2842
      %v2844 = vsel %vm167, %v2826, 0.0
      %2845 = vadd.xlane.f32.xlu0 %v2844
      %v2846 = vpop.xlane.xlu0 %2845
      %v2847 = vsel %vm167, %v2827, 0.0
      %2848 = vadd.xlane.f32.xlu0 %v2847
      %v2849 = vpop.xlane.xlu0 %2848
      %v2850 = vsel %vm167, %v2828, 0.0
      %2851 = vadd.xlane.f32.xlu0 %v2850
      %v2852 = vpop.xlane.xlu0 %2851
      %v2853 = vsel %vm167, %v2829, 0.0
      %2854 = vadd.xlane.f32.xlu0 %v2853
      %v2855 = vpop.xlane.xlu0 %2854
      %v2856 = vsel %vm167, %v2830, 0.0
      %2857 = vadd.xlane.f32.xlu0 %v2856
      %v2858 = vpop.xlane.xlu0 %2857
      %v2859 = vsel %vm167, %v2831, 0.0
      %2860 = vadd.xlane.f32.xlu0 %v2859
      %v2861 = vpop.xlane.xlu0 %2860
      %v2862 = vsel %vm167, %v2832, 0.0
      %2863 = vadd.xlane.f32.xlu0 %v2862
      %v2864 = vpop.xlane.xlu0 %2863
      %v2865 = vsel %vm167, %v2833, 0.0
      %2866 = vadd.xlane.f32.xlu0 %v2865
      %v2867 = vpop.xlane.xlu0 %2866
      %v2868 = vsel %vm167, %v2834, 0.0
      %2869 = vadd.xlane.f32.xlu0 %v2868
      %v2870 = vpop.xlane.xlu0 %2869
      %v2871 = vsel %vm167, %v2835, 0.0
      %2872 = vadd.xlane.f32.xlu0 %v2871
      %v2873 = vpop.xlane.xlu0 %2872
      %v2874 = vsel %vm167, %v2836, 0.0
      %2875 = vadd.xlane.f32.xlu0 %v2874
      %v2876 = vpop.xlane.xlu0 %2875
      %v2877 = vsel %vm167, %v2837, 0.0
      %2878 = vadd.xlane.f32.xlu0 %v2877
      %v2879 = vpop.xlane.xlu0 %2878
      %v2880 = vsel %vm167, %v2838, 0.0
      %2881 = vadd.xlane.f32.xlu0 %v2880
      %v2882 = vpop.xlane.xlu0 %2881
      %v2883 = vsel %vm167, %v2839, 0.0
      %2884 = vadd.xlane.f32.xlu0 %v2883
      %v2885 = vpop.xlane.xlu0 %2884
      %v2886 = vsel %vm167, %v2840, 0.0
      %2887 = vadd.xlane.f32.xlu0 %v2886
      %v2888 = vpop.xlane.xlu0 %2887
      %v2889 = vld [vmem:[#allocation7] sm:$0x1]
      %2891 = vset.pattern.permute.xlu0 0
      %2892 = vperm.xlu0 %2891, %v2889
      %v2893 = vpop.permute.xlu0 %2892
      %v2895 = vperm.slane %v2893, 0
      %v2896 = vadd.f32 %v2843, %v2895
      %v2897 = vadd.f32 %v2846, %v2895
      %v2898 = vadd.f32 %v2849, %v2895
      %v2899 = vadd.f32 %v2852, %v2895
      %v2900 = vadd.f32 %v2855, %v2895
      %v2901 = vadd.f32 %v2858, %v2895
      %v2902 = vadd.f32 %v2861, %v2895
      %v2903 = vadd.f32 %v2864, %v2895
      %v2904 = vadd.f32 %v2867, %v2895
      %v2905 = vadd.f32 %v2870, %v2895
      %v2906 = vadd.f32 %v2873, %v2895
      %v2907 = vadd.f32 %v2876, %v2895
      %v2908 = vadd.f32 %v2879, %v2895
      %v2909 = vadd.f32 %v2882, %v2895
      %v2910 = vadd.f32 %v2885, %v2895
      %v2911 = vadd.f32 %v2888, %v2895
      %v2928 = vlaneseq
      %v2929 = vand.u32 %v2928, 127
      %v2930 = vperm.slane %v2896, %v2929
      %v2931 = vadd.s32 %v2929, 4294967288
      %v2932 = vperm.slane %v2897, %v2931
      %vm2933 = vcmask 130112
      %v2934 = vsel %vm2933, %v2932, %v2930
      %v2935 = vadd.s32 %v2929, 4294967280
      %v2936 = vperm.slane %v2898, %v2935
      %vm2937 = vcmask 195712
      %v2938 = vsel %vm2937, %v2936, %v2934
      %v2939 = vadd.s32 %v2929, 4294967272
      %v2940 = vperm.slane %v2899, %v2939
      %vm2941 = vcmask 261312
      %v2942 = vsel %vm2941, %v2940, %v2938
      %v2943 = vadd.s32 %v2929, 4294967264
      %v2944 = vperm.slane %v2900, %v2943
      %vm2945 = vcmask 326912
      %v2946 = vsel %vm2945, %v2944, %v2942
      %v2947 = vadd.s32 %v2929, 4294967256
      %v2948 = vperm.slane %v2901, %v2947
      %vm2949 = vcmask 392512
      %v2950 = vsel %vm2949, %v2948, %v2946
      %v2951 = vadd.s32 %v2929, 4294967248
      %v2952 = vperm.slane %v2902, %v2951
      %vm2953 = vcmask 458112
      %v2954 = vsel %vm2953, %v2952, %v2950
      %v2955 = vadd.s32 %v2929, 4294967240
      %v2956 = vperm.slane %v2903, %v2955
      %vm2957 = vcmask 523712
      %v2958 = vsel %vm2957, %v2956, %v2954
      %v2959 = vadd.s32 %v2929, 4294967232
      %v2960 = vperm.slane %v2904, %v2959
      %vm2961 = vcmask 589312
      %v2962 = vsel %vm2961, %v2960, %v2958
      %v2963 = vadd.s32 %v2929, 4294967224
      %v2964 = vperm.slane %v2905, %v2963
      %vm2965 = vcmask 654912
      %v2966 = vsel %vm2965, %v2964, %v2962
      %v2967 = vadd.s32 %v2929, 4294967216
      %v2968 = vperm.slane %v2906, %v2967
      %vm2969 = vcmask 720512
      %v2970 = vsel %vm2969, %v2968, %v2966
      %v2971 = vadd.s32 %v2929, 4294967208
      %v2972 = vperm.slane %v2907, %v2971
      %vm2973 = vcmask 786112
      %v2974 = vsel %vm2973, %v2972, %v2970
      %v2975 = vadd.s32 %v2929, 4294967200
      %v2976 = vperm.slane %v2908, %v2975
      %vm2977 = vcmask 851712
      %v2978 = vsel %vm2977, %v2976, %v2974
      %v2979 = vadd.s32 %v2929, 4294967192
      %v2980 = vperm.slane %v2909, %v2979
      %vm2981 = vcmask 917312
      %v2982 = vsel %vm2981, %v2980, %v2978
      %v2983 = vadd.s32 %v2929, 4294967184
      %v2984 = vperm.slane %v2910, %v2983
      %vm2985 = vcmask 982912
      %v2986 = vsel %vm2985, %v2984, %v2982
      %v2987 = vadd.s32 %v2929, 4294967176
      %v2988 = vperm.slane %v2911, %v2987
      %vm2989 = vcmask 1048512
      %v2990 = vsel %vm2989, %v2988, %v2986
      %2992 = vst [vmem:[#allocation11] sm:$0x1] %v2990
    $region57: #{tpu_custom_call.1} parent=1 // pred_fallthru
      _
    // Predicated region
    $region58: #{tpu_custom_call.1} parent=1 // pred_check
      _
    $region59: #{tpu_custom_call.1} parent=1 // pred_check_branch
      %2994 = sbr.rel (0) target = $region61
    $region60: #{tpu_custom_call.1} parent=1 // pred_region
      %2996 = vsyncadd [#allocation10], 0
      %s2998 = sshll.u32 [#allocation11], 4
      %s2999 = int_to_ptr.vmem [resolvable:$true] %s2998
      %s3000 = sshll.u32 %s11, 4
      %s3001 = int_to_ptr.hbm [resolvable:$true] %s3000
      %3003 = dma.vmem_to_hbm [thread:$0]  %s2999, 16, %s3001, [#allocation10]
    $region61: #{tpu_custom_call.1} parent=1 // pred_fallthru
      _
    // Predicated region
    $region62: #{tpu_custom_call.1} parent=1 // pred_check
      _
    $region63: #{tpu_custom_call.1} parent=1 // pred_check_branch
      %3005 = sbr.rel (0) target = $region65
    $region64: #{tpu_custom_call.1} parent=1 // pred_region
      %3007 = dma.done [#allocation10], 16
    $region65: #{tpu_custom_call.1} parent=1 // pred_fallthru
      _
    %3008 = vsyncpa [#allocation9], 1
    %3009 = vsyncpa [#allocation10], 1

</llo_original>
